<compile_context>
chip_gen: v7x
topology: tpu7x:2x2x1
jax: 0.10.0
libtpu: 0.0.40
codegen_flags: <defaults>
</compile_context>

<pallas_src>
import functools

import jax
import jax.numpy as jnp
from jax.experimental import pallas as pl
from jax.experimental.pallas import tpu as pltpu

LANE = 128
SUBLANE = 8


def _round_up(v, m):
    return ((v + m - 1) // m) * m


def rnn_gru_kernel(x_ref,                      # (T, Bp, Ip)   bf16
                   wih0_ref, bih0_ref,         # (Ip, 3Hp) bf16, (1, 3Hp) f32
                   whh0_ref, bhh0_ref,         # (Hp, 3Hp) bf16, (1, 3Hp) f32
                   wih1_ref, bih1_ref,         # (Hp, 3Hp) bf16, (1, 3Hp) f32
                   whh1_ref, bhh1_ref,         # (Hp, 3Hp) bf16, (1, 3Hp) f32
                   wl_ref, bl_ref,             # (Hp, Op)  bf16, (1, Op)  f32
                   out_ref,                    # (Bp, Op) f32
                   gi0_ref):                   # VMEM scratch (T, Bp, 3Hp) f32
    T, B, Ip = x_ref.shape
    Hp = whh0_ref.shape[0]
    H3 = 3 * Hp

    # ---- hoisted layer-0 input projection: one MXU call over all timesteps ----
    x2d = x_ref[...].reshape(T * B, Ip)                         # bf16, trivial collapse
    gi0_all = jnp.dot(x2d, wih0_ref[...], preferred_element_type=jnp.float32)
    gi0_ref[...] = (gi0_all + bih0_ref[...]).reshape(T, B, H3)  # f32 accumulation

    # ---- hoist weight loads and bias broadcasts out of the serial loop ----
    whh0 = whh0_ref[...]
    wih1 = wih1_ref[...]
    whh1 = whh1_ref[...]
    bhh0 = jnp.broadcast_to(bhh0_ref[...], (B, H3))
    bih1 = jnp.broadcast_to(bih1_ref[...], (B, H3))
    bhh1 = jnp.broadcast_to(bhh1_ref[...], (B, H3))
    # TODO(synk): hold whh0 / wih1 / whh1 resident in the MXU across the unrolled
    # loop via pltpu.matmul_push_rhs / matmul_acc_lhs / matmul_pop to avoid
    # re-pushing constant weight tiles every timestep.

    def gates_to_h(gi, gh, h):
        # Each gate block is individually lane-padded to Hp, so all slices are
        # 128-aligned. r and z blocks are adjacent: ONE fused 2-vreg sigmoid.
        rz = jax.nn.sigmoid(gi[:, :2 * Hp] + gh[:, :2 * Hp])
        r = rz[:, :Hp]
        z = rz[:, Hp:]
        n = jnp.tanh(gi[:, 2 * Hp:] + r * gh[:, 2 * Hp:])
        return (1.0 - z) * n + z * h

    h1 = jnp.zeros((B, Hp), jnp.float32)
    h2 = jnp.zeros((B, Hp), jnp.float32)

    # T is small and static: full unroll, every index static (LLO visibility).
    for t in range(T):
        # layer 0: only the recurrent matmul remains on the critical path
        gh0 = jnp.dot(h1.astype(jnp.bfloat16), whh0,
                      preferred_element_type=jnp.float32) + bhh0
        h1 = gates_to_h(gi0_ref[t], gh0, h1)
        # layer 1: two small matmuls (un-fused block-diag; no per-step concat)
        h1b = h1.astype(jnp.bfloat16)
        gi1 = jnp.dot(h1b, wih1, preferred_element_type=jnp.float32) + bih1
        gh1 = jnp.dot(h2.astype(jnp.bfloat16), whh1,
                      preferred_element_type=jnp.float32) + bhh1
        h2 = gates_to_h(gi1, gh1, h2)

    # linear on outputs[:, -1, :] == final hidden of layer 2 (lane-dense output)
    out_ref[...] = (jnp.dot(h2.astype(jnp.bfloat16), wl_ref[...],
                            preferred_element_type=jnp.float32) + bl_ref[...])


def prepare_params(params, input_size, hidden_size, output_size):
    """One-time weight prep (outside the jitted call): transpose to (in, out),
    per-gate lane padding, cast matmul weights to bf16 (biases stay f32)."""
    H, I, O = hidden_size, input_size, output_size
    Hp = _round_up(H, LANE)
    Ip = _round_up(I, LANE)
    Op = _round_up(O, LANE)

    def gate_pad_w(w, in_dim, in_pad):
        # w: (3H, in_dim) PyTorch layout -> (in_pad, 3*Hp), each gate lane-padded
        cols = []
        for g in range(3):
            wg = jnp.transpose(w[g * H:(g + 1) * H, :])          # (in_dim, H)
            cols.append(jnp.pad(wg, ((0, in_pad - in_dim), (0, Hp - H))))
        return jnp.concatenate(cols, axis=1).astype(jnp.bfloat16)

    def gate_pad_b(b):
        cols = [jnp.pad(b[g * H:(g + 1) * H], (0, Hp - H)) for g in range(3)]
        return jnp.concatenate(cols)[None, :].astype(jnp.float32)  # (1, 3*Hp)

    wih0 = gate_pad_w(params["wih0"], I, Ip)        # (Ip, 3Hp) bf16
    whh0 = gate_pad_w(params["whh0"], H, Hp)        # (Hp, 3Hp) bf16
    wih1 = gate_pad_w(params["wih1"], H, Hp)        # (Hp, 3Hp) bf16
    whh1 = gate_pad_w(params["whh1"], H, Hp)        # (Hp, 3Hp) bf16
    bih0 = gate_pad_b(params["bih0"])
    bhh0 = gate_pad_b(params["bhh0"])
    bih1 = gate_pad_b(params["bih1"])
    bhh1 = gate_pad_b(params["bhh1"])

    wl = jnp.pad(params["wl"].T, ((0, Hp - H), (0, Op - O))).astype(jnp.bfloat16)
    bl = jnp.pad(params["bl"], (0, Op - O))[None, :].astype(jnp.float32)

    return dict(wih0=wih0, bih0=bih0, whh0=whh0, bhh0=bhh0,
                wih1=wih1, bih1=bih1, whh1=whh1, bhh1=bhh1, wl=wl, bl=bl)


@functools.partial(jax.jit, static_argnames=("output_size",))
def rnn_gru_forward(x, prep, output_size):
    B, T, I = x.shape
    Ip = prep["wih0"].shape[0]
    Hp = prep["whh0"].shape[0]
    Op = prep["wl"].shape[1]
    Bp = _round_up(B, SUBLANE)

    # batch_first (B, T, I) -> (T, Bp, Ip): cast to bf16 first (halves the copy
    # bytes), then transpose + zero-pad. Inside this jit these fuse into one
    # copy feeding the pallas_call, not extra dispatches.
    x_tbi = jnp.transpose(x.astype(jnp.bfloat16), (1, 0, 2))
    x_pad = jnp.pad(x_tbi, ((0, 0), (0, Bp - B), (0, Ip - I)))

    vmem = pl.BlockSpec(memory_space=pltpu.MemorySpace.VMEM)
    # TODO(synk): for large H/T, store the gi0 scratch in bf16 and grid over T
    # chunks (h1/h2 carried in VMEM scratch over an "arbitrary" T axis, explicit
    # vmem_limit_bytes) to stay inside v7x's 64 MiB VMEM; for large batch add a
    # leading "parallel" batch-tile grid axis so both v7x TensorCores are used.
    out_pad = pl.pallas_call(
        rnn_gru_kernel,
        out_shape=jax.ShapeDtypeStruct((Bp, Op), jnp.float32),
        in_specs=[vmem] * 11,
        out_specs=vmem,
        scratch_shapes=[pltpu.VMEM((T, Bp, 3 * Hp), jnp.float32)],
    )(x_pad, prep["wih0"], prep["bih0"], prep["whh0"], prep["bhh0"],
      prep["wih1"], prep["bih1"], prep["whh1"], prep["bhh1"],
      prep["wl"], prep["bl"])

    return out_pad[:B, :output_size]


def init_params(key, input_size, hidden_size, output_size):
    """Deterministic init mimicking PyTorch's U(-1/sqrt(H), 1/sqrt(H))."""
    k = 1.0 / (hidden_size ** 0.5)
    keys = jax.random.split(key, 10)
    u = lambda kk, shape: jax.random.uniform(kk, shape, jnp.float32, -k, k)
    H3 = 3 * hidden_size
    return {
        "wih0": u(keys[0], (H3, input_size)),
        "whh0": u(keys[1], (H3, hidden_size)),
        "bih0": u(keys[2], (H3,)),
        "bhh0": u(keys[3], (H3,)),
        "wih1": u(keys[4], (H3, hidden_size)),
        "whh1": u(keys[5], (H3, hidden_size)),
        "bih1": u(keys[6], (H3,)),
        "bhh1": u(keys[7], (H3,)),
        "wl":   u(keys[8], (output_size, hidden_size)),
        "bl":   u(keys[9], (output_size,)),
    }


def reference_forward(x, params):
    """Pure-JAX f32 reference of the PyTorch forward (for correctness check)."""
    B, T, I = x.shape
    H = params["whh0"].shape[1]

    def cell(x_t, h, wih, whh, bih, bhh):
        gi = x_t @ wih.T + bih
        gh = h @ whh.T + bhh
        r = jax.nn.sigmoid(gi[:, :H] + gh[:, :H])
        z = jax.nn.sigmoid(gi[:, H:2 * H] + gh[:, H:2 * H])
        n = jnp.tanh(gi[:, 2 * H:] + r * gh[:, 2 * H:])
        return (1.0 - z) * n + z * h

    h1 = jnp.zeros((B, H), jnp.float32)
    h2 = jnp.zeros((B, H), jnp.float32)
    for t in range(T):
        h1 = cell(x[:, t, :], h1, params["wih0"], params["whh0"],
                  params["bih0"], params["bhh0"])
        h2 = cell(h1, h2, params["wih1"], params["whh1"],
                  params["bih1"], params["bhh1"])
    return h2 @ params["wl"].T + params["bl"]


if __name__ == "__main__":
    # Small shapes consistent with the module: x is (batch, seq, input_size).
    batch, seq, input_size, hidden_size, output_size = 2, 8, 16, 32, 8

    key = jax.random.PRNGKey(0)
    kx, kp = jax.random.split(key)
    x = jax.random.normal(kx, (batch, seq, input_size), jnp.float32)
    params = init_params(kp, input_size, hidden_size, output_size)

    # Weight transposition / padding / bf16 cast done ONCE, outside the jit.
    prep = prepare_params(params, input_size, hidden_size, output_size)

    out = rnn_gru_forward(x, prep, output_size=output_size)
    out = jax.block_until_ready(out)

    ref = reference_forward(x, params)
    assert out.shape == (batch, output_size)
    # Matmul operands are bf16 (f32 accumulation / carry), so tolerance is
    # looser than a pure-f32 comparison over the T-step recurrence.
    assert jnp.allclose(out, ref, rtol=3e-2, atol=3e-2), "mismatch vs reference"

    print("KERNEL_OK")
</pallas_src>

<mosaic_0001>
module attributes {stable_mosaic.version = 11 : i64} {
  func.func @rnn_gru_kernel(%arg0: memref<8x8x128xbf16, #tpu.memory_space<vmem>>, %arg1: memref<128x384xbf16, #tpu.memory_space<vmem>>, %arg2: memref<1x384xf32, #tpu.memory_space<vmem>>, %arg3: memref<128x384xbf16, #tpu.memory_space<vmem>>, %arg4: memref<1x384xf32, #tpu.memory_space<vmem>>, %arg5: memref<128x384xbf16, #tpu.memory_space<vmem>>, %arg6: memref<1x384xf32, #tpu.memory_space<vmem>>, %arg7: memref<128x384xbf16, #tpu.memory_space<vmem>>, %arg8: memref<1x384xf32, #tpu.memory_space<vmem>>, %arg9: memref<128x128xbf16, #tpu.memory_space<vmem>>, %arg10: memref<1x128xf32, #tpu.memory_space<vmem>>, %arg11: memref<8x128xf32, #tpu.memory_space<vmem>>, %arg12: memref<8x8x384xf32, #tpu.memory_space<vmem>>) attributes {dimension_semantics = [], scalar_prefetch = 0 : i64, scratch_operands = 1 : i64, tpu.core_type = #tpu.core_type<tc>} {
    %c0 = arith.constant 0 : index
    %c0_0 = arith.constant 0 : index
    %c0_1 = arith.constant 0 : index
    %0 = vector.load %arg0[%c0, %c0_0, %c0_1] : memref<8x8x128xbf16, #tpu.memory_space<vmem>>, vector<8x8x128xbf16>
    %1 = vector.shape_cast %0 : vector<8x8x128xbf16> to vector<64x128xbf16>
    %c0_2 = arith.constant 0 : index
    %c0_3 = arith.constant 0 : index
    %2 = vector.load %arg1[%c0_2, %c0_3] : memref<128x384xbf16, #tpu.memory_space<vmem>>, vector<128x384xbf16>
    %cst = arith.constant dense<0.000000e+00> : vector<64x384xf32>
    %3 = tpu.matmul %1, %2, %cst {dimension_numbers = #tpu.dot_dimension_numbers<[1], [0], [0], [1], [0, 0, 1, 1], [], []>} : vector<64x128xbf16>, vector<128x384xbf16>, vector<64x384xf32> -> vector<64x384xf32>
    %c0_4 = arith.constant 0 : index
    %c0_5 = arith.constant 0 : index
    %4 = vector.load %arg2[%c0_4, %c0_5] : memref<1x384xf32, #tpu.memory_space<vmem>>, vector<1x384xf32>
    %5 = vector.broadcast %4 : vector<1x384xf32> to vector<64x384xf32>
    %6 = arith.addf %3, %5 : vector<64x384xf32>
    %7 = vector.shape_cast %6 : vector<64x384xf32> to vector<8x8x384xf32>
    %c0_6 = arith.constant 0 : index
    %c0_7 = arith.constant 0 : index
    %c0_8 = arith.constant 0 : index
    %8 = vector.load %arg12[%c0_6, %c0_7, %c0_8] : memref<8x8x384xf32, #tpu.memory_space<vmem>>, vector<8x8x384xf32>
    tpu.vector_store %arg12[%c0_6, %c0_7, %c0_8], %7 {strides = array<i32>} : memref<8x8x384xf32, #tpu.memory_space<vmem>>, vector<8x8x384xf32>,
    %c0_9 = arith.constant 0 : index
    %c0_10 = arith.constant 0 : index
    %9 = vector.load %arg3[%c0_9, %c0_10] : memref<128x384xbf16, #tpu.memory_space<vmem>>, vector<128x384xbf16>
    %c0_11 = arith.constant 0 : index
    %c0_12 = arith.constant 0 : index
    %10 = vector.load %arg5[%c0_11, %c0_12] : memref<128x384xbf16, #tpu.memory_space<vmem>>, vector<128x384xbf16>
    %c0_13 = arith.constant 0 : index
    %c0_14 = arith.constant 0 : index
    %11 = vector.load %arg7[%c0_13, %c0_14] : memref<128x384xbf16, #tpu.memory_space<vmem>>, vector<128x384xbf16>
    %c0_15 = arith.constant 0 : index
    %c0_16 = arith.constant 0 : index
    %12 = vector.load %arg4[%c0_15, %c0_16] : memref<1x384xf32, #tpu.memory_space<vmem>>, vector<1x384xf32>
    %13 = vector.shape_cast %12 : vector<1x384xf32> to vector<1x384xf32>
    %14 = vector.broadcast %13 : vector<1x384xf32> to vector<8x384xf32>
    %c0_17 = arith.constant 0 : index
    %c0_18 = arith.constant 0 : index
    %15 = vector.load %arg6[%c0_17, %c0_18] : memref<1x384xf32, #tpu.memory_space<vmem>>, vector<1x384xf32>
    %16 = vector.shape_cast %15 : vector<1x384xf32> to vector<1x384xf32>
    %17 = vector.broadcast %16 : vector<1x384xf32> to vector<8x384xf32>
    %c0_19 = arith.constant 0 : index
    %c0_20 = arith.constant 0 : index
    %18 = vector.load %arg8[%c0_19, %c0_20] : memref<1x384xf32, #tpu.memory_space<vmem>>, vector<1x384xf32>
    %19 = vector.shape_cast %18 : vector<1x384xf32> to vector<1x384xf32>
    %20 = vector.broadcast %19 : vector<1x384xf32> to vector<8x384xf32>
    %cst_21 = arith.constant 0.000000e+00 : f32
    %21 = vector.broadcast %cst_21 : f32 to vector<8x128xf32>
    %cst_22 = arith.constant 0.000000e+00 : f32
    %22 = vector.broadcast %cst_22 : f32 to vector<8x128xf32>
    %23 = arith.truncf %21 : vector<8x128xf32> to vector<8x128xbf16>
    %cst_23 = arith.constant dense<0.000000e+00> : vector<8x384xf32>
    %24 = tpu.matmul %23, %9, %cst_23 {dimension_numbers = #tpu.dot_dimension_numbers<[1], [0], [0], [1], [0, 0, 1, 1], [], []>} : vector<8x128xbf16>, vector<128x384xbf16>, vector<8x384xf32> -> vector<8x384xf32>
    %25 = arith.addf %24, %14 : vector<8x384xf32>
    %c0_24 = arith.constant 0 : index
    %c0_25 = arith.constant 0 : index
    %c0_26 = arith.constant 0 : index
    %26 = vector.load %arg12[%c0_24, %c0_25, %c0_26] : memref<8x8x384xf32, #tpu.memory_space<vmem>>, vector<1x8x384xf32>
    %27 = vector.shape_cast %26 : vector<1x8x384xf32> to vector<8x384xf32>
    %28 = vector.extract_strided_slice %27 {offsets = [0, 0], sizes = [8, 256], strides = [1, 1]} : vector<8x384xf32> to vector<8x256xf32>
    %29 = vector.extract_strided_slice %25 {offsets = [0, 0], sizes = [8, 256], strides = [1, 1]} : vector<8x384xf32> to vector<8x256xf32>
    %30 = arith.addf %28, %29 : vector<8x256xf32>
    %31 = arith.negf %30 : vector<8x256xf32>
    %32 = math.exp %31 : vector<8x256xf32>
    %cst_27 = arith.constant 1.000000e+00 : f32
    %33 = vector.broadcast %cst_27 : f32 to vector<8x256xf32>
    %34 = arith.addf %33, %32 : vector<8x256xf32>
    %35 = arith.divf %33, %34 : vector<8x256xf32>
    %36 = vector.extract_strided_slice %35 {offsets = [0, 0], sizes = [8, 128], strides = [1, 1]} : vector<8x256xf32> to vector<8x128xf32>
    %37 = vector.extract_strided_slice %35 {offsets = [0, 128], sizes = [8, 128], strides = [1, 1]} : vector<8x256xf32> to vector<8x128xf32>
    %38 = vector.extract_strided_slice %27 {offsets = [0, 256], sizes = [8, 128], strides = [1, 1]} : vector<8x384xf32> to vector<8x128xf32>
    %39 = vector.extract_strided_slice %25 {offsets = [0, 256], sizes = [8, 128], strides = [1, 1]} : vector<8x384xf32> to vector<8x128xf32>
    %40 = arith.mulf %36, %39 : vector<8x128xf32>
    %41 = arith.addf %38, %40 : vector<8x128xf32>
    %42 = math.tanh %41 : vector<8x128xf32>
    %cst_28 = arith.constant 1.000000e+00 : f32
    %43 = vector.broadcast %cst_28 : f32 to vector<8x128xf32>
    %44 = arith.subf %43, %37 : vector<8x128xf32>
    %45 = arith.mulf %44, %42 : vector<8x128xf32>
    %46 = arith.mulf %37, %21 : vector<8x128xf32>
    %47 = arith.addf %45, %46 : vector<8x128xf32>
    %48 = arith.truncf %47 : vector<8x128xf32> to vector<8x128xbf16>
    %cst_29 = arith.constant dense<0.000000e+00> : vector<8x384xf32>
    %49 = tpu.matmul %48, %10, %cst_29 {dimension_numbers = #tpu.dot_dimension_numbers<[1], [0], [0], [1], [0, 0, 1, 1], [], []>} : vector<8x128xbf16>, vector<128x384xbf16>, vector<8x384xf32> -> vector<8x384xf32>
    %50 = arith.addf %49, %17 : vector<8x384xf32>
    %51 = arith.truncf %22 : vector<8x128xf32> to vector<8x128xbf16>
    %cst_30 = arith.constant dense<0.000000e+00> : vector<8x384xf32>
    %52 = tpu.matmul %51, %11, %cst_30 {dimension_numbers = #tpu.dot_dimension_numbers<[1], [0], [0], [1], [0, 0, 1, 1], [], []>} : vector<8x128xbf16>, vector<128x384xbf16>, vector<8x384xf32> -> vector<8x384xf32>
    %53 = arith.addf %52, %20 : vector<8x384xf32>
    %54 = vector.extract_strided_slice %50 {offsets = [0, 0], sizes = [8, 256], strides = [1, 1]} : vector<8x384xf32> to vector<8x256xf32>
    %55 = vector.extract_strided_slice %53 {offsets = [0, 0], sizes = [8, 256], strides = [1, 1]} : vector<8x384xf32> to vector<8x256xf32>
    %56 = arith.addf %54, %55 : vector<8x256xf32>
    %57 = arith.negf %56 : vector<8x256xf32>
    %58 = math.exp %57 : vector<8x256xf32>
    %cst_31 = arith.constant 1.000000e+00 : f32
    %59 = vector.broadcast %cst_31 : f32 to vector<8x256xf32>
    %60 = arith.addf %59, %58 : vector<8x256xf32>
    %61 = arith.divf %59, %60 : vector<8x256xf32>
    %62 = vector.extract_strided_slice %61 {offsets = [0, 0], sizes = [8, 128], strides = [1, 1]} : vector<8x256xf32> to vector<8x128xf32>
    %63 = vector.extract_strided_slice %61 {offsets = [0, 128], sizes = [8, 128], strides = [1, 1]} : vector<8x256xf32> to vector<8x128xf32>
    %64 = vector.extract_strided_slice %50 {offsets = [0, 256], sizes = [8, 128], strides = [1, 1]} : vector<8x384xf32> to vector<8x128xf32>
    %65 = vector.extract_strided_slice %53 {offsets = [0, 256], sizes = [8, 128], strides = [1, 1]} : vector<8x384xf32> to vector<8x128xf32>
    %66 = arith.mulf %62, %65 : vector<8x128xf32>
    %67 = arith.addf %64, %66 : vector<8x128xf32>
    %68 = math.tanh %67 : vector<8x128xf32>
    %cst_32 = arith.constant 1.000000e+00 : f32
    %69 = vector.broadcast %cst_32 : f32 to vector<8x128xf32>
    %70 = arith.subf %69, %63 : vector<8x128xf32>
    %71 = arith.mulf %70, %68 : vector<8x128xf32>
    %72 = arith.mulf %63, %22 : vector<8x128xf32>
    %73 = arith.addf %71, %72 : vector<8x128xf32>
    %74 = arith.truncf %47 : vector<8x128xf32> to vector<8x128xbf16>
    %cst_33 = arith.constant dense<0.000000e+00> : vector<8x384xf32>
    %75 = tpu.matmul %74, %9, %cst_33 {dimension_numbers = #tpu.dot_dimension_numbers<[1], [0], [0], [1], [0, 0, 1, 1], [], []>} : vector<8x128xbf16>, vector<128x384xbf16>, vector<8x384xf32> -> vector<8x384xf32>
    %76 = arith.addf %75, %14 : vector<8x384xf32>
    %c1 = arith.constant 1 : index
    %c0_34 = arith.constant 0 : index
    %c0_35 = arith.constant 0 : index
    %77 = vector.load %arg12[%c1, %c0_34, %c0_35] : memref<8x8x384xf32, #tpu.memory_space<vmem>>, vector<1x8x384xf32>
    %78 = vector.shape_cast %77 : vector<1x8x384xf32> to vector<8x384xf32>
    %79 = vector.extract_strided_slice %78 {offsets = [0, 0], sizes = [8, 256], strides = [1, 1]} : vector<8x384xf32> to vector<8x256xf32>
    %80 = vector.extract_strided_slice %76 {offsets = [0, 0], sizes = [8, 256], strides = [1, 1]} : vector<8x384xf32> to vector<8x256xf32>
    %81 = arith.addf %79, %80 : vector<8x256xf32>
    %82 = arith.negf %81 : vector<8x256xf32>
    %83 = math.exp %82 : vector<8x256xf32>
    %cst_36 = arith.constant 1.000000e+00 : f32
    %84 = vector.broadcast %cst_36 : f32 to vector<8x256xf32>
    %85 = arith.addf %84, %83 : vector<8x256xf32>
    %86 = arith.divf %84, %85 : vector<8x256xf32>
    %87 = vector.extract_strided_slice %86 {offsets = [0, 0], sizes = [8, 128], strides = [1, 1]} : vector<8x256xf32> to vector<8x128xf32>
    %88 = vector.extract_strided_slice %86 {offsets = [0, 128], sizes = [8, 128], strides = [1, 1]} : vector<8x256xf32> to vector<8x128xf32>
    %89 = vector.extract_strided_slice %78 {offsets = [0, 256], sizes = [8, 128], strides = [1, 1]} : vector<8x384xf32> to vector<8x128xf32>
    %90 = vector.extract_strided_slice %76 {offsets = [0, 256], sizes = [8, 128], strides = [1, 1]} : vector<8x384xf32> to vector<8x128xf32>
    %91 = arith.mulf %87, %90 : vector<8x128xf32>
    %92 = arith.addf %89, %91 : vector<8x128xf32>
    %93 = math.tanh %92 : vector<8x128xf32>
    %cst_37 = arith.constant 1.000000e+00 : f32
    %94 = vector.broadcast %cst_37 : f32 to vector<8x128xf32>
    %95 = arith.subf %94, %88 : vector<8x128xf32>
    %96 = arith.mulf %95, %93 : vector<8x128xf32>
    %97 = arith.mulf %88, %47 : vector<8x128xf32>
    %98 = arith.addf %96, %97 : vector<8x128xf32>
    %99 = arith.truncf %98 : vector<8x128xf32> to vector<8x128xbf16>
    %cst_38 = arith.constant dense<0.000000e+00> : vector<8x384xf32>
    %100 = tpu.matmul %99, %10, %cst_38 {dimension_numbers = #tpu.dot_dimension_numbers<[1], [0], [0], [1], [0, 0, 1, 1], [], []>} : vector<8x128xbf16>, vector<128x384xbf16>, vector<8x384xf32> -> vector<8x384xf32>
    %101 = arith.addf %100, %17 : vector<8x384xf32>
    %102 = arith.truncf %73 : vector<8x128xf32> to vector<8x128xbf16>
    %cst_39 = arith.constant dense<0.000000e+00> : vector<8x384xf32>
    %103 = tpu.matmul %102, %11, %cst_39 {dimension_numbers = #tpu.dot_dimension_numbers<[1], [0], [0], [1], [0, 0, 1, 1], [], []>} : vector<8x128xbf16>, vector<128x384xbf16>, vector<8x384xf32> -> vector<8x384xf32>
    %104 = arith.addf %103, %20 : vector<8x384xf32>
    %105 = vector.extract_strided_slice %101 {offsets = [0, 0], sizes = [8, 256], strides = [1, 1]} : vector<8x384xf32> to vector<8x256xf32>
    %106 = vector.extract_strided_slice %104 {offsets = [0, 0], sizes = [8, 256], strides = [1, 1]} : vector<8x384xf32> to vector<8x256xf32>
    %107 = arith.addf %105, %106 : vector<8x256xf32>
    %108 = arith.negf %107 : vector<8x256xf32>
    %109 = math.exp %108 : vector<8x256xf32>
    %cst_40 = arith.constant 1.000000e+00 : f32
    %110 = vector.broadcast %cst_40 : f32 to vector<8x256xf32>
    %111 = arith.addf %110, %109 : vector<8x256xf32>
    %112 = arith.divf %110, %111 : vector<8x256xf32>
    %113 = vector.extract_strided_slice %112 {offsets = [0, 0], sizes = [8, 128], strides = [1, 1]} : vector<8x256xf32> to vector<8x128xf32>
    %114 = vector.extract_strided_slice %112 {offsets = [0, 128], sizes = [8, 128], strides = [1, 1]} : vector<8x256xf32> to vector<8x128xf32>
    %115 = vector.extract_strided_slice %101 {offsets = [0, 256], sizes = [8, 128], strides = [1, 1]} : vector<8x384xf32> to vector<8x128xf32>
    %116 = vector.extract_strided_slice %104 {offsets = [0, 256], sizes = [8, 128], strides = [1, 1]} : vector<8x384xf32> to vector<8x128xf32>
    %117 = arith.mulf %113, %116 : vector<8x128xf32>
    %118 = arith.addf %115, %117 : vector<8x128xf32>
    %119 = math.tanh %118 : vector<8x128xf32>
    %cst_41 = arith.constant 1.000000e+00 : f32
    %120 = vector.broadcast %cst_41 : f32 to vector<8x128xf32>
    %121 = arith.subf %120, %114 : vector<8x128xf32>
    %122 = arith.mulf %121, %119 : vector<8x128xf32>
    %123 = arith.mulf %114, %73 : vector<8x128xf32>
    %124 = arith.addf %122, %123 : vector<8x128xf32>
    %125 = arith.truncf %98 : vector<8x128xf32> to vector<8x128xbf16>
    %cst_42 = arith.constant dense<0.000000e+00> : vector<8x384xf32>
    %126 = tpu.matmul %125, %9, %cst_42 {dimension_numbers = #tpu.dot_dimension_numbers<[1], [0], [0], [1], [0, 0, 1, 1], [], []>} : vector<8x128xbf16>, vector<128x384xbf16>, vector<8x384xf32> -> vector<8x384xf32>
    %127 = arith.addf %126, %14 : vector<8x384xf32>
    %c2 = arith.constant 2 : index
    %c0_43 = arith.constant 0 : index
    %c0_44 = arith.constant 0 : index
    %128 = vector.load %arg12[%c2, %c0_43, %c0_44] : memref<8x8x384xf32, #tpu.memory_space<vmem>>, vector<1x8x384xf32>
    %129 = vector.shape_cast %128 : vector<1x8x384xf32> to vector<8x384xf32>
    %130 = vector.extract_strided_slice %129 {offsets = [0, 0], sizes = [8, 256], strides = [1, 1]} : vector<8x384xf32> to vector<8x256xf32>
    %131 = vector.extract_strided_slice %127 {offsets = [0, 0], sizes = [8, 256], strides = [1, 1]} : vector<8x384xf32> to vector<8x256xf32>
    %132 = arith.addf %130, %131 : vector<8x256xf32>
    %133 = arith.negf %132 : vector<8x256xf32>
    %134 = math.exp %133 : vector<8x256xf32>
    %cst_45 = arith.constant 1.000000e+00 : f32
    %135 = vector.broadcast %cst_45 : f32 to vector<8x256xf32>
    %136 = arith.addf %135, %134 : vector<8x256xf32>
    %137 = arith.divf %135, %136 : vector<8x256xf32>
    %138 = vector.extract_strided_slice %137 {offsets = [0, 0], sizes = [8, 128], strides = [1, 1]} : vector<8x256xf32> to vector<8x128xf32>
    %139 = vector.extract_strided_slice %137 {offsets = [0, 128], sizes = [8, 128], strides = [1, 1]} : vector<8x256xf32> to vector<8x128xf32>
    %140 = vector.extract_strided_slice %129 {offsets = [0, 256], sizes = [8, 128], strides = [1, 1]} : vector<8x384xf32> to vector<8x128xf32>
    %141 = vector.extract_strided_slice %127 {offsets = [0, 256], sizes = [8, 128], strides = [1, 1]} : vector<8x384xf32> to vector<8x128xf32>
    %142 = arith.mulf %138, %141 : vector<8x128xf32>
    %143 = arith.addf %140, %142 : vector<8x128xf32>
    %144 = math.tanh %143 : vector<8x128xf32>
    %cst_46 = arith.constant 1.000000e+00 : f32
    %145 = vector.broadcast %cst_46 : f32 to vector<8x128xf32>
    %146 = arith.subf %145, %139 : vector<8x128xf32>
    %147 = arith.mulf %146, %144 : vector<8x128xf32>
    %148 = arith.mulf %139, %98 : vector<8x128xf32>
    %149 = arith.addf %147, %148 : vector<8x128xf32>
    %150 = arith.truncf %149 : vector<8x128xf32> to vector<8x128xbf16>
    %cst_47 = arith.constant dense<0.000000e+00> : vector<8x384xf32>
    %151 = tpu.matmul %150, %10, %cst_47 {dimension_numbers = #tpu.dot_dimension_numbers<[1], [0], [0], [1], [0, 0, 1, 1], [], []>} : vector<8x128xbf16>, vector<128x384xbf16>, vector<8x384xf32> -> vector<8x384xf32>
    %152 = arith.addf %151, %17 : vector<8x384xf32>
    %153 = arith.truncf %124 : vector<8x128xf32> to vector<8x128xbf16>
    %cst_48 = arith.constant dense<0.000000e+00> : vector<8x384xf32>
    %154 = tpu.matmul %153, %11, %cst_48 {dimension_numbers = #tpu.dot_dimension_numbers<[1], [0], [0], [1], [0, 0, 1, 1], [], []>} : vector<8x128xbf16>, vector<128x384xbf16>, vector<8x384xf32> -> vector<8x384xf32>
    %155 = arith.addf %154, %20 : vector<8x384xf32>
    %156 = vector.extract_strided_slice %152 {offsets = [0, 0], sizes = [8, 256], strides = [1, 1]} : vector<8x384xf32> to vector<8x256xf32>
    %157 = vector.extract_strided_slice %155 {offsets = [0, 0], sizes = [8, 256], strides = [1, 1]} : vector<8x384xf32> to vector<8x256xf32>
    %158 = arith.addf %156, %157 : vector<8x256xf32>
    %159 = arith.negf %158 : vector<8x256xf32>
    %160 = math.exp %159 : vector<8x256xf32>
    %cst_49 = arith.constant 1.000000e+00 : f32
    %161 = vector.broadcast %cst_49 : f32 to vector<8x256xf32>
    %162 = arith.addf %161, %160 : vector<8x256xf32>
    %163 = arith.divf %161, %162 : vector<8x256xf32>
    %164 = vector.extract_strided_slice %163 {offsets = [0, 0], sizes = [8, 128], strides = [1, 1]} : vector<8x256xf32> to vector<8x128xf32>
    %165 = vector.extract_strided_slice %163 {offsets = [0, 128], sizes = [8, 128], strides = [1, 1]} : vector<8x256xf32> to vector<8x128xf32>
    %166 = vector.extract_strided_slice %152 {offsets = [0, 256], sizes = [8, 128], strides = [1, 1]} : vector<8x384xf32> to vector<8x128xf32>
    %167 = vector.extract_strided_slice %155 {offsets = [0, 256], sizes = [8, 128], strides = [1, 1]} : vector<8x384xf32> to vector<8x128xf32>
    %168 = arith.mulf %164, %167 : vector<8x128xf32>
    %169 = arith.addf %166, %168 : vector<8x128xf32>
    %170 = math.tanh %169 : vector<8x128xf32>
    %cst_50 = arith.constant 1.000000e+00 : f32
    %171 = vector.broadcast %cst_50 : f32 to vector<8x128xf32>
    %172 = arith.subf %171, %165 : vector<8x128xf32>
    %173 = arith.mulf %172, %170 : vector<8x128xf32>
    %174 = arith.mulf %165, %124 : vector<8x128xf32>
    %175 = arith.addf %173, %174 : vector<8x128xf32>
    %176 = arith.truncf %149 : vector<8x128xf32> to vector<8x128xbf16>
    %cst_51 = arith.constant dense<0.000000e+00> : vector<8x384xf32>
    %177 = tpu.matmul %176, %9, %cst_51 {dimension_numbers = #tpu.dot_dimension_numbers<[1], [0], [0], [1], [0, 0, 1, 1], [], []>} : vector<8x128xbf16>, vector<128x384xbf16>, vector<8x384xf32> -> vector<8x384xf32>
    %178 = arith.addf %177, %14 : vector<8x384xf32>
    %c3 = arith.constant 3 : index
    %c0_52 = arith.constant 0 : index
    %c0_53 = arith.constant 0 : index
    %179 = vector.load %arg12[%c3, %c0_52, %c0_53] : memref<8x8x384xf32, #tpu.memory_space<vmem>>, vector<1x8x384xf32>
    %180 = vector.shape_cast %179 : vector<1x8x384xf32> to vector<8x384xf32>
    %181 = vector.extract_strided_slice %180 {offsets = [0, 0], sizes = [8, 256], strides = [1, 1]} : vector<8x384xf32> to vector<8x256xf32>
    %182 = vector.extract_strided_slice %178 {offsets = [0, 0], sizes = [8, 256], strides = [1, 1]} : vector<8x384xf32> to vector<8x256xf32>
    %183 = arith.addf %181, %182 : vector<8x256xf32>
    %184 = arith.negf %183 : vector<8x256xf32>
    %185 = math.exp %184 : vector<8x256xf32>
    %cst_54 = arith.constant 1.000000e+00 : f32
    %186 = vector.broadcast %cst_54 : f32 to vector<8x256xf32>
    %187 = arith.addf %186, %185 : vector<8x256xf32>
    %188 = arith.divf %186, %187 : vector<8x256xf32>
    %189 = vector.extract_strided_slice %188 {offsets = [0, 0], sizes = [8, 128], strides = [1, 1]} : vector<8x256xf32> to vector<8x128xf32>
    %190 = vector.extract_strided_slice %188 {offsets = [0, 128], sizes = [8, 128], strides = [1, 1]} : vector<8x256xf32> to vector<8x128xf32>
    %191 = vector.extract_strided_slice %180 {offsets = [0, 256], sizes = [8, 128], strides = [1, 1]} : vector<8x384xf32> to vector<8x128xf32>
    %192 = vector.extract_strided_slice %178 {offsets = [0, 256], sizes = [8, 128], strides = [1, 1]} : vector<8x384xf32> to vector<8x128xf32>
    %193 = arith.mulf %189, %192 : vector<8x128xf32>
    %194 = arith.addf %191, %193 : vector<8x128xf32>
    %195 = math.tanh %194 : vector<8x128xf32>
    %cst_55 = arith.constant 1.000000e+00 : f32
    %196 = vector.broadcast %cst_55 : f32 to vector<8x128xf32>
    %197 = arith.subf %196, %190 : vector<8x128xf32>
    %198 = arith.mulf %197, %195 : vector<8x128xf32>
    %199 = arith.mulf %190, %149 : vector<8x128xf32>
    %200 = arith.addf %198, %199 : vector<8x128xf32>
    %201 = arith.truncf %200 : vector<8x128xf32> to vector<8x128xbf16>
    %cst_56 = arith.constant dense<0.000000e+00> : vector<8x384xf32>
    %202 = tpu.matmul %201, %10, %cst_56 {dimension_numbers = #tpu.dot_dimension_numbers<[1], [0], [0], [1], [0, 0, 1, 1], [], []>} : vector<8x128xbf16>, vector<128x384xbf16>, vector<8x384xf32> -> vector<8x384xf32>
    %203 = arith.addf %202, %17 : vector<8x384xf32>
    %204 = arith.truncf %175 : vector<8x128xf32> to vector<8x128xbf16>
    %cst_57 = arith.constant dense<0.000000e+00> : vector<8x384xf32>
    %205 = tpu.matmul %204, %11, %cst_57 {dimension_numbers = #tpu.dot_dimension_numbers<[1], [0], [0], [1], [0, 0, 1, 1], [], []>} : vector<8x128xbf16>, vector<128x384xbf16>, vector<8x384xf32> -> vector<8x384xf32>
    %206 = arith.addf %205, %20 : vector<8x384xf32>
    %207 = vector.extract_strided_slice %203 {offsets = [0, 0], sizes = [8, 256], strides = [1, 1]} : vector<8x384xf32> to vector<8x256xf32>
    %208 = vector.extract_strided_slice %206 {offsets = [0, 0], sizes = [8, 256], strides = [1, 1]} : vector<8x384xf32> to vector<8x256xf32>
    %209 = arith.addf %207, %208 : vector<8x256xf32>
    %210 = arith.negf %209 : vector<8x256xf32>
    %211 = math.exp %210 : vector<8x256xf32>
    %cst_58 = arith.constant 1.000000e+00 : f32
    %212 = vector.broadcast %cst_58 : f32 to vector<8x256xf32>
    %213 = arith.addf %212, %211 : vector<8x256xf32>
    %214 = arith.divf %212, %213 : vector<8x256xf32>
    %215 = vector.extract_strided_slice %214 {offsets = [0, 0], sizes = [8, 128], strides = [1, 1]} : vector<8x256xf32> to vector<8x128xf32>
    %216 = vector.extract_strided_slice %214 {offsets = [0, 128], sizes = [8, 128], strides = [1, 1]} : vector<8x256xf32> to vector<8x128xf32>
    %217 = vector.extract_strided_slice %203 {offsets = [0, 256], sizes = [8, 128], strides = [1, 1]} : vector<8x384xf32> to vector<8x128xf32>
    %218 = vector.extract_strided_slice %206 {offsets = [0, 256], sizes = [8, 128], strides = [1, 1]} : vector<8x384xf32> to vector<8x128xf32>
    %219 = arith.mulf %215, %218 : vector<8x128xf32>
    %220 = arith.addf %217, %219 : vector<8x128xf32>
    %221 = math.tanh %220 : vector<8x128xf32>
    %cst_59 = arith.constant 1.000000e+00 : f32
    %222 = vector.broadcast %cst_59 : f32 to vector<8x128xf32>
    %223 = arith.subf %222, %216 : vector<8x128xf32>
    %224 = arith.mulf %223, %221 : vector<8x128xf32>
    %225 = arith.mulf %216, %175 : vector<8x128xf32>
    %226 = arith.addf %224, %225 : vector<8x128xf32>
    %227 = arith.truncf %200 : vector<8x128xf32> to vector<8x128xbf16>
    %cst_60 = arith.constant dense<0.000000e+00> : vector<8x384xf32>
    %228 = tpu.matmul %227, %9, %cst_60 {dimension_numbers = #tpu.dot_dimension_numbers<[1], [0], [0], [1], [0, 0, 1, 1], [], []>} : vector<8x128xbf16>, vector<128x384xbf16>, vector<8x384xf32> -> vector<8x384xf32>
    %229 = arith.addf %228, %14 : vector<8x384xf32>
    %c4 = arith.constant 4 : index
    %c0_61 = arith.constant 0 : index
    %c0_62 = arith.constant 0 : index
    %230 = vector.load %arg12[%c4, %c0_61, %c0_62] : memref<8x8x384xf32, #tpu.memory_space<vmem>>, vector<1x8x384xf32>
    %231 = vector.shape_cast %230 : vector<1x8x384xf32> to vector<8x384xf32>
    %232 = vector.extract_strided_slice %231 {offsets = [0, 0], sizes = [8, 256], strides = [1, 1]} : vector<8x384xf32> to vector<8x256xf32>
    %233 = vector.extract_strided_slice %229 {offsets = [0, 0], sizes = [8, 256], strides = [1, 1]} : vector<8x384xf32> to vector<8x256xf32>
    %234 = arith.addf %232, %233 : vector<8x256xf32>
    %235 = arith.negf %234 : vector<8x256xf32>
    %236 = math.exp %235 : vector<8x256xf32>
    %cst_63 = arith.constant 1.000000e+00 : f32
    %237 = vector.broadcast %cst_63 : f32 to vector<8x256xf32>
    %238 = arith.addf %237, %236 : vector<8x256xf32>
    %239 = arith.divf %237, %238 : vector<8x256xf32>
    %240 = vector.extract_strided_slice %239 {offsets = [0, 0], sizes = [8, 128], strides = [1, 1]} : vector<8x256xf32> to vector<8x128xf32>
    %241 = vector.extract_strided_slice %239 {offsets = [0, 128], sizes = [8, 128], strides = [1, 1]} : vector<8x256xf32> to vector<8x128xf32>
    %242 = vector.extract_strided_slice %231 {offsets = [0, 256], sizes = [8, 128], strides = [1, 1]} : vector<8x384xf32> to vector<8x128xf32>
    %243 = vector.extract_strided_slice %229 {offsets = [0, 256], sizes = [8, 128], strides = [1, 1]} : vector<8x384xf32> to vector<8x128xf32>
    %244 = arith.mulf %240, %243 : vector<8x128xf32>
    %245 = arith.addf %242, %244 : vector<8x128xf32>
    %246 = math.tanh %245 : vector<8x128xf32>
    %cst_64 = arith.constant 1.000000e+00 : f32
    %247 = vector.broadcast %cst_64 : f32 to vector<8x128xf32>
    %248 = arith.subf %247, %241 : vector<8x128xf32>
    %249 = arith.mulf %248, %246 : vector<8x128xf32>
    %250 = arith.mulf %241, %200 : vector<8x128xf32>
    %251 = arith.addf %249, %250 : vector<8x128xf32>
    %252 = arith.truncf %251 : vector<8x128xf32> to vector<8x128xbf16>
    %cst_65 = arith.constant dense<0.000000e+00> : vector<8x384xf32>
    %253 = tpu.matmul %252, %10, %cst_65 {dimension_numbers = #tpu.dot_dimension_numbers<[1], [0], [0], [1], [0, 0, 1, 1], [], []>} : vector<8x128xbf16>, vector<128x384xbf16>, vector<8x384xf32> -> vector<8x384xf32>
    %254 = arith.addf %253, %17 : vector<8x384xf32>
    %255 = arith.truncf %226 : vector<8x128xf32> to vector<8x128xbf16>
    %cst_66 = arith.constant dense<0.000000e+00> : vector<8x384xf32>
    %256 = tpu.matmul %255, %11, %cst_66 {dimension_numbers = #tpu.dot_dimension_numbers<[1], [0], [0], [1], [0, 0, 1, 1], [], []>} : vector<8x128xbf16>, vector<128x384xbf16>, vector<8x384xf32> -> vector<8x384xf32>
    %257 = arith.addf %256, %20 : vector<8x384xf32>
    %258 = vector.extract_strided_slice %254 {offsets = [0, 0], sizes = [8, 256], strides = [1, 1]} : vector<8x384xf32> to vector<8x256xf32>
    %259 = vector.extract_strided_slice %257 {offsets = [0, 0], sizes = [8, 256], strides = [1, 1]} : vector<8x384xf32> to vector<8x256xf32>
    %260 = arith.addf %258, %259 : vector<8x256xf32>
    %261 = arith.negf %260 : vector<8x256xf32>
    %262 = math.exp %261 : vector<8x256xf32>
    %cst_67 = arith.constant 1.000000e+00 : f32
    %263 = vector.broadcast %cst_67 : f32 to vector<8x256xf32>
    %264 = arith.addf %263, %262 : vector<8x256xf32>
    %265 = arith.divf %263, %264 : vector<8x256xf32>
    %266 = vector.extract_strided_slice %265 {offsets = [0, 0], sizes = [8, 128], strides = [1, 1]} : vector<8x256xf32> to vector<8x128xf32>
    %267 = vector.extract_strided_slice %265 {offsets = [0, 128], sizes = [8, 128], strides = [1, 1]} : vector<8x256xf32> to vector<8x128xf32>
    %268 = vector.extract_strided_slice %254 {offsets = [0, 256], sizes = [8, 128], strides = [1, 1]} : vector<8x384xf32> to vector<8x128xf32>
    %269 = vector.extract_strided_slice %257 {offsets = [0, 256], sizes = [8, 128], strides = [1, 1]} : vector<8x384xf32> to vector<8x128xf32>
    %270 = arith.mulf %266, %269 : vector<8x128xf32>
    %271 = arith.addf %268, %270 : vector<8x128xf32>
    %272 = math.tanh %271 : vector<8x128xf32>
    %cst_68 = arith.constant 1.000000e+00 : f32
    %273 = vector.broadcast %cst_68 : f32 to vector<8x128xf32>
    %274 = arith.subf %273, %267 : vector<8x128xf32>
    %275 = arith.mulf %274, %272 : vector<8x128xf32>
    %276 = arith.mulf %267, %226 : vector<8x128xf32>
    %277 = arith.addf %275, %276 : vector<8x128xf32>
    %278 = arith.truncf %251 : vector<8x128xf32> to vector<8x128xbf16>
    %cst_69 = arith.constant dense<0.000000e+00> : vector<8x384xf32>
    %279 = tpu.matmul %278, %9, %cst_69 {dimension_numbers = #tpu.dot_dimension_numbers<[1], [0], [0], [1], [0, 0, 1, 1], [], []>} : vector<8x128xbf16>, vector<128x384xbf16>, vector<8x384xf32> -> vector<8x384xf32>
    %280 = arith.addf %279, %14 : vector<8x384xf32>
    %c5 = arith.constant 5 : index
    %c0_70 = arith.constant 0 : index
    %c0_71 = arith.constant 0 : index
    %281 = vector.load %arg12[%c5, %c0_70, %c0_71] : memref<8x8x384xf32, #tpu.memory_space<vmem>>, vector<1x8x384xf32>
    %282 = vector.shape_cast %281 : vector<1x8x384xf32> to vector<8x384xf32>
    %283 = vector.extract_strided_slice %282 {offsets = [0, 0], sizes = [8, 256], strides = [1, 1]} : vector<8x384xf32> to vector<8x256xf32>
    %284 = vector.extract_strided_slice %280 {offsets = [0, 0], sizes = [8, 256], strides = [1, 1]} : vector<8x384xf32> to vector<8x256xf32>
    %285 = arith.addf %283, %284 : vector<8x256xf32>
    %286 = arith.negf %285 : vector<8x256xf32>
    %287 = math.exp %286 : vector<8x256xf32>
    %cst_72 = arith.constant 1.000000e+00 : f32
    %288 = vector.broadcast %cst_72 : f32 to vector<8x256xf32>
    %289 = arith.addf %288, %287 : vector<8x256xf32>
    %290 = arith.divf %288, %289 : vector<8x256xf32>
    %291 = vector.extract_strided_slice %290 {offsets = [0, 0], sizes = [8, 128], strides = [1, 1]} : vector<8x256xf32> to vector<8x128xf32>
    %292 = vector.extract_strided_slice %290 {offsets = [0, 128], sizes = [8, 128], strides = [1, 1]} : vector<8x256xf32> to vector<8x128xf32>
    %293 = vector.extract_strided_slice %282 {offsets = [0, 256], sizes = [8, 128], strides = [1, 1]} : vector<8x384xf32> to vector<8x128xf32>
    %294 = vector.extract_strided_slice %280 {offsets = [0, 256], sizes = [8, 128], strides = [1, 1]} : vector<8x384xf32> to vector<8x128xf32>
    %295 = arith.mulf %291, %294 : vector<8x128xf32>
    %296 = arith.addf %293, %295 : vector<8x128xf32>
    %297 = math.tanh %296 : vector<8x128xf32>
    %cst_73 = arith.constant 1.000000e+00 : f32
    %298 = vector.broadcast %cst_73 : f32 to vector<8x128xf32>
    %299 = arith.subf %298, %292 : vector<8x128xf32>
    %300 = arith.mulf %299, %297 : vector<8x128xf32>
    %301 = arith.mulf %292, %251 : vector<8x128xf32>
    %302 = arith.addf %300, %301 : vector<8x128xf32>
    %303 = arith.truncf %302 : vector<8x128xf32> to vector<8x128xbf16>
    %cst_74 = arith.constant dense<0.000000e+00> : vector<8x384xf32>
    %304 = tpu.matmul %303, %10, %cst_74 {dimension_numbers = #tpu.dot_dimension_numbers<[1], [0], [0], [1], [0, 0, 1, 1], [], []>} : vector<8x128xbf16>, vector<128x384xbf16>, vector<8x384xf32> -> vector<8x384xf32>
    %305 = arith.addf %304, %17 : vector<8x384xf32>
    %306 = arith.truncf %277 : vector<8x128xf32> to vector<8x128xbf16>
    %cst_75 = arith.constant dense<0.000000e+00> : vector<8x384xf32>
    %307 = tpu.matmul %306, %11, %cst_75 {dimension_numbers = #tpu.dot_dimension_numbers<[1], [0], [0], [1], [0, 0, 1, 1], [], []>} : vector<8x128xbf16>, vector<128x384xbf16>, vector<8x384xf32> -> vector<8x384xf32>
    %308 = arith.addf %307, %20 : vector<8x384xf32>
    %309 = vector.extract_strided_slice %305 {offsets = [0, 0], sizes = [8, 256], strides = [1, 1]} : vector<8x384xf32> to vector<8x256xf32>
    %310 = vector.extract_strided_slice %308 {offsets = [0, 0], sizes = [8, 256], strides = [1, 1]} : vector<8x384xf32> to vector<8x256xf32>
    %311 = arith.addf %309, %310 : vector<8x256xf32>
    %312 = arith.negf %311 : vector<8x256xf32>
    %313 = math.exp %312 : vector<8x256xf32>
    %cst_76 = arith.constant 1.000000e+00 : f32
    %314 = vector.broadcast %cst_76 : f32 to vector<8x256xf32>
    %315 = arith.addf %314, %313 : vector<8x256xf32>
    %316 = arith.divf %314, %315 : vector<8x256xf32>
    %317 = vector.extract_strided_slice %316 {offsets = [0, 0], sizes = [8, 128], strides = [1, 1]} : vector<8x256xf32> to vector<8x128xf32>
    %318 = vector.extract_strided_slice %316 {offsets = [0, 128], sizes = [8, 128], strides = [1, 1]} : vector<8x256xf32> to vector<8x128xf32>
    %319 = vector.extract_strided_slice %305 {offsets = [0, 256], sizes = [8, 128], strides = [1, 1]} : vector<8x384xf32> to vector<8x128xf32>
    %320 = vector.extract_strided_slice %308 {offsets = [0, 256], sizes = [8, 128], strides = [1, 1]} : vector<8x384xf32> to vector<8x128xf32>
    %321 = arith.mulf %317, %320 : vector<8x128xf32>
    %322 = arith.addf %319, %321 : vector<8x128xf32>
    %323 = math.tanh %322 : vector<8x128xf32>
    %cst_77 = arith.constant 1.000000e+00 : f32
    %324 = vector.broadcast %cst_77 : f32 to vector<8x128xf32>
    %325 = arith.subf %324, %318 : vector<8x128xf32>
    %326 = arith.mulf %325, %323 : vector<8x128xf32>
    %327 = arith.mulf %318, %277 : vector<8x128xf32>
    %328 = arith.addf %326, %327 : vector<8x128xf32>
    %329 = arith.truncf %302 : vector<8x128xf32> to vector<8x128xbf16>
    %cst_78 = arith.constant dense<0.000000e+00> : vector<8x384xf32>
    %330 = tpu.matmul %329, %9, %cst_78 {dimension_numbers = #tpu.dot_dimension_numbers<[1], [0], [0], [1], [0, 0, 1, 1], [], []>} : vector<8x128xbf16>, vector<128x384xbf16>, vector<8x384xf32> -> vector<8x384xf32>
    %331 = arith.addf %330, %14 : vector<8x384xf32>
    %c6 = arith.constant 6 : index
    %c0_79 = arith.constant 0 : index
    %c0_80 = arith.constant 0 : index
    %332 = vector.load %arg12[%c6, %c0_79, %c0_80] : memref<8x8x384xf32, #tpu.memory_space<vmem>>, vector<1x8x384xf32>
    %333 = vector.shape_cast %332 : vector<1x8x384xf32> to vector<8x384xf32>
    %334 = vector.extract_strided_slice %333 {offsets = [0, 0], sizes = [8, 256], strides = [1, 1]} : vector<8x384xf32> to vector<8x256xf32>
    %335 = vector.extract_strided_slice %331 {offsets = [0, 0], sizes = [8, 256], strides = [1, 1]} : vector<8x384xf32> to vector<8x256xf32>
    %336 = arith.addf %334, %335 : vector<8x256xf32>
    %337 = arith.negf %336 : vector<8x256xf32>
    %338 = math.exp %337 : vector<8x256xf32>
    %cst_81 = arith.constant 1.000000e+00 : f32
    %339 = vector.broadcast %cst_81 : f32 to vector<8x256xf32>
    %340 = arith.addf %339, %338 : vector<8x256xf32>
    %341 = arith.divf %339, %340 : vector<8x256xf32>
    %342 = vector.extract_strided_slice %341 {offsets = [0, 0], sizes = [8, 128], strides = [1, 1]} : vector<8x256xf32> to vector<8x128xf32>
    %343 = vector.extract_strided_slice %341 {offsets = [0, 128], sizes = [8, 128], strides = [1, 1]} : vector<8x256xf32> to vector<8x128xf32>
    %344 = vector.extract_strided_slice %333 {offsets = [0, 256], sizes = [8, 128], strides = [1, 1]} : vector<8x384xf32> to vector<8x128xf32>
    %345 = vector.extract_strided_slice %331 {offsets = [0, 256], sizes = [8, 128], strides = [1, 1]} : vector<8x384xf32> to vector<8x128xf32>
    %346 = arith.mulf %342, %345 : vector<8x128xf32>
    %347 = arith.addf %344, %346 : vector<8x128xf32>
    %348 = math.tanh %347 : vector<8x128xf32>
    %cst_82 = arith.constant 1.000000e+00 : f32
    %349 = vector.broadcast %cst_82 : f32 to vector<8x128xf32>
    %350 = arith.subf %349, %343 : vector<8x128xf32>
    %351 = arith.mulf %350, %348 : vector<8x128xf32>
    %352 = arith.mulf %343, %302 : vector<8x128xf32>
    %353 = arith.addf %351, %352 : vector<8x128xf32>
    %354 = arith.truncf %353 : vector<8x128xf32> to vector<8x128xbf16>
    %cst_83 = arith.constant dense<0.000000e+00> : vector<8x384xf32>
    %355 = tpu.matmul %354, %10, %cst_83 {dimension_numbers = #tpu.dot_dimension_numbers<[1], [0], [0], [1], [0, 0, 1, 1], [], []>} : vector<8x128xbf16>, vector<128x384xbf16>, vector<8x384xf32> -> vector<8x384xf32>
    %356 = arith.addf %355, %17 : vector<8x384xf32>
    %357 = arith.truncf %328 : vector<8x128xf32> to vector<8x128xbf16>
    %cst_84 = arith.constant dense<0.000000e+00> : vector<8x384xf32>
    %358 = tpu.matmul %357, %11, %cst_84 {dimension_numbers = #tpu.dot_dimension_numbers<[1], [0], [0], [1], [0, 0, 1, 1], [], []>} : vector<8x128xbf16>, vector<128x384xbf16>, vector<8x384xf32> -> vector<8x384xf32>
    %359 = arith.addf %358, %20 : vector<8x384xf32>
    %360 = vector.extract_strided_slice %356 {offsets = [0, 0], sizes = [8, 256], strides = [1, 1]} : vector<8x384xf32> to vector<8x256xf32>
    %361 = vector.extract_strided_slice %359 {offsets = [0, 0], sizes = [8, 256], strides = [1, 1]} : vector<8x384xf32> to vector<8x256xf32>
    %362 = arith.addf %360, %361 : vector<8x256xf32>
    %363 = arith.negf %362 : vector<8x256xf32>
    %364 = math.exp %363 : vector<8x256xf32>
    %cst_85 = arith.constant 1.000000e+00 : f32
    %365 = vector.broadcast %cst_85 : f32 to vector<8x256xf32>
    %366 = arith.addf %365, %364 : vector<8x256xf32>
    %367 = arith.divf %365, %366 : vector<8x256xf32>
    %368 = vector.extract_strided_slice %367 {offsets = [0, 0], sizes = [8, 128], strides = [1, 1]} : vector<8x256xf32> to vector<8x128xf32>
    %369 = vector.extract_strided_slice %367 {offsets = [0, 128], sizes = [8, 128], strides = [1, 1]} : vector<8x256xf32> to vector<8x128xf32>
    %370 = vector.extract_strided_slice %356 {offsets = [0, 256], sizes = [8, 128], strides = [1, 1]} : vector<8x384xf32> to vector<8x128xf32>
    %371 = vector.extract_strided_slice %359 {offsets = [0, 256], sizes = [8, 128], strides = [1, 1]} : vector<8x384xf32> to vector<8x128xf32>
    %372 = arith.mulf %368, %371 : vector<8x128xf32>
    %373 = arith.addf %370, %372 : vector<8x128xf32>
    %374 = math.tanh %373 : vector<8x128xf32>
    %cst_86 = arith.constant 1.000000e+00 : f32
    %375 = vector.broadcast %cst_86 : f32 to vector<8x128xf32>
    %376 = arith.subf %375, %369 : vector<8x128xf32>
    %377 = arith.mulf %376, %374 : vector<8x128xf32>
    %378 = arith.mulf %369, %328 : vector<8x128xf32>
    %379 = arith.addf %377, %378 : vector<8x128xf32>
    %380 = arith.truncf %353 : vector<8x128xf32> to vector<8x128xbf16>
    %cst_87 = arith.constant dense<0.000000e+00> : vector<8x384xf32>
    %381 = tpu.matmul %380, %9, %cst_87 {dimension_numbers = #tpu.dot_dimension_numbers<[1], [0], [0], [1], [0, 0, 1, 1], [], []>} : vector<8x128xbf16>, vector<128x384xbf16>, vector<8x384xf32> -> vector<8x384xf32>
    %382 = arith.addf %381, %14 : vector<8x384xf32>
    %c7 = arith.constant 7 : index
    %c0_88 = arith.constant 0 : index
    %c0_89 = arith.constant 0 : index
    %383 = vector.load %arg12[%c7, %c0_88, %c0_89] : memref<8x8x384xf32, #tpu.memory_space<vmem>>, vector<1x8x384xf32>
    %384 = vector.shape_cast %383 : vector<1x8x384xf32> to vector<8x384xf32>
    %385 = vector.extract_strided_slice %384 {offsets = [0, 0], sizes = [8, 256], strides = [1, 1]} : vector<8x384xf32> to vector<8x256xf32>
    %386 = vector.extract_strided_slice %382 {offsets = [0, 0], sizes = [8, 256], strides = [1, 1]} : vector<8x384xf32> to vector<8x256xf32>
    %387 = arith.addf %385, %386 : vector<8x256xf32>
    %388 = arith.negf %387 : vector<8x256xf32>
    %389 = math.exp %388 : vector<8x256xf32>
    %cst_90 = arith.constant 1.000000e+00 : f32
    %390 = vector.broadcast %cst_90 : f32 to vector<8x256xf32>
    %391 = arith.addf %390, %389 : vector<8x256xf32>
    %392 = arith.divf %390, %391 : vector<8x256xf32>
    %393 = vector.extract_strided_slice %392 {offsets = [0, 0], sizes = [8, 128], strides = [1, 1]} : vector<8x256xf32> to vector<8x128xf32>
    %394 = vector.extract_strided_slice %392 {offsets = [0, 128], sizes = [8, 128], strides = [1, 1]} : vector<8x256xf32> to vector<8x128xf32>
    %395 = vector.extract_strided_slice %384 {offsets = [0, 256], sizes = [8, 128], strides = [1, 1]} : vector<8x384xf32> to vector<8x128xf32>
    %396 = vector.extract_strided_slice %382 {offsets = [0, 256], sizes = [8, 128], strides = [1, 1]} : vector<8x384xf32> to vector<8x128xf32>
    %397 = arith.mulf %393, %396 : vector<8x128xf32>
    %398 = arith.addf %395, %397 : vector<8x128xf32>
    %399 = math.tanh %398 : vector<8x128xf32>
    %cst_91 = arith.constant 1.000000e+00 : f32
    %400 = vector.broadcast %cst_91 : f32 to vector<8x128xf32>
    %401 = arith.subf %400, %394 : vector<8x128xf32>
    %402 = arith.mulf %401, %399 : vector<8x128xf32>
    %403 = arith.mulf %394, %353 : vector<8x128xf32>
    %404 = arith.addf %402, %403 : vector<8x128xf32>
    %405 = arith.truncf %404 : vector<8x128xf32> to vector<8x128xbf16>
    %cst_92 = arith.constant dense<0.000000e+00> : vector<8x384xf32>
    %406 = tpu.matmul %405, %10, %cst_92 {dimension_numbers = #tpu.dot_dimension_numbers<[1], [0], [0], [1], [0, 0, 1, 1], [], []>} : vector<8x128xbf16>, vector<128x384xbf16>, vector<8x384xf32> -> vector<8x384xf32>
    %407 = arith.addf %406, %17 : vector<8x384xf32>
    %408 = arith.truncf %379 : vector<8x128xf32> to vector<8x128xbf16>
    %cst_93 = arith.constant dense<0.000000e+00> : vector<8x384xf32>
    %409 = tpu.matmul %408, %11, %cst_93 {dimension_numbers = #tpu.dot_dimension_numbers<[1], [0], [0], [1], [0, 0, 1, 1], [], []>} : vector<8x128xbf16>, vector<128x384xbf16>, vector<8x384xf32> -> vector<8x384xf32>
    %410 = arith.addf %409, %20 : vector<8x384xf32>
    %411 = vector.extract_strided_slice %407 {offsets = [0, 0], sizes = [8, 256], strides = [1, 1]} : vector<8x384xf32> to vector<8x256xf32>
    %412 = vector.extract_strided_slice %410 {offsets = [0, 0], sizes = [8, 256], strides = [1, 1]} : vector<8x384xf32> to vector<8x256xf32>
    %413 = arith.addf %411, %412 : vector<8x256xf32>
    %414 = arith.negf %413 : vector<8x256xf32>
    %415 = math.exp %414 : vector<8x256xf32>
    %cst_94 = arith.constant 1.000000e+00 : f32
    %416 = vector.broadcast %cst_94 : f32 to vector<8x256xf32>
    %417 = arith.addf %416, %415 : vector<8x256xf32>
    %418 = arith.divf %416, %417 : vector<8x256xf32>
    %419 = vector.extract_strided_slice %418 {offsets = [0, 0], sizes = [8, 128], strides = [1, 1]} : vector<8x256xf32> to vector<8x128xf32>
    %420 = vector.extract_strided_slice %418 {offsets = [0, 128], sizes = [8, 128], strides = [1, 1]} : vector<8x256xf32> to vector<8x128xf32>
    %421 = vector.extract_strided_slice %407 {offsets = [0, 256], sizes = [8, 128], strides = [1, 1]} : vector<8x384xf32> to vector<8x128xf32>
    %422 = vector.extract_strided_slice %410 {offsets = [0, 256], sizes = [8, 128], strides = [1, 1]} : vector<8x384xf32> to vector<8x128xf32>
    %423 = arith.mulf %419, %422 : vector<8x128xf32>
    %424 = arith.addf %421, %423 : vector<8x128xf32>
    %425 = math.tanh %424 : vector<8x128xf32>
    %cst_95 = arith.constant 1.000000e+00 : f32
    %426 = vector.broadcast %cst_95 : f32 to vector<8x128xf32>
    %427 = arith.subf %426, %420 : vector<8x128xf32>
    %428 = arith.mulf %427, %425 : vector<8x128xf32>
    %429 = arith.mulf %420, %379 : vector<8x128xf32>
    %430 = arith.addf %428, %429 : vector<8x128xf32>
    %431 = arith.truncf %430 : vector<8x128xf32> to vector<8x128xbf16>
    %c0_96 = arith.constant 0 : index
    %c0_97 = arith.constant 0 : index
    %432 = vector.load %arg9[%c0_96, %c0_97] : memref<128x128xbf16, #tpu.memory_space<vmem>>, vector<128x128xbf16>
    %cst_98 = arith.constant dense<0.000000e+00> : vector<8x128xf32>
    %433 = tpu.matmul %431, %432, %cst_98 {dimension_numbers = #tpu.dot_dimension_numbers<[1], [0], [0], [1], [0, 0, 1, 1], [], []>} : vector<8x128xbf16>, vector<128x128xbf16>, vector<8x128xf32> -> vector<8x128xf32>
    %c0_99 = arith.constant 0 : index
    %c0_100 = arith.constant 0 : index
    %434 = vector.load %arg10[%c0_99, %c0_100] : memref<1x128xf32, #tpu.memory_space<vmem>>, vector<1x128xf32>
    %435 = vector.broadcast %434 : vector<1x128xf32> to vector<8x128xf32>
    %436 = arith.addf %433, %435 : vector<8x128xf32>
    %c0_101 = arith.constant 0 : index
    %c0_102 = arith.constant 0 : index
    %437 = vector.load %arg11[%c0_101, %c0_102] : memref<8x128xf32, #tpu.memory_space<vmem>>, vector<8x128xf32>
    tpu.vector_store %arg11[%c0_101, %c0_102], %436 {strides = array<i32>} : memref<8x128xf32, #tpu.memory_space<vmem>>, vector<8x128xf32>,
    return
  }
}

</mosaic_0001>

<llo_original>
// kernel: rnn_gru_forward.1
$region0: #{rnn_gru_forward.1}
  #allocation0 [shape = 'u32[]', space=smem, size = 0x4, offset = 0x4, fixed_abs, tag = 'smem constant byte address 0x4 - core index']
  #allocation1 [shape = 'u32[144,128]{1,0:T(1,128)}', space=vmem, size = 0x12000, scoped, tag = 'internal scratch']
  #allocation2 [shape = 'f32[8,8,384]{2,1,0:T(8,128)}', space=vmem, size = 0x18000, scoped, tag = 'scratch operand']
  %s0 = inlined_call_operand.vmem [shape: bf16[8,8,128], index: 0, kind: input, shape index: {}]
  %s1 = inlined_call_operand.hbm [shape: bf16[128,384], index: 1, kind: input, shape index: {}]
  %s2 = inlined_call_operand.vmem [shape: f32[1,384], index: 2, kind: input, shape index: {}]
  %s3 = inlined_call_operand.hbm [shape: bf16[128,384], index: 3, kind: input, shape index: {}]
  %s4 = inlined_call_operand.vmem [shape: f32[1,384], index: 4, kind: input, shape index: {}]
  %s5 = inlined_call_operand.hbm [shape: bf16[128,384], index: 5, kind: input, shape index: {}]
  %s6 = inlined_call_operand.vmem [shape: f32[1,384], index: 6, kind: input, shape index: {}]
  %s7 = inlined_call_operand.hbm [shape: bf16[128,384], index: 7, kind: input, shape index: {}]
  %s8 = inlined_call_operand.vmem [shape: f32[1,384], index: 8, kind: input, shape index: {}]
  %s9 = inlined_call_operand.vmem [shape: bf16[128,128], index: 9, kind: input, shape index: {}]
  %s10 = inlined_call_operand.vmem [shape: f32[1,128], index: 10, kind: input, shape index: {}]
  %s11 = inlined_call_operand.vmem [shape: f32[8,128], index: 11, kind: output, shape index: {}]
  %s12 = sld [smem:[#allocation0]]
  $region70: #{rnn_gru_forward.1} parent=0
    _
  %s14 = ssub.s32 1, %s12
  %s15 = scalar_select 0, %s14, %s12
  $region1: #{rnn_gru_forward.1} parent=0
    #allocation3 [shape = 'u8[98304]{0}', space=vmem, size = 0x18000, scoped, tag = 'input window, operand 1, single buffered']
    #allocation4 [shape = 's32[1]{0}', space=sflag, size = 0x4, scoped, tag = 'scoped memory for rnn_gru_forward.1']
    #allocation5 [shape = 'u8[98304]{0}', space=vmem, size = 0x18000, scoped, tag = 'input window, operand 3, single buffered']
    #allocation6 [shape = 's32[1]{0}', space=sflag, size = 0x4, scoped, tag = 'scoped memory for rnn_gru_forward.1']
    #allocation7 [shape = 'u8[98304]{0}', space=vmem, size = 0x18000, scoped, tag = 'input window, operand 5, single buffered']
    #allocation8 [shape = 'u8[98304]{0}', space=vmem, size = 0x18000, scoped, tag = 'input window, operand 7, single buffered']
    #allocation9 [shape = 's32[1]{0}', space=sflag, size = 0x4, scoped, tag = 'scoped memory for rnn_gru_forward.1']
    %16 = vsyncpa [#allocation4], 0
    %17 = vsyncpa [#allocation6], 0
    %18 = vsyncpa [#allocation9], 0
    // Predicated region
    $region2: #{rnn_gru_forward.1} parent=1 // pred_check
      _
    $region3: #{rnn_gru_forward.1} parent=1 // pred_check_branch
      %20 = sbr.rel (0) target = $region5
    $region4: #{rnn_gru_forward.1} parent=1 // pred_region
      _
    $region5: #{rnn_gru_forward.1} parent=1 // pred_fallthru
      _
    // Predicated region
    $region6: #{rnn_gru_forward.1} parent=1 // pred_check
      _
    $region7: #{rnn_gru_forward.1} parent=1 // pred_check_branch
      %22 = sbr.rel (0) target = $region9
    $region8: #{rnn_gru_forward.1} parent=1 // pred_region
      %s24 = ssub.s32 3072, 3072
      %25 = vsyncadd [#allocation4], %s24
      %s26 = sshll.u32 [#allocation3], 4
      %s27 = int_to_ptr.vmem [resolvable:$true] %s26
      %32 = dma.hbm_to_vmem [thread:$0]  %s1, 3072, %s27, [#allocation4], 192, 192, 12
    $region9: #{rnn_gru_forward.1} parent=1 // pred_fallthru
      _
    // Predicated region
    $region10: #{rnn_gru_forward.1} parent=1 // pred_check
      _
    $region11: #{rnn_gru_forward.1} parent=1 // pred_check_branch
      %34 = sbr.rel (0) target = $region13
    $region12: #{rnn_gru_forward.1} parent=1 // pred_region
      _
    $region13: #{rnn_gru_forward.1} parent=1 // pred_fallthru
      _
    // Predicated region
    $region14: #{rnn_gru_forward.1} parent=1 // pred_check
      _
    $region15: #{rnn_gru_forward.1} parent=1 // pred_check_branch
      %36 = sbr.rel (0) target = $region17
    $region16: #{rnn_gru_forward.1} parent=1 // pred_region
      %s38 = ssub.s32 3072, 3072
      %39 = vsyncadd [#allocation6], %s38
      %s40 = sshll.u32 [#allocation5], 4
      %s41 = int_to_ptr.vmem [resolvable:$true] %s40
      %46 = dma.hbm_to_vmem [thread:$0]  %s3, 3072, %s41, [#allocation6], 192, 192, 12
    $region17: #{rnn_gru_forward.1} parent=1 // pred_fallthru
      _
    // Predicated region
    $region18: #{rnn_gru_forward.1} parent=1 // pred_check
      _
    $region19: #{rnn_gru_forward.1} parent=1 // pred_check_branch
      %48 = sbr.rel (0) target = $region21
    $region20: #{rnn_gru_forward.1} parent=1 // pred_region
      _
    $region21: #{rnn_gru_forward.1} parent=1 // pred_fallthru
      _
    // Predicated region
    $region22: #{rnn_gru_forward.1} parent=1 // pred_check
      _
    $region23: #{rnn_gru_forward.1} parent=1 // pred_check_branch
      %50 = sbr.rel (0) target = $region25
    $region24: #{rnn_gru_forward.1} parent=1 // pred_region
      %s52 = ssub.s32 3072, 3072
      %53 = vsyncadd [#allocation6], %s52
      %s54 = sshll.u32 [#allocation7], 4
      %s55 = int_to_ptr.vmem [resolvable:$true] %s54
      %60 = dma.hbm_to_vmem [thread:$0]  %s5, 3072, %s55, [#allocation6], 192, 192, 12
    $region25: #{rnn_gru_forward.1} parent=1 // pred_fallthru
      _
    // Predicated region
    $region26: #{rnn_gru_forward.1} parent=1 // pred_check
      _
    $region27: #{rnn_gru_forward.1} parent=1 // pred_check_branch
      %62 = sbr.rel (0) target = $region29
    $region28: #{rnn_gru_forward.1} parent=1 // pred_region
      _
    $region29: #{rnn_gru_forward.1} parent=1 // pred_fallthru
      _
    // Predicated region
    $region30: #{rnn_gru_forward.1} parent=1 // pred_check
      _
    $region31: #{rnn_gru_forward.1} parent=1 // pred_check_branch
      %64 = sbr.rel (0) target = $region33
    $region32: #{rnn_gru_forward.1} parent=1 // pred_region
      %s66 = ssub.s32 3072, 3072
      %67 = vsyncadd [#allocation9], %s66
      %s68 = sshll.u32 [#allocation8], 4
      %s69 = int_to_ptr.vmem [resolvable:$true] %s68
      %74 = dma.hbm_to_vmem [thread:$0]  %s7, 3072, %s69, [#allocation9], 192, 192, 12
    $region33: #{rnn_gru_forward.1} parent=1 // pred_fallthru
      _
    // Predicated region
    $region34: #{rnn_gru_forward.1} parent=1 // pred_check
      _
    $region35: #{rnn_gru_forward.1} parent=1 // pred_check_branch
      %76 = sbr.rel (0) target = $region37
    $region36: #{rnn_gru_forward.1} parent=1 // pred_region
      _
    $region37: #{rnn_gru_forward.1} parent=1 // pred_fallthru
      _
    // Predicated region
    $region38: #{rnn_gru_forward.1} parent=1 // pred_check
      _
    $region39: #{rnn_gru_forward.1} parent=1 // pred_check_branch
      %78 = sbr.rel (0) target = $region41
    $region40: #{rnn_gru_forward.1} parent=1 // pred_region
      _
    $region41: #{rnn_gru_forward.1} parent=1 // pred_fallthru
      _
    // Predicated region
    $region42: #{rnn_gru_forward.1} parent=1 // pred_check
      _
    $region43: #{rnn_gru_forward.1} parent=1 // pred_check_branch
      %80 = sbr.rel (0) target = $region45
    $region44: #{rnn_gru_forward.1} parent=1 // pred_region
      _
    $region45: #{rnn_gru_forward.1} parent=1 // pred_fallthru
      _
    // Predicated region
    $region46: #{rnn_gru_forward.1} parent=1 // pred_check
      _
    $region47: #{rnn_gru_forward.1} parent=1 // pred_check_branch
      %82 = sbr.rel (0) target = $region49
    $region48: #{rnn_gru_forward.1} parent=1 // pred_region
      %83 = dma.done [#allocation4], 3072
    $region49: #{rnn_gru_forward.1} parent=1 // pred_fallthru
      _
    // Predicated region
    $region50: #{rnn_gru_forward.1} parent=1 // pred_check
      _
    $region51: #{rnn_gru_forward.1} parent=1 // pred_check_branch
      %85 = sbr.rel (0) target = $region53
    $region52: #{rnn_gru_forward.1} parent=1 // pred_region
      %86 = dma.done [#allocation6], 3072
    $region53: #{rnn_gru_forward.1} parent=1 // pred_fallthru
      _
    // Predicated region
    $region54: #{rnn_gru_forward.1} parent=1 // pred_check
      _
    $region55: #{rnn_gru_forward.1} parent=1 // pred_check_branch
      %88 = sbr.rel (0) target = $region57
    $region56: #{rnn_gru_forward.1} parent=1 // pred_region
      %89 = dma.done [#allocation6], 3072
    $region57: #{rnn_gru_forward.1} parent=1 // pred_fallthru
      _
    // Predicated region
    $region58: #{rnn_gru_forward.1} parent=1 // pred_check
      _
    $region59: #{rnn_gru_forward.1} parent=1 // pred_check_branch
      %91 = sbr.rel (0) target = $region61
    $region60: #{rnn_gru_forward.1} parent=1 // pred_region
      %92 = dma.done [#allocation9], 3072
    $region61: #{rnn_gru_forward.1} parent=1 // pred_fallthru
      _
    %v94 = vld [vmem:[%s0] sm:$0xf]
    %v95 = vld [vmem:[%s0 + $0x4] sm:$0xf]
    %v96 = vld [vmem:[%s0 + $0x8] sm:$0xf]
    %v97 = vld [vmem:[%s0 + $0xc] sm:$0xf]
    %v98 = vld [vmem:[%s0 + $0x10] sm:$0xf]
    %v99 = vld [vmem:[%s0 + $0x14] sm:$0xf]
    %v100 = vld [vmem:[%s0 + $0x18] sm:$0xf]
    %v101 = vld [vmem:[%s0 + $0x1c] sm:$0xf]
    %v102 = vld [vmem:[#allocation3] sm:$0xff]
    %v103 = vld [vmem:[#allocation3 + $0x8] sm:$0xf]
    %v104 = vld [vmem:[#allocation3 + $0xc] sm:$0xff]
    %v105 = vld [vmem:[#allocation3 + $0x14] sm:$0xf]
    %v106 = vld [vmem:[#allocation3 + $0x18] sm:$0xff]
    %v107 = vld [vmem:[#allocation3 + $0x20] sm:$0xf]
    %v108 = vld [vmem:[#allocation3 + $0x24] sm:$0xff]
    %v109 = vld [vmem:[#allocation3 + $0x2c] sm:$0xf]
    %v110 = vld [vmem:[#allocation3 + $0x30] sm:$0xff]
    %v111 = vld [vmem:[#allocation3 + $0x38] sm:$0xf]
    %v112 = vld [vmem:[#allocation3 + $0x3c] sm:$0xff]
    %v113 = vld [vmem:[#allocation3 + $0x44] sm:$0xf]
    %v114 = vld [vmem:[#allocation3 + $0x48] sm:$0xff]
    %v115 = vld [vmem:[#allocation3 + $0x50] sm:$0xf]
    %v116 = vld [vmem:[#allocation3 + $0x54] sm:$0xff]
    %v117 = vld [vmem:[#allocation3 + $0x5c] sm:$0xf]
    %v118 = vld [vmem:[#allocation3 + $0x60] sm:$0xff]
    %v119 = vld [vmem:[#allocation3 + $0x68] sm:$0xf]
    %v120 = vld [vmem:[#allocation3 + $0x6c] sm:$0xff]
    %v121 = vld [vmem:[#allocation3 + $0x74] sm:$0xf]
    %v122 = vld [vmem:[#allocation3 + $0x78] sm:$0xff]
    %v123 = vld [vmem:[#allocation3 + $0x80] sm:$0xf]
    %v124 = vld [vmem:[#allocation3 + $0x84] sm:$0xff]
    %v125 = vld [vmem:[#allocation3 + $0x8c] sm:$0xf]
    %v126 = vld [vmem:[#allocation3 + $0x90] sm:$0xff]
    %v127 = vld [vmem:[#allocation3 + $0x98] sm:$0xf]
    %v128 = vld [vmem:[#allocation3 + $0x9c] sm:$0xff]
    %v129 = vld [vmem:[#allocation3 + $0xa4] sm:$0xf]
    %v130 = vld [vmem:[#allocation3 + $0xa8] sm:$0xff]
    %v131 = vld [vmem:[#allocation3 + $0xb0] sm:$0xf]
    %v132 = vld [vmem:[#allocation3 + $0xb4] sm:$0xff]
    %v133 = vld [vmem:[#allocation3 + $0xbc] sm:$0xf]
    %v134 = vld [vmem:[%s2] sm:$0x7]
    %v136 = vlaneseq
    %v137 = vshrl.u32 %v136, 7
    %v138 = vsub.s32 0, %v137
    %v139 = vrot.slane %v134, %v138
    %v140 = vlaneseq
    %v141 = vshrl.u32 %v140, 7
    %v142 = vsub.s32 1, %v141
    %v143 = vrot.slane %v134, %v142
    %v144 = vlaneseq
    %v145 = vshrl.u32 %v144, 7
    %v146 = vsub.s32 2, %v145
    %v147 = vrot.slane %v134, %v146
    %v159 = vunpack.c.l.b16 %v94
    %v160 = vunpack.c.l.b16 %v95
    %v161 = vunpack.c.l.b16 %v96
    %v162 = vunpack.c.l.b16 %v97
    %v163 = vunpack.c.l.b16 %v98
    %v164 = vunpack.c.l.b16 %v99
    %v165 = vunpack.c.l.b16 %v100
    %v166 = vunpack.c.l.b16 %v101
    %v167 = vpack.c.b16 %v160, %v159
    %v168 = vpack.c.b16 %v162, %v161
    %v169 = vpack.c.b16 %v164, %v163
    %v170 = vpack.c.b16 %v166, %v165
    %v207 = vunpack.c.l.b16 %v102
    %v208 = vunpack.c.h.b16 %v102
    %v209 = vunpack.c.l.b16 %v103
    %v210 = vunpack.c.l.b16 %v104
    %v211 = vunpack.c.h.b16 %v104
    %v212 = vunpack.c.l.b16 %v105
    %v213 = vunpack.c.l.b16 %v106
    %v214 = vunpack.c.h.b16 %v106
    %v215 = vunpack.c.l.b16 %v107
    %v216 = vunpack.c.l.b16 %v108
    %v217 = vunpack.c.h.b16 %v108
    %v218 = vunpack.c.l.b16 %v109
    %v219 = vunpack.c.l.b16 %v110
    %v220 = vunpack.c.h.b16 %v110
    %v221 = vunpack.c.l.b16 %v111
    %v222 = vunpack.c.l.b16 %v112
    %v223 = vunpack.c.h.b16 %v112
    %v224 = vunpack.c.l.b16 %v113
    %v225 = vunpack.c.l.b16 %v114
    %v226 = vunpack.c.h.b16 %v114
    %v227 = vunpack.c.l.b16 %v115
    %v228 = vunpack.c.l.b16 %v116
    %v229 = vunpack.c.h.b16 %v116
    %v230 = vunpack.c.l.b16 %v117
    %v231 = vunpack.c.l.b16 %v118
    %v232 = vunpack.c.h.b16 %v118
    %v233 = vunpack.c.l.b16 %v119
    %v234 = vunpack.c.l.b16 %v120
    %v235 = vunpack.c.h.b16 %v120
    %v236 = vunpack.c.l.b16 %v121
    %v237 = vunpack.c.l.b16 %v122
    %v238 = vunpack.c.h.b16 %v122
    %v239 = vunpack.c.l.b16 %v123
    %v240 = vunpack.c.l.b16 %v124
    %v241 = vunpack.c.h.b16 %v124
    %v242 = vunpack.c.l.b16 %v125
    %v243 = vunpack.c.l.b16 %v126
    %v244 = vunpack.c.h.b16 %v126
    %v245 = vunpack.c.l.b16 %v127
    %v246 = vunpack.c.l.b16 %v128
    %v247 = vunpack.c.h.b16 %v128
    %v248 = vunpack.c.l.b16 %v129
    %v249 = vunpack.c.l.b16 %v130
    %v250 = vunpack.c.h.b16 %v130
    %v251 = vunpack.c.l.b16 %v131
    %v252 = vunpack.c.l.b16 %v132
    %v253 = vunpack.c.h.b16 %v132
    %v254 = vunpack.c.l.b16 %v133
    %v255 = vpack.c.b16 %v210, %v207
    %v256 = vpack.c.b16 %v211, %v208
    %v257 = vpack.c.b16 %v212, %v209
    %v258 = vpack.c.b16 %v216, %v213
    %v259 = vpack.c.b16 %v217, %v214
    %v260 = vpack.c.b16 %v218, %v215
    %v261 = vpack.c.b16 %v222, %v219
    %v262 = vpack.c.b16 %v223, %v220
    %v263 = vpack.c.b16 %v224, %v221
    %v264 = vpack.c.b16 %v228, %v225
    %v265 = vpack.c.b16 %v229, %v226
    %v266 = vpack.c.b16 %v230, %v227
    %v267 = vpack.c.b16 %v234, %v231
    %v268 = vpack.c.b16 %v235, %v232
    %v269 = vpack.c.b16 %v236, %v233
    %v270 = vpack.c.b16 %v240, %v237
    %v271 = vpack.c.b16 %v241, %v238
    %v272 = vpack.c.b16 %v242, %v239
    %v273 = vpack.c.b16 %v246, %v243
    %v274 = vpack.c.b16 %v247, %v244
    %v275 = vpack.c.b16 %v248, %v245
    %v276 = vpack.c.b16 %v252, %v249
    %v277 = vpack.c.b16 %v253, %v250
    %v278 = vpack.c.b16 %v254, %v251
    %303 = vmatprep.subr.bf16.mxu0 %v256
    %304 = vmatpush1.bf16.msra.mxu0 %v255
    %305 = vmatprep.subr.bf16.mxu0 %v259
    %306 = vmatpush1.bf16.msra.mxu0 %v258
    %307 = vmatprep.subr.bf16.mxu0 %v262
    %308 = vmatpush1.bf16.msra.mxu0 %v261
    %309 = vmatprep.subr.bf16.mxu0 %v265
    %310 = vmatpush1.bf16.msra.mxu0 %v264
    %311 = vmatprep.subr.bf16.mxu0 %v268
    %312 = vmatpush1.bf16.msra.mxu0 %v267
    %313 = vmatprep.subr.bf16.mxu0 %v271
    %314 = vmatpush1.bf16.msra.mxu0 %v270
    %315 = vmatprep.subr.bf16.mxu0 %v274
    %316 = vmatpush1.bf16.msra.mxu0 %v273
    %317 = vmatprep.subr.bf16.mxu0 %v277
    %318 = vmatpush1.bf16.msra.mxu0 %v276
    %319 = vmatprep.subr.bf16.mxu0 0
    %320 = vmatpush1.bf16.msra.mxu0 0
    %321 = vmatprep.subr.bf16.mxu0 0
    %322 = vmatpush1.bf16.msra.mxu0 0
    %323 = vmatprep.subr.bf16.mxu0 0
    %324 = vmatpush1.bf16.msra.mxu0 0
    %325 = vmatprep.subr.bf16.mxu0 0
    %326 = vmatpush1.bf16.msra.mxu0 0
    %327 = vmatprep.subr.bf16.mxu0 0
    %328 = vmatpush1.bf16.msra.mxu0 0
    %329 = vmatprep.subr.bf16.mxu0 0
    %330 = vmatpush1.bf16.msra.mxu0 0
    %331 = vmatprep.subr.bf16.mxu0 0
    %332 = vmatpush1.bf16.msra.mxu0 0
    %333 = vmatprep.subr.bf16.mxu0 0
    %334 = vmatpush1.bf16.msra.mxu0 0
    %335 = vmatprep.mubr.bf16.mxu0 0
    %336 = vmatmul.mubr.bf16.gmra.mrb[0].mxu0 %v167
    %v337 = vpop.f32.mrb[0].mxu0
    %v338 = vadd.f32 %v139, %v337
    %v339 = vpop.f32.mrb[0].mxu0
    %v340 = vadd.f32 %v143, %v339
    %v341 = vpop.f32.mrb[0].mxu0
    %v342 = vadd.f32 %v139, %v341
    %v343 = vpop.f32.mrb[0].mxu0
    %v344 = vadd.f32 %v143, %v343
    %345 = vmatprep.mubr.bf16.mxu0 0
    %346 = vmatmul.mubr.bf16.gmra.mrb[0].mxu0 %v168
    %v347 = vpop.f32.mrb[0].mxu0
    %v348 = vadd.f32 %v139, %v347
    %v349 = vpop.f32.mrb[0].mxu0
    %v350 = vadd.f32 %v143, %v349
    %v351 = vpop.f32.mrb[0].mxu0
    %v352 = vadd.f32 %v139, %v351
    %v353 = vpop.f32.mrb[0].mxu0
    %v354 = vadd.f32 %v143, %v353
    %355 = vmatprep.mubr.bf16.mxu0 0
    %356 = vmatmul.mubr.bf16.gmra.mrb[0].mxu0 %v169
    %v357 = vpop.f32.mrb[0].mxu0
    %v358 = vadd.f32 %v139, %v357
    %v359 = vpop.f32.mrb[0].mxu0
    %v360 = vadd.f32 %v143, %v359
    %v361 = vpop.f32.mrb[0].mxu0
    %v362 = vadd.f32 %v139, %v361
    %v363 = vpop.f32.mrb[0].mxu0
    %v364 = vadd.f32 %v143, %v363
    %365 = vmatprep.mubr.bf16.mxu0 0
    %366 = vmatmul.mubr.bf16.gmra.mrb[0].mxu0 %v170
    %v367 = vpop.f32.mrb[0].mxu0
    %v368 = vadd.f32 %v139, %v367
    %v369 = vpop.f32.mrb[0].mxu0
    %v370 = vadd.f32 %v143, %v369
    %v371 = vpop.f32.mrb[0].mxu0
    %v372 = vadd.f32 %v139, %v371
    %v373 = vpop.f32.mrb[0].mxu0
    %v374 = vadd.f32 %v143, %v373
    %375 = vdwg.mxu0
    %376 = vmatprep.subr.bf16.mxu0 0
    %377 = vmatpush1.bf16.msra.mxu0 %v257
    %378 = vmatprep.subr.bf16.mxu0 0
    %379 = vmatpush1.bf16.msra.mxu0 %v260
    %380 = vmatprep.subr.bf16.mxu0 0
    %381 = vmatpush1.bf16.msra.mxu0 %v263
    %382 = vmatprep.subr.bf16.mxu0 0
    %383 = vmatpush1.bf16.msra.mxu0 %v266
    %384 = vmatprep.subr.bf16.mxu0 0
    %385 = vmatpush1.bf16.msra.mxu0 %v269
    %386 = vmatprep.subr.bf16.mxu0 0
    %387 = vmatpush1.bf16.msra.mxu0 %v272
    %388 = vmatprep.subr.bf16.mxu0 0
    %389 = vmatpush1.bf16.msra.mxu0 %v275
    %390 = vmatprep.subr.bf16.mxu0 0
    %391 = vmatpush1.bf16.msra.mxu0 %v278
    %392 = vmatprep.subr.bf16.mxu0 0
    %393 = vmatpush1.bf16.msra.mxu0 0
    %394 = vmatprep.subr.bf16.mxu0 0
    %395 = vmatpush1.bf16.msra.mxu0 0
    %396 = vmatprep.subr.bf16.mxu0 0
    %397 = vmatpush1.bf16.msra.mxu0 0
    %398 = vmatprep.subr.bf16.mxu0 0
    %399 = vmatpush1.bf16.msra.mxu0 0
    %400 = vmatprep.subr.bf16.mxu0 0
    %401 = vmatpush1.bf16.msra.mxu0 0
    %402 = vmatprep.subr.bf16.mxu0 0
    %403 = vmatpush1.bf16.msra.mxu0 0
    %404 = vmatprep.subr.bf16.mxu0 0
    %405 = vmatpush1.bf16.msra.mxu0 0
    %406 = vmatprep.subr.bf16.mxu0 0
    %407 = vmatpush1.bf16.msra.mxu0 0
    %408 = vmatprep.mubr.bf16.mxu0 0
    %409 = vmatmul.mubr.bf16.gmra.mrb[0].mxu0 %v167
    %v410 = vpop.f32.mrb[0].mxu0
    %v411 = vadd.f32 %v147, %v410
    %v412 = vpop.f32.mrb[0].mxu0
    %v413 = vpop.f32.mrb[0].mxu0
    %v414 = vadd.f32 %v147, %v413
    %v415 = vpop.f32.mrb[0].mxu0
    %416 = vmatprep.mubr.bf16.mxu0 0
    %417 = vmatmul.mubr.bf16.gmra.mrb[0].mxu0 %v168
    %v418 = vpop.f32.mrb[0].mxu0
    %v419 = vadd.f32 %v147, %v418
    %v420 = vpop.f32.mrb[0].mxu0
    %v421 = vpop.f32.mrb[0].mxu0
    %v422 = vadd.f32 %v147, %v421
    %v423 = vpop.f32.mrb[0].mxu0
    %424 = vmatprep.mubr.bf16.mxu0 0
    %425 = vmatmul.mubr.bf16.gmra.mrb[0].mxu0 %v169
    %v426 = vpop.f32.mrb[0].mxu0
    %v427 = vadd.f32 %v147, %v426
    %v428 = vpop.f32.mrb[0].mxu0
    %v429 = vpop.f32.mrb[0].mxu0
    %v430 = vadd.f32 %v147, %v429
    %v431 = vpop.f32.mrb[0].mxu0
    %432 = vmatprep.mubr.bf16.mxu0 0
    %433 = vmatmul.mubr.bf16.gmra.mrb[0].mxu0 %v170
    %v434 = vpop.f32.mrb[0].mxu0
    %v435 = vadd.f32 %v147, %v434
    %v436 = vpop.f32.mrb[0].mxu0
    %v437 = vpop.f32.mrb[0].mxu0
    %v438 = vadd.f32 %v147, %v437
    %v439 = vpop.f32.mrb[0].mxu0
    %440 = vdwg.mxu0
    %441 = vst [vmem:[#allocation2] sm:$0xff] %v338
    %442 = vst [vmem:[#allocation2 + $0x8] sm:$0xff] %v340
    %443 = vst [vmem:[#allocation2 + $0x10] sm:$0xff] %v411
    %444 = vst [vmem:[#allocation2 + $0x18] sm:$0xff] %v342
    %445 = vst [vmem:[#allocation2 + $0x20] sm:$0xff] %v344
    %446 = vst [vmem:[#allocation2 + $0x28] sm:$0xff] %v414
    %447 = vst [vmem:[#allocation2 + $0x30] sm:$0xff] %v348
    %448 = vst [vmem:[#allocation2 + $0x38] sm:$0xff] %v350
    %449 = vst [vmem:[#allocation2 + $0x40] sm:$0xff] %v419
    %450 = vst [vmem:[#allocation2 + $0x48] sm:$0xff] %v352
    %451 = vst [vmem:[#allocation2 + $0x50] sm:$0xff] %v354
    %452 = vst [vmem:[#allocation2 + $0x58] sm:$0xff] %v422
    %453 = vst [vmem:[#allocation2 + $0x60] sm:$0xff] %v358
    %454 = vst [vmem:[#allocation2 + $0x68] sm:$0xff] %v360
    %455 = vst [vmem:[#allocation2 + $0x70] sm:$0xff] %v427
    %456 = vst [vmem:[#allocation2 + $0x78] sm:$0xff] %v362
    %457 = vst [vmem:[#allocation2 + $0x80] sm:$0xff] %v364
    %458 = vst [vmem:[#allocation2 + $0x88] sm:$0xff] %v430
    %459 = vst [vmem:[#allocation2 + $0x90] sm:$0xff] %v368
    %460 = vst [vmem:[#allocation2 + $0x98] sm:$0xff] %v370
    %461 = vst [vmem:[#allocation2 + $0xa0] sm:$0xff] %v435
    %462 = vst [vmem:[#allocation2 + $0xa8] sm:$0xff] %v372
    %463 = vst [vmem:[#allocation2 + $0xb0] sm:$0xff] %v374
    %464 = vst [vmem:[#allocation2 + $0xb8] sm:$0xff] %v438
    %v465 = vld [vmem:[#allocation5] sm:$0xff]
    %v466 = vld [vmem:[#allocation5 + $0x8] sm:$0xf]
    %v467 = vld [vmem:[#allocation5 + $0xc] sm:$0xff]
    %v468 = vld [vmem:[#allocation5 + $0x14] sm:$0xf]
    %v469 = vld [vmem:[#allocation5 + $0x18] sm:$0xff]
    %v470 = vld [vmem:[#allocation5 + $0x20] sm:$0xf]
    %v471 = vld [vmem:[#allocation5 + $0x24] sm:$0xff]
    %v472 = vld [vmem:[#allocation5 + $0x2c] sm:$0xf]
    %v473 = vld [vmem:[#allocation5 + $0x30] sm:$0xff]
    %v474 = vld [vmem:[#allocation5 + $0x38] sm:$0xf]
    %v475 = vld [vmem:[#allocation5 + $0x3c] sm:$0xff]
    %v476 = vld [vmem:[#allocation5 + $0x44] sm:$0xf]
    %v477 = vld [vmem:[#allocation5 + $0x48] sm:$0xff]
    %v478 = vld [vmem:[#allocation5 + $0x50] sm:$0xf]
    %v479 = vld [vmem:[#allocation5 + $0x54] sm:$0xff]
    %v480 = vld [vmem:[#allocation5 + $0x5c] sm:$0xf]
    %v481 = vld [vmem:[#allocation5 + $0x60] sm:$0xff]
    %v482 = vld [vmem:[#allocation5 + $0x68] sm:$0xf]
    %v483 = vld [vmem:[#allocation5 + $0x6c] sm:$0xff]
    %v484 = vld [vmem:[#allocation5 + $0x74] sm:$0xf]
    %v485 = vld [vmem:[#allocation5 + $0x78] sm:$0xff]
    %v486 = vld [vmem:[#allocation5 + $0x80] sm:$0xf]
    %v487 = vld [vmem:[#allocation5 + $0x84] sm:$0xff]
    %v488 = vld [vmem:[#allocation5 + $0x8c] sm:$0xf]
    %v489 = vld [vmem:[#allocation5 + $0x90] sm:$0xff]
    %v490 = vld [vmem:[#allocation5 + $0x98] sm:$0xf]
    %v491 = vld [vmem:[#allocation5 + $0x9c] sm:$0xff]
    %v492 = vld [vmem:[#allocation5 + $0xa4] sm:$0xf]
    %v493 = vld [vmem:[#allocation5 + $0xa8] sm:$0xff]
    %v494 = vld [vmem:[#allocation5 + $0xb0] sm:$0xf]
    %v495 = vld [vmem:[#allocation5 + $0xb4] sm:$0xff]
    %v496 = vld [vmem:[#allocation5 + $0xbc] sm:$0xf]
    %v497 = vld [vmem:[#allocation7] sm:$0xff]
    %v498 = vld [vmem:[#allocation7 + $0x8] sm:$0xf]
    %v499 = vld [vmem:[#allocation7 + $0xc] sm:$0xff]
    %v500 = vld [vmem:[#allocation7 + $0x14] sm:$0xf]
    %v501 = vld [vmem:[#allocation7 + $0x18] sm:$0xff]
    %v502 = vld [vmem:[#allocation7 + $0x20] sm:$0xf]
    %v503 = vld [vmem:[#allocation7 + $0x24] sm:$0xff]
    %v504 = vld [vmem:[#allocation7 + $0x2c] sm:$0xf]
    %v505 = vld [vmem:[#allocation7 + $0x30] sm:$0xff]
    %v506 = vld [vmem:[#allocation7 + $0x38] sm:$0xf]
    %v507 = vld [vmem:[#allocation7 + $0x3c] sm:$0xff]
    %v508 = vld [vmem:[#allocation7 + $0x44] sm:$0xf]
    %v509 = vld [vmem:[#allocation7 + $0x48] sm:$0xff]
    %v510 = vld [vmem:[#allocation7 + $0x50] sm:$0xf]
    %v511 = vld [vmem:[#allocation7 + $0x54] sm:$0xff]
    %v512 = vld [vmem:[#allocation7 + $0x5c] sm:$0xf]
    %v513 = vld [vmem:[#allocation7 + $0x60] sm:$0xff]
    %v514 = vld [vmem:[#allocation7 + $0x68] sm:$0xf]
    %v515 = vld [vmem:[#allocation7 + $0x6c] sm:$0xff]
    %v516 = vld [vmem:[#allocation7 + $0x74] sm:$0xf]
    %v517 = vld [vmem:[#allocation7 + $0x78] sm:$0xff]
    %v518 = vld [vmem:[#allocation7 + $0x80] sm:$0xf]
    %v519 = vld [vmem:[#allocation7 + $0x84] sm:$0xff]
    %v520 = vld [vmem:[#allocation7 + $0x8c] sm:$0xf]
    %v521 = vld [vmem:[#allocation7 + $0x90] sm:$0xff]
    %v522 = vld [vmem:[#allocation7 + $0x98] sm:$0xf]
    %v523 = vld [vmem:[#allocation7 + $0x9c] sm:$0xff]
    %v524 = vld [vmem:[#allocation7 + $0xa4] sm:$0xf]
    %v525 = vld [vmem:[#allocation7 + $0xa8] sm:$0xff]
    %v526 = vld [vmem:[#allocation7 + $0xb0] sm:$0xf]
    %v527 = vld [vmem:[#allocation7 + $0xb4] sm:$0xff]
    %v528 = vld [vmem:[#allocation7 + $0xbc] sm:$0xf]
    %v529 = vld [vmem:[#allocation8] sm:$0xff]
    %v530 = vld [vmem:[#allocation8 + $0x8] sm:$0xf]
    %v531 = vld [vmem:[#allocation8 + $0xc] sm:$0xff]
    %v532 = vld [vmem:[#allocation8 + $0x14] sm:$0xf]
    %v533 = vld [vmem:[#allocation8 + $0x18] sm:$0xff]
    %v534 = vld [vmem:[#allocation8 + $0x20] sm:$0xf]
    %v535 = vld [vmem:[#allocation8 + $0x24] sm:$0xff]
    %v536 = vld [vmem:[#allocation8 + $0x2c] sm:$0xf]
    %v537 = vld [vmem:[#allocation8 + $0x30] sm:$0xff]
    %v538 = vld [vmem:[#allocation8 + $0x38] sm:$0xf]
    %v539 = vld [vmem:[#allocation8 + $0x3c] sm:$0xff]
    %v540 = vld [vmem:[#allocation8 + $0x44] sm:$0xf]
    %v541 = vld [vmem:[#allocation8 + $0x48] sm:$0xff]
    %v542 = vld [vmem:[#allocation8 + $0x50] sm:$0xf]
    %v543 = vld [vmem:[#allocation8 + $0x54] sm:$0xff]
    %v544 = vld [vmem:[#allocation8 + $0x5c] sm:$0xf]
    %v545 = vld [vmem:[#allocation8 + $0x60] sm:$0xff]
    %v546 = vld [vmem:[#allocation8 + $0x68] sm:$0xf]
    %v547 = vld [vmem:[#allocation8 + $0x6c] sm:$0xff]
    %v548 = vld [vmem:[#allocation8 + $0x74] sm:$0xf]
    %v549 = vld [vmem:[#allocation8 + $0x78] sm:$0xff]
    %v550 = vld [vmem:[#allocation8 + $0x80] sm:$0xf]
    %v551 = vld [vmem:[#allocation8 + $0x84] sm:$0xff]
    %v552 = vld [vmem:[#allocation8 + $0x8c] sm:$0xf]
    %v553 = vld [vmem:[#allocation8 + $0x90] sm:$0xff]
    %v554 = vld [vmem:[#allocation8 + $0x98] sm:$0xf]
    %v555 = vld [vmem:[#allocation8 + $0x9c] sm:$0xff]
    %v556 = vld [vmem:[#allocation8 + $0xa4] sm:$0xf]
    %v557 = vld [vmem:[#allocation8 + $0xa8] sm:$0xff]
    %v558 = vld [vmem:[#allocation8 + $0xb0] sm:$0xf]
    %v559 = vld [vmem:[#allocation8 + $0xb4] sm:$0xff]
    %v560 = vld [vmem:[#allocation8 + $0xbc] sm:$0xf]
    %v561 = vld [vmem:[%s4] sm:$0x7]
    %v563 = vlaneseq
    %v564 = vshrl.u32 %v563, 7
    %v565 = vsub.s32 0, %v564
    %v566 = vrot.slane %v561, %v565
    %v567 = vlaneseq
    %v568 = vshrl.u32 %v567, 7
    %v569 = vsub.s32 1, %v568
    %v570 = vrot.slane %v561, %v569
    %v571 = vlaneseq
    %v572 = vshrl.u32 %v571, 7
    %v573 = vsub.s32 2, %v572
    %v574 = vrot.slane %v561, %v573
    %v578 = vld [vmem:[%s6] sm:$0x7]
    %v580 = vlaneseq
    %v581 = vshrl.u32 %v580, 7
    %v582 = vsub.s32 0, %v581
    %v583 = vrot.slane %v578, %v582
    %v584 = vlaneseq
    %v585 = vshrl.u32 %v584, 7
    %v586 = vsub.s32 1, %v585
    %v587 = vrot.slane %v578, %v586
    %v588 = vlaneseq
    %v589 = vshrl.u32 %v588, 7
    %v590 = vsub.s32 2, %v589
    %v591 = vrot.slane %v578, %v590
    %v595 = vld [vmem:[%s8] sm:$0x7]
    %v597 = vlaneseq
    %v598 = vshrl.u32 %v597, 7
    %v599 = vsub.s32 0, %v598
    %v600 = vrot.slane %v595, %v599
    %v601 = vlaneseq
    %v602 = vshrl.u32 %v601, 7
    %v603 = vsub.s32 1, %v602
    %v604 = vrot.slane %v595, %v603
    %v605 = vlaneseq
    %v606 = vshrl.u32 %v605, 7
    %v607 = vsub.s32 2, %v606
    %v608 = vrot.slane %v595, %v607
    %v644 = vunpack.c.l.b16 %v465
    %v645 = vunpack.c.h.b16 %v465
    %v646 = vunpack.c.l.b16 %v466
    %v647 = vunpack.c.l.b16 %v467
    %v648 = vunpack.c.h.b16 %v467
    %v649 = vunpack.c.l.b16 %v468
    %v650 = vunpack.c.l.b16 %v469
    %v651 = vunpack.c.h.b16 %v469
    %v652 = vunpack.c.l.b16 %v470
    %v653 = vunpack.c.l.b16 %v471
    %v654 = vunpack.c.h.b16 %v471
    %v655 = vunpack.c.l.b16 %v472
    %v656 = vunpack.c.l.b16 %v473
    %v657 = vunpack.c.h.b16 %v473
    %v658 = vunpack.c.l.b16 %v474
    %v659 = vunpack.c.l.b16 %v475
    %v660 = vunpack.c.h.b16 %v475
    %v661 = vunpack.c.l.b16 %v476
    %v662 = vunpack.c.l.b16 %v477
    %v663 = vunpack.c.h.b16 %v477
    %v664 = vunpack.c.l.b16 %v478
    %v665 = vunpack.c.l.b16 %v479
    %v666 = vunpack.c.h.b16 %v479
    %v667 = vunpack.c.l.b16 %v480
    %v668 = vunpack.c.l.b16 %v481
    %v669 = vunpack.c.h.b16 %v481
    %v670 = vunpack.c.l.b16 %v482
    %v671 = vunpack.c.l.b16 %v483
    %v672 = vunpack.c.h.b16 %v483
    %v673 = vunpack.c.l.b16 %v484
    %v674 = vunpack.c.l.b16 %v485
    %v675 = vunpack.c.h.b16 %v485
    %v676 = vunpack.c.l.b16 %v486
    %v677 = vunpack.c.l.b16 %v487
    %v678 = vunpack.c.h.b16 %v487
    %v679 = vunpack.c.l.b16 %v488
    %v680 = vunpack.c.l.b16 %v489
    %v681 = vunpack.c.h.b16 %v489
    %v682 = vunpack.c.l.b16 %v490
    %v683 = vunpack.c.l.b16 %v491
    %v684 = vunpack.c.h.b16 %v491
    %v685 = vunpack.c.l.b16 %v492
    %v686 = vunpack.c.l.b16 %v493
    %v687 = vunpack.c.h.b16 %v493
    %v688 = vunpack.c.l.b16 %v494
    %v689 = vunpack.c.l.b16 %v495
    %v690 = vunpack.c.h.b16 %v495
    %v691 = vunpack.c.l.b16 %v496
    %v692 = vpack.c.b16 %v647, %v644
    %v693 = vpack.c.b16 %v648, %v645
    %v694 = vpack.c.b16 %v649, %v646
    %v695 = vpack.c.b16 %v653, %v650
    %v696 = vpack.c.b16 %v654, %v651
    %v697 = vpack.c.b16 %v655, %v652
    %v698 = vpack.c.b16 %v659, %v656
    %v699 = vpack.c.b16 %v660, %v657
    %v700 = vpack.c.b16 %v661, %v658
    %v701 = vpack.c.b16 %v665, %v662
    %v702 = vpack.c.b16 %v666, %v663
    %v703 = vpack.c.b16 %v667, %v664
    %v704 = vpack.c.b16 %v671, %v668
    %v705 = vpack.c.b16 %v672, %v669
    %v706 = vpack.c.b16 %v673, %v670
    %v707 = vpack.c.b16 %v677, %v674
    %v708 = vpack.c.b16 %v678, %v675
    %v709 = vpack.c.b16 %v679, %v676
    %v710 = vpack.c.b16 %v683, %v680
    %v711 = vpack.c.b16 %v684, %v681
    %v712 = vpack.c.b16 %v685, %v682
    %v713 = vpack.c.b16 %v689, %v686
    %v714 = vpack.c.b16 %v690, %v687
    %v715 = vpack.c.b16 %v691, %v688
    %740 = vmatprep.subr.bf16.mxu0 %v693
    %741 = vmatpush1.bf16.msra.mxu0 %v692
    %742 = vmatprep.subr.bf16.mxu0 %v696
    %743 = vmatpush1.bf16.msra.mxu0 %v695
    %744 = vmatprep.subr.bf16.mxu0 %v699
    %745 = vmatpush1.bf16.msra.mxu0 %v698
    %746 = vmatprep.subr.bf16.mxu0 %v702
    %747 = vmatpush1.bf16.msra.mxu0 %v701
    %748 = vmatprep.subr.bf16.mxu0 %v705
    %749 = vmatpush1.bf16.msra.mxu0 %v704
    %750 = vmatprep.subr.bf16.mxu0 %v708
    %751 = vmatpush1.bf16.msra.mxu0 %v707
    %752 = vmatprep.subr.bf16.mxu0 %v711
    %753 = vmatpush1.bf16.msra.mxu0 %v710
    %754 = vmatprep.subr.bf16.mxu0 %v714
    %755 = vmatpush1.bf16.msra.mxu0 %v713
    %756 = vmatprep.subr.bf16.mxu0 0
    %757 = vmatpush1.bf16.msra.mxu0 0
    %758 = vmatprep.subr.bf16.mxu0 0
    %759 = vmatpush1.bf16.msra.mxu0 0
    %760 = vmatprep.subr.bf16.mxu0 0
    %761 = vmatpush1.bf16.msra.mxu0 0
    %762 = vmatprep.subr.bf16.mxu0 0
    %763 = vmatpush1.bf16.msra.mxu0 0
    %764 = vmatprep.subr.bf16.mxu0 0
    %765 = vmatpush1.bf16.msra.mxu0 0
    %766 = vmatprep.subr.bf16.mxu0 0
    %767 = vmatpush1.bf16.msra.mxu0 0
    %768 = vmatprep.subr.bf16.mxu0 0
    %769 = vmatpush1.bf16.msra.mxu0 0
    %770 = vmatprep.subr.bf16.mxu0 0
    %771 = vmatpush1.bf16.msra.mxu0 0
    %772 = vmatprep.mubr.bf16.mxu0 0
    %773 = vmatmul.mubr.bf16.gmra.mrb[0].mxu0 0
    %v774 = vpop.f32.mrb[0].mxu0
    %v775 = vadd.f32 %v566, %v774
    %v776 = vpop.f32.mrb[0].mxu0
    %v777 = vadd.f32 %v570, %v776
    %v778 = vpop.f32.mrb[0].mxu0
    %v779 = vpop.f32.mrb[0].mxu0
    %780 = vdwg.mxu0
    %781 = vmatprep.subr.bf16.mxu0 0
    %782 = vmatpush1.bf16.msra.mxu0 %v694
    %783 = vmatprep.subr.bf16.mxu0 0
    %784 = vmatpush1.bf16.msra.mxu0 %v697
    %785 = vmatprep.subr.bf16.mxu0 0
    %786 = vmatpush1.bf16.msra.mxu0 %v700
    %787 = vmatprep.subr.bf16.mxu0 0
    %788 = vmatpush1.bf16.msra.mxu0 %v703
    %789 = vmatprep.subr.bf16.mxu0 0
    %790 = vmatpush1.bf16.msra.mxu0 %v706
    %791 = vmatprep.subr.bf16.mxu0 0
    %792 = vmatpush1.bf16.msra.mxu0 %v709
    %793 = vmatprep.subr.bf16.mxu0 0
    %794 = vmatpush1.bf16.msra.mxu0 %v712
    %795 = vmatprep.subr.bf16.mxu0 0
    %796 = vmatpush1.bf16.msra.mxu0 %v715
    %797 = vmatprep.subr.bf16.mxu0 0
    %798 = vmatpush1.bf16.msra.mxu0 0
    %799 = vmatprep.subr.bf16.mxu0 0
    %800 = vmatpush1.bf16.msra.mxu0 0
    %801 = vmatprep.subr.bf16.mxu0 0
    %802 = vmatpush1.bf16.msra.mxu0 0
    %803 = vmatprep.subr.bf16.mxu0 0
    %804 = vmatpush1.bf16.msra.mxu0 0
    %805 = vmatprep.subr.bf16.mxu0 0
    %806 = vmatpush1.bf16.msra.mxu0 0
    %807 = vmatprep.subr.bf16.mxu0 0
    %808 = vmatpush1.bf16.msra.mxu0 0
    %809 = vmatprep.subr.bf16.mxu0 0
    %810 = vmatpush1.bf16.msra.mxu0 0
    %811 = vmatprep.subr.bf16.mxu0 0
    %812 = vmatpush1.bf16.msra.mxu0 0
    %813 = vmatprep.mubr.bf16.mxu0 0
    %814 = vmatmul.mubr.bf16.gmra.mrb[0].mxu0 0
    %v815 = vpop.f32.mrb[0].mxu0
    %v816 = vadd.f32 %v574, %v815
    %v817 = vpop.f32.mrb[0].mxu0
    %v818 = vpop.f32.mrb[0].mxu0
    %v819 = vpop.f32.mrb[0].mxu0
    %820 = vdwg.mxu0
    %v821 = vld [vmem:[#allocation2] sm:$0xff]
    %v822 = vld [vmem:[#allocation2 + $0x8] sm:$0xff]
    %v823 = vld [vmem:[#allocation2 + $0x10] sm:$0xff]
    %v824 = vadd.f32 %v821, %v775
    %v825 = vadd.f32 %v822, %v777
    %v826 = vxor.u32 %v824, 2147483648
    %v827 = vxor.u32 %v825, 2147483648
    %v828 = vmul.f32 %v826, 1.442695
    %v829 = vpow.pop %v828
    %v830 = vmul.f32 %v827, 1.442695
    %v831 = vpow.pop %v830
    %v832 = vadd.f32 %v829, 1.0
    %v833 = vadd.f32 %v831, 1.0
    %v834 = vrcp.pop %v832
    %v835 = vmul.f32 1.0, %v834
    %v836 = vrcp.pop %v833
    %v837 = vmul.f32 1.0, %v836
    %v838 = vmul.f32 %v835, %v816
    %v839 = vadd.f32 %v823, %v838
    %v840 = vtanh.pop %v839
    %v841 = vsub.f32 1.0, %v837
    %v842 = vmul.f32 %v841, %v840
    %v843 = vmul.f32 %v837, 0.0
    %v844 = vadd.f32 %v842, %v843
    %v845 = vpack.c.bf16 %v844, %v844
    %v878 = vunpack.c.l.b16 %v497
    %v879 = vunpack.c.h.b16 %v497
    %v880 = vunpack.c.l.b16 %v498
    %v881 = vunpack.c.l.b16 %v499
    %v882 = vunpack.c.h.b16 %v499
    %v883 = vunpack.c.l.b16 %v500
    %v884 = vunpack.c.l.b16 %v501
    %v885 = vunpack.c.h.b16 %v501
    %v886 = vunpack.c.l.b16 %v502
    %v887 = vunpack.c.l.b16 %v503
    %v888 = vunpack.c.h.b16 %v503
    %v889 = vunpack.c.l.b16 %v504
    %v890 = vunpack.c.l.b16 %v505
    %v891 = vunpack.c.h.b16 %v505
    %v892 = vunpack.c.l.b16 %v506
    %v893 = vunpack.c.l.b16 %v507
    %v894 = vunpack.c.h.b16 %v507
    %v895 = vunpack.c.l.b16 %v508
    %v896 = vunpack.c.l.b16 %v509
    %v897 = vunpack.c.h.b16 %v509
    %v898 = vunpack.c.l.b16 %v510
    %v899 = vunpack.c.l.b16 %v511
    %v900 = vunpack.c.h.b16 %v511
    %v901 = vunpack.c.l.b16 %v512
    %v902 = vunpack.c.l.b16 %v513
    %v903 = vunpack.c.h.b16 %v513
    %v904 = vunpack.c.l.b16 %v514
    %v905 = vunpack.c.l.b16 %v515
    %v906 = vunpack.c.h.b16 %v515
    %v907 = vunpack.c.l.b16 %v516
    %v908 = vunpack.c.l.b16 %v517
    %v909 = vunpack.c.h.b16 %v517
    %v910 = vunpack.c.l.b16 %v518
    %v911 = vunpack.c.l.b16 %v519
    %v912 = vunpack.c.h.b16 %v519
    %v913 = vunpack.c.l.b16 %v520
    %v914 = vunpack.c.l.b16 %v521
    %v915 = vunpack.c.h.b16 %v521
    %v916 = vunpack.c.l.b16 %v522
    %v917 = vunpack.c.l.b16 %v523
    %v918 = vunpack.c.h.b16 %v523
    %v919 = vunpack.c.l.b16 %v524
    %v920 = vunpack.c.l.b16 %v525
    %v921 = vunpack.c.h.b16 %v525
    %v922 = vunpack.c.l.b16 %v526
    %v923 = vunpack.c.l.b16 %v527
    %v924 = vunpack.c.h.b16 %v527
    %v925 = vunpack.c.l.b16 %v528
    %v926 = vpack.c.b16 %v881, %v878
    %v927 = vpack.c.b16 %v882, %v879
    %v928 = vpack.c.b16 %v883, %v880
    %v929 = vpack.c.b16 %v887, %v884
    %v930 = vpack.c.b16 %v888, %v885
    %v931 = vpack.c.b16 %v889, %v886
    %v932 = vpack.c.b16 %v893, %v890
    %v933 = vpack.c.b16 %v894, %v891
    %v934 = vpack.c.b16 %v895, %v892
    %v935 = vpack.c.b16 %v899, %v896
    %v936 = vpack.c.b16 %v900, %v897
    %v937 = vpack.c.b16 %v901, %v898
    %v938 = vpack.c.b16 %v905, %v902
    %v939 = vpack.c.b16 %v906, %v903
    %v940 = vpack.c.b16 %v907, %v904
    %v941 = vpack.c.b16 %v911, %v908
    %v942 = vpack.c.b16 %v912, %v909
    %v943 = vpack.c.b16 %v913, %v910
    %v944 = vpack.c.b16 %v917, %v914
    %v945 = vpack.c.b16 %v918, %v915
    %v946 = vpack.c.b16 %v919, %v916
    %v947 = vpack.c.b16 %v923, %v920
    %v948 = vpack.c.b16 %v924, %v921
    %v949 = vpack.c.b16 %v925, %v922
    %974 = vmatprep.subr.bf16.mxu0 %v927
    %975 = vmatpush1.bf16.msra.mxu0 %v926
    %976 = vmatprep.subr.bf16.mxu0 %v930
    %977 = vmatpush1.bf16.msra.mxu0 %v929
    %978 = vmatprep.subr.bf16.mxu0 %v933
    %979 = vmatpush1.bf16.msra.mxu0 %v932
    %980 = vmatprep.subr.bf16.mxu0 %v936
    %981 = vmatpush1.bf16.msra.mxu0 %v935
    %982 = vmatprep.subr.bf16.mxu0 %v939
    %983 = vmatpush1.bf16.msra.mxu0 %v938
    %984 = vmatprep.subr.bf16.mxu0 %v942
    %985 = vmatpush1.bf16.msra.mxu0 %v941
    %986 = vmatprep.subr.bf16.mxu0 %v945
    %987 = vmatpush1.bf16.msra.mxu0 %v944
    %988 = vmatprep.subr.bf16.mxu0 %v948
    %989 = vmatpush1.bf16.msra.mxu0 %v947
    %990 = vmatprep.subr.bf16.mxu0 0
    %991 = vmatpush1.bf16.msra.mxu0 0
    %992 = vmatprep.subr.bf16.mxu0 0
    %993 = vmatpush1.bf16.msra.mxu0 0
    %994 = vmatprep.subr.bf16.mxu0 0
    %995 = vmatpush1.bf16.msra.mxu0 0
    %996 = vmatprep.subr.bf16.mxu0 0
    %997 = vmatpush1.bf16.msra.mxu0 0
    %998 = vmatprep.subr.bf16.mxu0 0
    %999 = vmatpush1.bf16.msra.mxu0 0
    %1000 = vmatprep.subr.bf16.mxu0 0
    %1001 = vmatpush1.bf16.msra.mxu0 0
    %1002 = vmatprep.subr.bf16.mxu0 0
    %1003 = vmatpush1.bf16.msra.mxu0 0
    %1004 = vmatprep.subr.bf16.mxu0 0
    %1005 = vmatpush1.bf16.msra.mxu0 0
    %1006 = vmatprep.mubr.bf16.mxu0 0
    %1007 = vmatmul.mubr.bf16.gmra.mrb[0].mxu0 %v845
    %v1008 = vpop.f32.mrb[0].mxu0
    %v1009 = vadd.f32 %v583, %v1008
    %v1010 = vpop.f32.mrb[0].mxu0
    %v1011 = vadd.f32 %v587, %v1010
    %v1012 = vpop.f32.mrb[0].mxu0
    %v1013 = vpop.f32.mrb[0].mxu0
    %1014 = vdwg.mxu0
    %1015 = vmatprep.subr.bf16.mxu0 0
    %1016 = vmatpush1.bf16.msra.mxu0 %v928
    %1017 = vmatprep.subr.bf16.mxu0 0
    %1018 = vmatpush1.bf16.msra.mxu0 %v931
    %1019 = vmatprep.subr.bf16.mxu0 0
    %1020 = vmatpush1.bf16.msra.mxu0 %v934
    %1021 = vmatprep.subr.bf16.mxu0 0
    %1022 = vmatpush1.bf16.msra.mxu0 %v937
    %1023 = vmatprep.subr.bf16.mxu0 0
    %1024 = vmatpush1.bf16.msra.mxu0 %v940
    %1025 = vmatprep.subr.bf16.mxu0 0
    %1026 = vmatpush1.bf16.msra.mxu0 %v943
    %1027 = vmatprep.subr.bf16.mxu0 0
    %1028 = vmatpush1.bf16.msra.mxu0 %v946
    %1029 = vmatprep.subr.bf16.mxu0 0
    %1030 = vmatpush1.bf16.msra.mxu0 %v949
    %1031 = vmatprep.subr.bf16.mxu0 0
    %1032 = vmatpush1.bf16.msra.mxu0 0
    %1033 = vmatprep.subr.bf16.mxu0 0
    %1034 = vmatpush1.bf16.msra.mxu0 0
    %1035 = vmatprep.subr.bf16.mxu0 0
    %1036 = vmatpush1.bf16.msra.mxu0 0
    %1037 = vmatprep.subr.bf16.mxu0 0
    %1038 = vmatpush1.bf16.msra.mxu0 0
    %1039 = vmatprep.subr.bf16.mxu0 0
    %1040 = vmatpush1.bf16.msra.mxu0 0
    %1041 = vmatprep.subr.bf16.mxu0 0
    %1042 = vmatpush1.bf16.msra.mxu0 0
    %1043 = vmatprep.subr.bf16.mxu0 0
    %1044 = vmatpush1.bf16.msra.mxu0 0
    %1045 = vmatprep.subr.bf16.mxu0 0
    %1046 = vmatpush1.bf16.msra.mxu0 0
    %1047 = vmatprep.mubr.bf16.mxu0 0
    %1048 = vmatmul.mubr.bf16.gmra.mrb[0].mxu0 %v845
    %v1049 = vpop.f32.mrb[0].mxu0
    %v1050 = vadd.f32 %v591, %v1049
    %v1051 = vpop.f32.mrb[0].mxu0
    %v1052 = vpop.f32.mrb[0].mxu0
    %v1053 = vpop.f32.mrb[0].mxu0
    %1054 = vdwg.mxu0
    %v1087 = vunpack.c.l.b16 %v529
    %v1088 = vunpack.c.h.b16 %v529
    %v1089 = vunpack.c.l.b16 %v530
    %v1090 = vunpack.c.l.b16 %v531
    %v1091 = vunpack.c.h.b16 %v531
    %v1092 = vunpack.c.l.b16 %v532
    %v1093 = vunpack.c.l.b16 %v533
    %v1094 = vunpack.c.h.b16 %v533
    %v1095 = vunpack.c.l.b16 %v534
    %v1096 = vunpack.c.l.b16 %v535
    %v1097 = vunpack.c.h.b16 %v535
    %v1098 = vunpack.c.l.b16 %v536
    %v1099 = vunpack.c.l.b16 %v537
    %v1100 = vunpack.c.h.b16 %v537
    %v1101 = vunpack.c.l.b16 %v538
    %v1102 = vunpack.c.l.b16 %v539
    %v1103 = vunpack.c.h.b16 %v539
    %v1104 = vunpack.c.l.b16 %v540
    %v1105 = vunpack.c.l.b16 %v541
    %v1106 = vunpack.c.h.b16 %v541
    %v1107 = vunpack.c.l.b16 %v542
    %v1108 = vunpack.c.l.b16 %v543
    %v1109 = vunpack.c.h.b16 %v543
    %v1110 = vunpack.c.l.b16 %v544
    %v1111 = vunpack.c.l.b16 %v545
    %v1112 = vunpack.c.h.b16 %v545
    %v1113 = vunpack.c.l.b16 %v546
    %v1114 = vunpack.c.l.b16 %v547
    %v1115 = vunpack.c.h.b16 %v547
    %v1116 = vunpack.c.l.b16 %v548
    %v1117 = vunpack.c.l.b16 %v549
    %v1118 = vunpack.c.h.b16 %v549
    %v1119 = vunpack.c.l.b16 %v550
    %v1120 = vunpack.c.l.b16 %v551
    %v1121 = vunpack.c.h.b16 %v551
    %v1122 = vunpack.c.l.b16 %v552
    %v1123 = vunpack.c.l.b16 %v553
    %v1124 = vunpack.c.h.b16 %v553
    %v1125 = vunpack.c.l.b16 %v554
    %v1126 = vunpack.c.l.b16 %v555
    %v1127 = vunpack.c.h.b16 %v555
    %v1128 = vunpack.c.l.b16 %v556
    %v1129 = vunpack.c.l.b16 %v557
    %v1130 = vunpack.c.h.b16 %v557
    %v1131 = vunpack.c.l.b16 %v558
    %v1132 = vunpack.c.l.b16 %v559
    %v1133 = vunpack.c.h.b16 %v559
    %v1134 = vunpack.c.l.b16 %v560
    %v1135 = vpack.c.b16 %v1090, %v1087
    %v1136 = vpack.c.b16 %v1091, %v1088
    %v1137 = vpack.c.b16 %v1092, %v1089
    %v1138 = vpack.c.b16 %v1096, %v1093
    %v1139 = vpack.c.b16 %v1097, %v1094
    %v1140 = vpack.c.b16 %v1098, %v1095
    %v1141 = vpack.c.b16 %v1102, %v1099
    %v1142 = vpack.c.b16 %v1103, %v1100
    %v1143 = vpack.c.b16 %v1104, %v1101
    %v1144 = vpack.c.b16 %v1108, %v1105
    %v1145 = vpack.c.b16 %v1109, %v1106
    %v1146 = vpack.c.b16 %v1110, %v1107
    %v1147 = vpack.c.b16 %v1114, %v1111
    %v1148 = vpack.c.b16 %v1115, %v1112
    %v1149 = vpack.c.b16 %v1116, %v1113
    %v1150 = vpack.c.b16 %v1120, %v1117
    %v1151 = vpack.c.b16 %v1121, %v1118
    %v1152 = vpack.c.b16 %v1122, %v1119
    %v1153 = vpack.c.b16 %v1126, %v1123
    %v1154 = vpack.c.b16 %v1127, %v1124
    %v1155 = vpack.c.b16 %v1128, %v1125
    %v1156 = vpack.c.b16 %v1132, %v1129
    %v1157 = vpack.c.b16 %v1133, %v1130
    %v1158 = vpack.c.b16 %v1134, %v1131
    %1183 = vmatprep.subr.bf16.mxu0 %v1136
    %1184 = vmatpush1.bf16.msra.mxu0 %v1135
    %1185 = vmatprep.subr.bf16.mxu0 %v1139
    %1186 = vmatpush1.bf16.msra.mxu0 %v1138
    %1187 = vmatprep.subr.bf16.mxu0 %v1142
    %1188 = vmatpush1.bf16.msra.mxu0 %v1141
    %1189 = vmatprep.subr.bf16.mxu0 %v1145
    %1190 = vmatpush1.bf16.msra.mxu0 %v1144
    %1191 = vmatprep.subr.bf16.mxu0 %v1148
    %1192 = vmatpush1.bf16.msra.mxu0 %v1147
    %1193 = vmatprep.subr.bf16.mxu0 %v1151
    %1194 = vmatpush1.bf16.msra.mxu0 %v1150
    %1195 = vmatprep.subr.bf16.mxu0 %v1154
    %1196 = vmatpush1.bf16.msra.mxu0 %v1153
    %1197 = vmatprep.subr.bf16.mxu0 %v1157
    %1198 = vmatpush1.bf16.msra.mxu0 %v1156
    %1199 = vmatprep.subr.bf16.mxu0 0
    %1200 = vmatpush1.bf16.msra.mxu0 0
    %1201 = vmatprep.subr.bf16.mxu0 0
    %1202 = vmatpush1.bf16.msra.mxu0 0
    %1203 = vmatprep.subr.bf16.mxu0 0
    %1204 = vmatpush1.bf16.msra.mxu0 0
    %1205 = vmatprep.subr.bf16.mxu0 0
    %1206 = vmatpush1.bf16.msra.mxu0 0
    %1207 = vmatprep.subr.bf16.mxu0 0
    %1208 = vmatpush1.bf16.msra.mxu0 0
    %1209 = vmatprep.subr.bf16.mxu0 0
    %1210 = vmatpush1.bf16.msra.mxu0 0
    %1211 = vmatprep.subr.bf16.mxu0 0
    %1212 = vmatpush1.bf16.msra.mxu0 0
    %1213 = vmatprep.subr.bf16.mxu0 0
    %1214 = vmatpush1.bf16.msra.mxu0 0
    %1215 = vmatprep.mubr.bf16.mxu0 0
    %1216 = vmatmul.mubr.bf16.gmra.mrb[0].mxu0 0
    %v1217 = vpop.f32.mrb[0].mxu0
    %v1218 = vadd.f32 %v600, %v1217
    %v1219 = vpop.f32.mrb[0].mxu0
    %v1220 = vadd.f32 %v604, %v1219
    %v1221 = vpop.f32.mrb[0].mxu0
    %v1222 = vpop.f32.mrb[0].mxu0
    %1223 = vdwg.mxu0
    %1224 = vmatprep.subr.bf16.mxu0 0
    %1225 = vmatpush1.bf16.msra.mxu0 %v1137
    %1226 = vmatprep.subr.bf16.mxu0 0
    %1227 = vmatpush1.bf16.msra.mxu0 %v1140
    %1228 = vmatprep.subr.bf16.mxu0 0
    %1229 = vmatpush1.bf16.msra.mxu0 %v1143
    %1230 = vmatprep.subr.bf16.mxu0 0
    %1231 = vmatpush1.bf16.msra.mxu0 %v1146
    %1232 = vmatprep.subr.bf16.mxu0 0
    %1233 = vmatpush1.bf16.msra.mxu0 %v1149
    %1234 = vmatprep.subr.bf16.mxu0 0
    %1235 = vmatpush1.bf16.msra.mxu0 %v1152
    %1236 = vmatprep.subr.bf16.mxu0 0
    %1237 = vmatpush1.bf16.msra.mxu0 %v1155
    %1238 = vmatprep.subr.bf16.mxu0 0
    %1239 = vmatpush1.bf16.msra.mxu0 %v1158
    %1240 = vmatprep.subr.bf16.mxu0 0
    %1241 = vmatpush1.bf16.msra.mxu0 0
    %1242 = vmatprep.subr.bf16.mxu0 0
    %1243 = vmatpush1.bf16.msra.mxu0 0
    %1244 = vmatprep.subr.bf16.mxu0 0
    %1245 = vmatpush1.bf16.msra.mxu0 0
    %1246 = vmatprep.subr.bf16.mxu0 0
    %1247 = vmatpush1.bf16.msra.mxu0 0
    %1248 = vmatprep.subr.bf16.mxu0 0
    %1249 = vmatpush1.bf16.msra.mxu0 0
    %1250 = vmatprep.subr.bf16.mxu0 0
    %1251 = vmatpush1.bf16.msra.mxu0 0
    %1252 = vmatprep.subr.bf16.mxu0 0
    %1253 = vmatpush1.bf16.msra.mxu0 0
    %1254 = vmatprep.subr.bf16.mxu0 0
    %1255 = vmatpush1.bf16.msra.mxu0 0
    %1256 = vmatprep.mubr.bf16.mxu0 0
    %1257 = vmatmul.mubr.bf16.gmra.mrb[0].mxu0 0
    %v1258 = vpop.f32.mrb[0].mxu0
    %v1259 = vadd.f32 %v608, %v1258
    %v1260 = vpop.f32.mrb[0].mxu0
    %v1261 = vpop.f32.mrb[0].mxu0
    %v1262 = vpop.f32.mrb[0].mxu0
    %1263 = vdwg.mxu0
    %v1264 = vadd.f32 %v1009, %v1218
    %v1265 = vadd.f32 %v1011, %v1220
    %v1266 = vxor.u32 %v1264, 2147483648
    %v1267 = vxor.u32 %v1265, 2147483648
    %v1268 = vmul.f32 %v1266, 1.442695
    %v1269 = vpow.pop %v1268
    %v1270 = vmul.f32 %v1267, 1.442695
    %v1271 = vpow.pop %v1270
    %v1272 = vadd.f32 %v1269, 1.0
    %v1273 = vadd.f32 %v1271, 1.0
    %v1274 = vrcp.pop %v1272
    %v1275 = vmul.f32 1.0, %v1274
    %v1276 = vrcp.pop %v1273
    %v1277 = vmul.f32 1.0, %v1276
    %v1278 = vmul.f32 %v1275, %v1259
    %v1279 = vadd.f32 %v1050, %v1278
    %v1280 = vtanh.pop %v1279
    %v1281 = vsub.f32 1.0, %v1277
    %v1282 = vmul.f32 %v1281, %v1280
    %v1283 = vmul.f32 %v1277, 0.0
    %v1284 = vadd.f32 %v1282, %v1283
    %1285 = vmatprep.subr.bf16.mxu0 %v693
    %1286 = vmatpush1.bf16.msra.mxu0 %v692
    %1287 = vmatprep.subr.bf16.mxu0 %v696
    %1288 = vmatpush1.bf16.msra.mxu0 %v695
    %1289 = vmatprep.subr.bf16.mxu0 %v699
    %1290 = vmatpush1.bf16.msra.mxu0 %v698
    %1291 = vmatprep.subr.bf16.mxu0 %v702
    %1292 = vmatpush1.bf16.msra.mxu0 %v701
    %1293 = vmatprep.subr.bf16.mxu0 %v705
    %1294 = vmatpush1.bf16.msra.mxu0 %v704
    %1295 = vmatprep.subr.bf16.mxu0 %v708
    %1296 = vmatpush1.bf16.msra.mxu0 %v707
    %1297 = vmatprep.subr.bf16.mxu0 %v711
    %1298 = vmatpush1.bf16.msra.mxu0 %v710
    %1299 = vmatprep.subr.bf16.mxu0 %v714
    %1300 = vmatpush1.bf16.msra.mxu0 %v713
    %1301 = vmatprep.subr.bf16.mxu0 0
    %1302 = vmatpush1.bf16.msra.mxu0 0
    %1303 = vmatprep.subr.bf16.mxu0 0
    %1304 = vmatpush1.bf16.msra.mxu0 0
    %1305 = vmatprep.subr.bf16.mxu0 0
    %1306 = vmatpush1.bf16.msra.mxu0 0
    %1307 = vmatprep.subr.bf16.mxu0 0
    %1308 = vmatpush1.bf16.msra.mxu0 0
    %1309 = vmatprep.subr.bf16.mxu0 0
    %1310 = vmatpush1.bf16.msra.mxu0 0
    %1311 = vmatprep.subr.bf16.mxu0 0
    %1312 = vmatpush1.bf16.msra.mxu0 0
    %1313 = vmatprep.subr.bf16.mxu0 0
    %1314 = vmatpush1.bf16.msra.mxu0 0
    %1315 = vmatprep.subr.bf16.mxu0 0
    %1316 = vmatpush1.bf16.msra.mxu0 0
    %1317 = vmatprep.mubr.bf16.mxu0 0
    %1318 = vmatmul.mubr.bf16.gmra.mrb[0].mxu0 %v845
    %v1319 = vpop.f32.mrb[0].mxu0
    %v1320 = vadd.f32 %v566, %v1319
    %v1321 = vpop.f32.mrb[0].mxu0
    %v1322 = vadd.f32 %v570, %v1321
    %v1323 = vpop.f32.mrb[0].mxu0
    %v1324 = vpop.f32.mrb[0].mxu0
    %1325 = vdwg.mxu0
    %1326 = vmatprep.subr.bf16.mxu0 0
    %1327 = vmatpush1.bf16.msra.mxu0 %v694
    %1328 = vmatprep.subr.bf16.mxu0 0
    %1329 = vmatpush1.bf16.msra.mxu0 %v697
    %1330 = vmatprep.subr.bf16.mxu0 0
    %1331 = vmatpush1.bf16.msra.mxu0 %v700
    %1332 = vmatprep.subr.bf16.mxu0 0
    %1333 = vmatpush1.bf16.msra.mxu0 %v703
    %1334 = vmatprep.subr.bf16.mxu0 0
    %1335 = vmatpush1.bf16.msra.mxu0 %v706
    %1336 = vmatprep.subr.bf16.mxu0 0
    %1337 = vmatpush1.bf16.msra.mxu0 %v709
    %1338 = vmatprep.subr.bf16.mxu0 0
    %1339 = vmatpush1.bf16.msra.mxu0 %v712
    %1340 = vmatprep.subr.bf16.mxu0 0
    %1341 = vmatpush1.bf16.msra.mxu0 %v715
    %1342 = vmatprep.subr.bf16.mxu0 0
    %1343 = vmatpush1.bf16.msra.mxu0 0
    %1344 = vmatprep.subr.bf16.mxu0 0
    %1345 = vmatpush1.bf16.msra.mxu0 0
    %1346 = vmatprep.subr.bf16.mxu0 0
    %1347 = vmatpush1.bf16.msra.mxu0 0
    %1348 = vmatprep.subr.bf16.mxu0 0
    %1349 = vmatpush1.bf16.msra.mxu0 0
    %1350 = vmatprep.subr.bf16.mxu0 0
    %1351 = vmatpush1.bf16.msra.mxu0 0
    %1352 = vmatprep.subr.bf16.mxu0 0
    %1353 = vmatpush1.bf16.msra.mxu0 0
    %1354 = vmatprep.subr.bf16.mxu0 0
    %1355 = vmatpush1.bf16.msra.mxu0 0
    %1356 = vmatprep.subr.bf16.mxu0 0
    %1357 = vmatpush1.bf16.msra.mxu0 0
    %1358 = vmatprep.mubr.bf16.mxu0 0
    %1359 = vmatmul.mubr.bf16.gmra.mrb[0].mxu0 %v845
    %v1360 = vpop.f32.mrb[0].mxu0
    %v1361 = vadd.f32 %v574, %v1360
    %v1362 = vpop.f32.mrb[0].mxu0
    %v1363 = vpop.f32.mrb[0].mxu0
    %v1364 = vpop.f32.mrb[0].mxu0
    %1365 = vdwg.mxu0
    %s1366 = scalar_lea.vmem [#allocation2], 24
    %v1367 = vld [vmem:[%s1366] sm:$0xff]
    %v1368 = vld [vmem:[%s1366 + $0x8] sm:$0xff]
    %v1369 = vld [vmem:[%s1366 + $0x10] sm:$0xff]
    %v1370 = vadd.f32 %v1367, %v1320
    %v1371 = vadd.f32 %v1368, %v1322
    %v1372 = vxor.u32 %v1370, 2147483648
    %v1373 = vxor.u32 %v1371, 2147483648
    %v1374 = vmul.f32 %v1372, 1.442695
    %v1375 = vpow.pop %v1374
    %v1376 = vmul.f32 %v1373, 1.442695
    %v1377 = vpow.pop %v1376
    %v1378 = vadd.f32 %v1375, 1.0
    %v1379 = vadd.f32 %v1377, 1.0
    %v1380 = vrcp.pop %v1378
    %v1381 = vmul.f32 1.0, %v1380
    %v1382 = vrcp.pop %v1379
    %v1383 = vmul.f32 1.0, %v1382
    %v1384 = vmul.f32 %v1381, %v1361
    %v1385 = vadd.f32 %v1369, %v1384
    %v1386 = vtanh.pop %v1385
    %v1387 = vsub.f32 1.0, %v1383
    %v1388 = vmul.f32 %v1387, %v1386
    %v1389 = vmul.f32 %v1383, %v844
    %v1390 = vadd.f32 %v1388, %v1389
    %v1391 = vpack.c.bf16 %v1390, %v1390
    %1392 = vmatprep.subr.bf16.mxu0 %v927
    %1393 = vmatpush1.bf16.msra.mxu0 %v926
    %1394 = vmatprep.subr.bf16.mxu0 %v930
    %1395 = vmatpush1.bf16.msra.mxu0 %v929
    %1396 = vmatprep.subr.bf16.mxu0 %v933
    %1397 = vmatpush1.bf16.msra.mxu0 %v932
    %1398 = vmatprep.subr.bf16.mxu0 %v936
    %1399 = vmatpush1.bf16.msra.mxu0 %v935
    %1400 = vmatprep.subr.bf16.mxu0 %v939
    %1401 = vmatpush1.bf16.msra.mxu0 %v938
    %1402 = vmatprep.subr.bf16.mxu0 %v942
    %1403 = vmatpush1.bf16.msra.mxu0 %v941
    %1404 = vmatprep.subr.bf16.mxu0 %v945
    %1405 = vmatpush1.bf16.msra.mxu0 %v944
    %1406 = vmatprep.subr.bf16.mxu0 %v948
    %1407 = vmatpush1.bf16.msra.mxu0 %v947
    %1408 = vmatprep.subr.bf16.mxu0 0
    %1409 = vmatpush1.bf16.msra.mxu0 0
    %1410 = vmatprep.subr.bf16.mxu0 0
    %1411 = vmatpush1.bf16.msra.mxu0 0
    %1412 = vmatprep.subr.bf16.mxu0 0
    %1413 = vmatpush1.bf16.msra.mxu0 0
    %1414 = vmatprep.subr.bf16.mxu0 0
    %1415 = vmatpush1.bf16.msra.mxu0 0
    %1416 = vmatprep.subr.bf16.mxu0 0
    %1417 = vmatpush1.bf16.msra.mxu0 0
    %1418 = vmatprep.subr.bf16.mxu0 0
    %1419 = vmatpush1.bf16.msra.mxu0 0
    %1420 = vmatprep.subr.bf16.mxu0 0
    %1421 = vmatpush1.bf16.msra.mxu0 0
    %1422 = vmatprep.subr.bf16.mxu0 0
    %1423 = vmatpush1.bf16.msra.mxu0 0
    %1424 = vmatprep.mubr.bf16.mxu0 0
    %1425 = vmatmul.mubr.bf16.gmra.mrb[0].mxu0 %v1391
    %v1426 = vpop.f32.mrb[0].mxu0
    %v1427 = vadd.f32 %v583, %v1426
    %v1428 = vpop.f32.mrb[0].mxu0
    %v1429 = vadd.f32 %v587, %v1428
    %v1430 = vpop.f32.mrb[0].mxu0
    %v1431 = vpop.f32.mrb[0].mxu0
    %1432 = vdwg.mxu0
    %1433 = vmatprep.subr.bf16.mxu0 0
    %1434 = vmatpush1.bf16.msra.mxu0 %v928
    %1435 = vmatprep.subr.bf16.mxu0 0
    %1436 = vmatpush1.bf16.msra.mxu0 %v931
    %1437 = vmatprep.subr.bf16.mxu0 0
    %1438 = vmatpush1.bf16.msra.mxu0 %v934
    %1439 = vmatprep.subr.bf16.mxu0 0
    %1440 = vmatpush1.bf16.msra.mxu0 %v937
    %1441 = vmatprep.subr.bf16.mxu0 0
    %1442 = vmatpush1.bf16.msra.mxu0 %v940
    %1443 = vmatprep.subr.bf16.mxu0 0
    %1444 = vmatpush1.bf16.msra.mxu0 %v943
    %1445 = vmatprep.subr.bf16.mxu0 0
    %1446 = vmatpush1.bf16.msra.mxu0 %v946
    %1447 = vmatprep.subr.bf16.mxu0 0
    %1448 = vmatpush1.bf16.msra.mxu0 %v949
    %1449 = vmatprep.subr.bf16.mxu0 0
    %1450 = vmatpush1.bf16.msra.mxu0 0
    %1451 = vmatprep.subr.bf16.mxu0 0
    %1452 = vmatpush1.bf16.msra.mxu0 0
    %1453 = vmatprep.subr.bf16.mxu0 0
    %1454 = vmatpush1.bf16.msra.mxu0 0
    %1455 = vmatprep.subr.bf16.mxu0 0
    %1456 = vmatpush1.bf16.msra.mxu0 0
    %1457 = vmatprep.subr.bf16.mxu0 0
    %1458 = vmatpush1.bf16.msra.mxu0 0
    %1459 = vmatprep.subr.bf16.mxu0 0
    %1460 = vmatpush1.bf16.msra.mxu0 0
    %1461 = vmatprep.subr.bf16.mxu0 0
    %1462 = vmatpush1.bf16.msra.mxu0 0
    %1463 = vmatprep.subr.bf16.mxu0 0
    %1464 = vmatpush1.bf16.msra.mxu0 0
    %1465 = vmatprep.mubr.bf16.mxu0 0
    %1466 = vmatmul.mubr.bf16.gmra.mrb[0].mxu0 %v1391
    %v1467 = vpop.f32.mrb[0].mxu0
    %v1468 = vadd.f32 %v591, %v1467
    %v1469 = vpop.f32.mrb[0].mxu0
    %v1470 = vpop.f32.mrb[0].mxu0
    %v1471 = vpop.f32.mrb[0].mxu0
    %1472 = vdwg.mxu0
    %v1473 = vpack.c.bf16 %v1284, %v1284
    %1474 = vmatprep.subr.bf16.mxu0 %v1136
    %1475 = vmatpush1.bf16.msra.mxu0 %v1135
    %1476 = vmatprep.subr.bf16.mxu0 %v1139
    %1477 = vmatpush1.bf16.msra.mxu0 %v1138
    %1478 = vmatprep.subr.bf16.mxu0 %v1142
    %1479 = vmatpush1.bf16.msra.mxu0 %v1141
    %1480 = vmatprep.subr.bf16.mxu0 %v1145
    %1481 = vmatpush1.bf16.msra.mxu0 %v1144
    %1482 = vmatprep.subr.bf16.mxu0 %v1148
    %1483 = vmatpush1.bf16.msra.mxu0 %v1147
    %1484 = vmatprep.subr.bf16.mxu0 %v1151
    %1485 = vmatpush1.bf16.msra.mxu0 %v1150
    %1486 = vmatprep.subr.bf16.mxu0 %v1154
    %1487 = vmatpush1.bf16.msra.mxu0 %v1153
    %1488 = vmatprep.subr.bf16.mxu0 %v1157
    %1489 = vmatpush1.bf16.msra.mxu0 %v1156
    %1490 = vmatprep.subr.bf16.mxu0 0
    %1491 = vmatpush1.bf16.msra.mxu0 0
    %1492 = vmatprep.subr.bf16.mxu0 0
    %1493 = vmatpush1.bf16.msra.mxu0 0
    %1494 = vmatprep.subr.bf16.mxu0 0
    %1495 = vmatpush1.bf16.msra.mxu0 0
    %1496 = vmatprep.subr.bf16.mxu0 0
    %1497 = vmatpush1.bf16.msra.mxu0 0
    %1498 = vmatprep.subr.bf16.mxu0 0
    %1499 = vmatpush1.bf16.msra.mxu0 0
    %1500 = vmatprep.subr.bf16.mxu0 0
    %1501 = vmatpush1.bf16.msra.mxu0 0
    %1502 = vmatprep.subr.bf16.mxu0 0
    %1503 = vmatpush1.bf16.msra.mxu0 0
    %1504 = vmatprep.subr.bf16.mxu0 0
    %1505 = vmatpush1.bf16.msra.mxu0 0
    %1506 = vmatprep.mubr.bf16.mxu0 0
    %1507 = vmatmul.mubr.bf16.gmra.mrb[0].mxu0 %v1473
    %v1508 = vpop.f32.mrb[0].mxu0
    %v1509 = vadd.f32 %v600, %v1508
    %v1510 = vpop.f32.mrb[0].mxu0
    %v1511 = vadd.f32 %v604, %v1510
    %v1512 = vpop.f32.mrb[0].mxu0
    %v1513 = vpop.f32.mrb[0].mxu0
    %1514 = vdwg.mxu0
    %1515 = vmatprep.subr.bf16.mxu0 0
    %1516 = vmatpush1.bf16.msra.mxu0 %v1137
    %1517 = vmatprep.subr.bf16.mxu0 0
    %1518 = vmatpush1.bf16.msra.mxu0 %v1140
    %1519 = vmatprep.subr.bf16.mxu0 0
    %1520 = vmatpush1.bf16.msra.mxu0 %v1143
    %1521 = vmatprep.subr.bf16.mxu0 0
    %1522 = vmatpush1.bf16.msra.mxu0 %v1146
    %1523 = vmatprep.subr.bf16.mxu0 0
    %1524 = vmatpush1.bf16.msra.mxu0 %v1149
    %1525 = vmatprep.subr.bf16.mxu0 0
    %1526 = vmatpush1.bf16.msra.mxu0 %v1152
    %1527 = vmatprep.subr.bf16.mxu0 0
    %1528 = vmatpush1.bf16.msra.mxu0 %v1155
    %1529 = vmatprep.subr.bf16.mxu0 0
    %1530 = vmatpush1.bf16.msra.mxu0 %v1158
    %1531 = vmatprep.subr.bf16.mxu0 0
    %1532 = vmatpush1.bf16.msra.mxu0 0
    %1533 = vmatprep.subr.bf16.mxu0 0
    %1534 = vmatpush1.bf16.msra.mxu0 0
    %1535 = vmatprep.subr.bf16.mxu0 0
    %1536 = vmatpush1.bf16.msra.mxu0 0
    %1537 = vmatprep.subr.bf16.mxu0 0
    %1538 = vmatpush1.bf16.msra.mxu0 0
    %1539 = vmatprep.subr.bf16.mxu0 0
    %1540 = vmatpush1.bf16.msra.mxu0 0
    %1541 = vmatprep.subr.bf16.mxu0 0
    %1542 = vmatpush1.bf16.msra.mxu0 0
    %1543 = vmatprep.subr.bf16.mxu0 0
    %1544 = vmatpush1.bf16.msra.mxu0 0
    %1545 = vmatprep.subr.bf16.mxu0 0
    %1546 = vmatpush1.bf16.msra.mxu0 0
    %1547 = vmatprep.mubr.bf16.mxu0 0
    %1548 = vmatmul.mubr.bf16.gmra.mrb[0].mxu0 %v1473
    %v1549 = vpop.f32.mrb[0].mxu0
    %v1550 = vadd.f32 %v608, %v1549
    %v1551 = vpop.f32.mrb[0].mxu0
    %v1552 = vpop.f32.mrb[0].mxu0
    %v1553 = vpop.f32.mrb[0].mxu0
    %1554 = vdwg.mxu0
    %v1555 = vadd.f32 %v1427, %v1509
    %v1556 = vadd.f32 %v1429, %v1511
    %v1557 = vxor.u32 %v1555, 2147483648
    %v1558 = vxor.u32 %v1556, 2147483648
    %v1559 = vmul.f32 %v1557, 1.442695
    %v1560 = vpow.pop %v1559
    %v1561 = vmul.f32 %v1558, 1.442695
    %v1562 = vpow.pop %v1561
    %v1563 = vadd.f32 %v1560, 1.0
    %v1564 = vadd.f32 %v1562, 1.0
    %v1565 = vrcp.pop %v1563
    %v1566 = vmul.f32 1.0, %v1565
    %v1567 = vrcp.pop %v1564
    %v1568 = vmul.f32 1.0, %v1567
    %v1569 = vmul.f32 %v1566, %v1550
    %v1570 = vadd.f32 %v1468, %v1569
    %v1571 = vtanh.pop %v1570
    %v1572 = vsub.f32 1.0, %v1568
    %v1573 = vmul.f32 %v1572, %v1571
    %v1574 = vmul.f32 %v1568, %v1284
    %v1575 = vadd.f32 %v1573, %v1574
    %1576 = vmatprep.subr.bf16.mxu0 %v693
    %1577 = vmatpush1.bf16.msra.mxu0 %v692
    %1578 = vmatprep.subr.bf16.mxu0 %v696
    %1579 = vmatpush1.bf16.msra.mxu0 %v695
    %1580 = vmatprep.subr.bf16.mxu0 %v699
    %1581 = vmatpush1.bf16.msra.mxu0 %v698
    %1582 = vmatprep.subr.bf16.mxu0 %v702
    %1583 = vmatpush1.bf16.msra.mxu0 %v701
    %1584 = vmatprep.subr.bf16.mxu0 %v705
    %1585 = vmatpush1.bf16.msra.mxu0 %v704
    %1586 = vmatprep.subr.bf16.mxu0 %v708
    %1587 = vmatpush1.bf16.msra.mxu0 %v707
    %1588 = vmatprep.subr.bf16.mxu0 %v711
    %1589 = vmatpush1.bf16.msra.mxu0 %v710
    %1590 = vmatprep.subr.bf16.mxu0 %v714
    %1591 = vmatpush1.bf16.msra.mxu0 %v713
    %1592 = vmatprep.subr.bf16.mxu0 0
    %1593 = vmatpush1.bf16.msra.mxu0 0
    %1594 = vmatprep.subr.bf16.mxu0 0
    %1595 = vmatpush1.bf16.msra.mxu0 0
    %1596 = vmatprep.subr.bf16.mxu0 0
    %1597 = vmatpush1.bf16.msra.mxu0 0
    %1598 = vmatprep.subr.bf16.mxu0 0
    %1599 = vmatpush1.bf16.msra.mxu0 0
    %1600 = vmatprep.subr.bf16.mxu0 0
    %1601 = vmatpush1.bf16.msra.mxu0 0
    %1602 = vmatprep.subr.bf16.mxu0 0
    %1603 = vmatpush1.bf16.msra.mxu0 0
    %1604 = vmatprep.subr.bf16.mxu0 0
    %1605 = vmatpush1.bf16.msra.mxu0 0
    %1606 = vmatprep.subr.bf16.mxu0 0
    %1607 = vmatpush1.bf16.msra.mxu0 0
    %1608 = vmatprep.mubr.bf16.mxu0 0
    %1609 = vmatmul.mubr.bf16.gmra.mrb[0].mxu0 %v1391
    %v1610 = vpop.f32.mrb[0].mxu0
    %v1611 = vadd.f32 %v566, %v1610
    %v1612 = vpop.f32.mrb[0].mxu0
    %v1613 = vadd.f32 %v570, %v1612
    %v1614 = vpop.f32.mrb[0].mxu0
    %v1615 = vpop.f32.mrb[0].mxu0
    %1616 = vdwg.mxu0
    %1617 = vmatprep.subr.bf16.mxu0 0
    %1618 = vmatpush1.bf16.msra.mxu0 %v694
    %1619 = vmatprep.subr.bf16.mxu0 0
    %1620 = vmatpush1.bf16.msra.mxu0 %v697
    %1621 = vmatprep.subr.bf16.mxu0 0
    %1622 = vmatpush1.bf16.msra.mxu0 %v700
    %1623 = vmatprep.subr.bf16.mxu0 0
    %1624 = vmatpush1.bf16.msra.mxu0 %v703
    %1625 = vmatprep.subr.bf16.mxu0 0
    %1626 = vmatpush1.bf16.msra.mxu0 %v706
    %1627 = vmatprep.subr.bf16.mxu0 0
    %1628 = vmatpush1.bf16.msra.mxu0 %v709
    %1629 = vmatprep.subr.bf16.mxu0 0
    %1630 = vmatpush1.bf16.msra.mxu0 %v712
    %1631 = vmatprep.subr.bf16.mxu0 0
    %1632 = vmatpush1.bf16.msra.mxu0 %v715
    %1633 = vmatprep.subr.bf16.mxu0 0
    %1634 = vmatpush1.bf16.msra.mxu0 0
    %1635 = vmatprep.subr.bf16.mxu0 0
    %1636 = vmatpush1.bf16.msra.mxu0 0
    %1637 = vmatprep.subr.bf16.mxu0 0
    %1638 = vmatpush1.bf16.msra.mxu0 0
    %1639 = vmatprep.subr.bf16.mxu0 0
    %1640 = vmatpush1.bf16.msra.mxu0 0
    %1641 = vmatprep.subr.bf16.mxu0 0
    %1642 = vmatpush1.bf16.msra.mxu0 0
    %1643 = vmatprep.subr.bf16.mxu0 0
    %1644 = vmatpush1.bf16.msra.mxu0 0
    %1645 = vmatprep.subr.bf16.mxu0 0
    %1646 = vmatpush1.bf16.msra.mxu0 0
    %1647 = vmatprep.subr.bf16.mxu0 0
    %1648 = vmatpush1.bf16.msra.mxu0 0
    %1649 = vmatprep.mubr.bf16.mxu0 0
    %1650 = vmatmul.mubr.bf16.gmra.mrb[0].mxu0 %v1391
    %v1651 = vpop.f32.mrb[0].mxu0
    %v1652 = vadd.f32 %v574, %v1651
    %v1653 = vpop.f32.mrb[0].mxu0
    %v1654 = vpop.f32.mrb[0].mxu0
    %v1655 = vpop.f32.mrb[0].mxu0
    %1656 = vdwg.mxu0
    %s1657 = scalar_lea.vmem [#allocation2], 48
    %v1658 = vld [vmem:[%s1657] sm:$0xff]
    %v1659 = vld [vmem:[%s1657 + $0x8] sm:$0xff]
    %v1660 = vld [vmem:[%s1657 + $0x10] sm:$0xff]
    %v1661 = vadd.f32 %v1658, %v1611
    %v1662 = vadd.f32 %v1659, %v1613
    %v1663 = vxor.u32 %v1661, 2147483648
    %v1664 = vxor.u32 %v1662, 2147483648
    %v1665 = vmul.f32 %v1663, 1.442695
    %v1666 = vpow.pop %v1665
    %v1667 = vmul.f32 %v1664, 1.442695
    %v1668 = vpow.pop %v1667
    %v1669 = vadd.f32 %v1666, 1.0
    %v1670 = vadd.f32 %v1668, 1.0
    %v1671 = vrcp.pop %v1669
    %v1672 = vmul.f32 1.0, %v1671
    %v1673 = vrcp.pop %v1670
    %v1674 = vmul.f32 1.0, %v1673
    %v1675 = vmul.f32 %v1672, %v1652
    %v1676 = vadd.f32 %v1660, %v1675
    %v1677 = vtanh.pop %v1676
    %v1678 = vsub.f32 1.0, %v1674
    %v1679 = vmul.f32 %v1678, %v1677
    %v1680 = vmul.f32 %v1674, %v1390
    %v1681 = vadd.f32 %v1679, %v1680
    %v1682 = vpack.c.bf16 %v1681, %v1681
    %1683 = vmatprep.subr.bf16.mxu0 %v927
    %1684 = vmatpush1.bf16.msra.mxu0 %v926
    %1685 = vmatprep.subr.bf16.mxu0 %v930
    %1686 = vmatpush1.bf16.msra.mxu0 %v929
    %1687 = vmatprep.subr.bf16.mxu0 %v933
    %1688 = vmatpush1.bf16.msra.mxu0 %v932
    %1689 = vmatprep.subr.bf16.mxu0 %v936
    %1690 = vmatpush1.bf16.msra.mxu0 %v935
    %1691 = vmatprep.subr.bf16.mxu0 %v939
    %1692 = vmatpush1.bf16.msra.mxu0 %v938
    %1693 = vmatprep.subr.bf16.mxu0 %v942
    %1694 = vmatpush1.bf16.msra.mxu0 %v941
    %1695 = vmatprep.subr.bf16.mxu0 %v945
    %1696 = vmatpush1.bf16.msra.mxu0 %v944
    %1697 = vmatprep.subr.bf16.mxu0 %v948
    %1698 = vmatpush1.bf16.msra.mxu0 %v947
    %1699 = vmatprep.subr.bf16.mxu0 0
    %1700 = vmatpush1.bf16.msra.mxu0 0
    %1701 = vmatprep.subr.bf16.mxu0 0
    %1702 = vmatpush1.bf16.msra.mxu0 0
    %1703 = vmatprep.subr.bf16.mxu0 0
    %1704 = vmatpush1.bf16.msra.mxu0 0
    %1705 = vmatprep.subr.bf16.mxu0 0
    %1706 = vmatpush1.bf16.msra.mxu0 0
    %1707 = vmatprep.subr.bf16.mxu0 0
    %1708 = vmatpush1.bf16.msra.mxu0 0
    %1709 = vmatprep.subr.bf16.mxu0 0
    %1710 = vmatpush1.bf16.msra.mxu0 0
    %1711 = vmatprep.subr.bf16.mxu0 0
    %1712 = vmatpush1.bf16.msra.mxu0 0
    %1713 = vmatprep.subr.bf16.mxu0 0
    %1714 = vmatpush1.bf16.msra.mxu0 0
    %1715 = vmatprep.mubr.bf16.mxu0 0
    %1716 = vmatmul.mubr.bf16.gmra.mrb[0].mxu0 %v1682
    %v1717 = vpop.f32.mrb[0].mxu0
    %v1718 = vadd.f32 %v583, %v1717
    %v1719 = vpop.f32.mrb[0].mxu0
    %v1720 = vadd.f32 %v587, %v1719
    %v1721 = vpop.f32.mrb[0].mxu0
    %v1722 = vpop.f32.mrb[0].mxu0
    %1723 = vdwg.mxu0
    %1724 = vmatprep.subr.bf16.mxu0 0
    %1725 = vmatpush1.bf16.msra.mxu0 %v928
    %1726 = vmatprep.subr.bf16.mxu0 0
    %1727 = vmatpush1.bf16.msra.mxu0 %v931
    %1728 = vmatprep.subr.bf16.mxu0 0
    %1729 = vmatpush1.bf16.msra.mxu0 %v934
    %1730 = vmatprep.subr.bf16.mxu0 0
    %1731 = vmatpush1.bf16.msra.mxu0 %v937
    %1732 = vmatprep.subr.bf16.mxu0 0
    %1733 = vmatpush1.bf16.msra.mxu0 %v940
    %1734 = vmatprep.subr.bf16.mxu0 0
    %1735 = vmatpush1.bf16.msra.mxu0 %v943
    %1736 = vmatprep.subr.bf16.mxu0 0
    %1737 = vmatpush1.bf16.msra.mxu0 %v946
    %1738 = vmatprep.subr.bf16.mxu0 0
    %1739 = vmatpush1.bf16.msra.mxu0 %v949
    %1740 = vmatprep.subr.bf16.mxu0 0
    %1741 = vmatpush1.bf16.msra.mxu0 0
    %1742 = vmatprep.subr.bf16.mxu0 0
    %1743 = vmatpush1.bf16.msra.mxu0 0
    %1744 = vmatprep.subr.bf16.mxu0 0
    %1745 = vmatpush1.bf16.msra.mxu0 0
    %1746 = vmatprep.subr.bf16.mxu0 0
    %1747 = vmatpush1.bf16.msra.mxu0 0
    %1748 = vmatprep.subr.bf16.mxu0 0
    %1749 = vmatpush1.bf16.msra.mxu0 0
    %1750 = vmatprep.subr.bf16.mxu0 0
    %1751 = vmatpush1.bf16.msra.mxu0 0
    %1752 = vmatprep.subr.bf16.mxu0 0
    %1753 = vmatpush1.bf16.msra.mxu0 0
    %1754 = vmatprep.subr.bf16.mxu0 0
    %1755 = vmatpush1.bf16.msra.mxu0 0
    %1756 = vmatprep.mubr.bf16.mxu0 0
    %1757 = vmatmul.mubr.bf16.gmra.mrb[0].mxu0 %v1682
    %v1758 = vpop.f32.mrb[0].mxu0
    %v1759 = vadd.f32 %v591, %v1758
    %v1760 = vpop.f32.mrb[0].mxu0
    %v1761 = vpop.f32.mrb[0].mxu0
    %v1762 = vpop.f32.mrb[0].mxu0
    %1763 = vdwg.mxu0
    %v1764 = vpack.c.bf16 %v1575, %v1575
    %1765 = vmatprep.subr.bf16.mxu0 %v1136
    %1766 = vmatpush1.bf16.msra.mxu0 %v1135
    %1767 = vmatprep.subr.bf16.mxu0 %v1139
    %1768 = vmatpush1.bf16.msra.mxu0 %v1138
    %1769 = vmatprep.subr.bf16.mxu0 %v1142
    %1770 = vmatpush1.bf16.msra.mxu0 %v1141
    %1771 = vmatprep.subr.bf16.mxu0 %v1145
    %1772 = vmatpush1.bf16.msra.mxu0 %v1144
    %1773 = vmatprep.subr.bf16.mxu0 %v1148
    %1774 = vmatpush1.bf16.msra.mxu0 %v1147
    %1775 = vmatprep.subr.bf16.mxu0 %v1151
    %1776 = vmatpush1.bf16.msra.mxu0 %v1150
    %1777 = vmatprep.subr.bf16.mxu0 %v1154
    %1778 = vmatpush1.bf16.msra.mxu0 %v1153
    %1779 = vmatprep.subr.bf16.mxu0 %v1157
    %1780 = vmatpush1.bf16.msra.mxu0 %v1156
    %1781 = vmatprep.subr.bf16.mxu0 0
    %1782 = vmatpush1.bf16.msra.mxu0 0
    %1783 = vmatprep.subr.bf16.mxu0 0
    %1784 = vmatpush1.bf16.msra.mxu0 0
    %1785 = vmatprep.subr.bf16.mxu0 0
    %1786 = vmatpush1.bf16.msra.mxu0 0
    %1787 = vmatprep.subr.bf16.mxu0 0
    %1788 = vmatpush1.bf16.msra.mxu0 0
    %1789 = vmatprep.subr.bf16.mxu0 0
    %1790 = vmatpush1.bf16.msra.mxu0 0
    %1791 = vmatprep.subr.bf16.mxu0 0
    %1792 = vmatpush1.bf16.msra.mxu0 0
    %1793 = vmatprep.subr.bf16.mxu0 0
    %1794 = vmatpush1.bf16.msra.mxu0 0
    %1795 = vmatprep.subr.bf16.mxu0 0
    %1796 = vmatpush1.bf16.msra.mxu0 0
    %1797 = vmatprep.mubr.bf16.mxu0 0
    %1798 = vmatmul.mubr.bf16.gmra.mrb[0].mxu0 %v1764
    %v1799 = vpop.f32.mrb[0].mxu0
    %v1800 = vadd.f32 %v600, %v1799
    %v1801 = vpop.f32.mrb[0].mxu0
    %v1802 = vadd.f32 %v604, %v1801
    %v1803 = vpop.f32.mrb[0].mxu0
    %v1804 = vpop.f32.mrb[0].mxu0
    %1805 = vdwg.mxu0
    %1806 = vmatprep.subr.bf16.mxu0 0
    %1807 = vmatpush1.bf16.msra.mxu0 %v1137
    %1808 = vmatprep.subr.bf16.mxu0 0
    %1809 = vmatpush1.bf16.msra.mxu0 %v1140
    %1810 = vmatprep.subr.bf16.mxu0 0
    %1811 = vmatpush1.bf16.msra.mxu0 %v1143
    %1812 = vmatprep.subr.bf16.mxu0 0
    %1813 = vmatpush1.bf16.msra.mxu0 %v1146
    %1814 = vmatprep.subr.bf16.mxu0 0
    %1815 = vmatpush1.bf16.msra.mxu0 %v1149
    %1816 = vmatprep.subr.bf16.mxu0 0
    %1817 = vmatpush1.bf16.msra.mxu0 %v1152
    %1818 = vmatprep.subr.bf16.mxu0 0
    %1819 = vmatpush1.bf16.msra.mxu0 %v1155
    %1820 = vmatprep.subr.bf16.mxu0 0
    %1821 = vmatpush1.bf16.msra.mxu0 %v1158
    %1822 = vmatprep.subr.bf16.mxu0 0
    %1823 = vmatpush1.bf16.msra.mxu0 0
    %1824 = vmatprep.subr.bf16.mxu0 0
    %1825 = vmatpush1.bf16.msra.mxu0 0
    %1826 = vmatprep.subr.bf16.mxu0 0
    %1827 = vmatpush1.bf16.msra.mxu0 0
    %1828 = vmatprep.subr.bf16.mxu0 0
    %1829 = vmatpush1.bf16.msra.mxu0 0
    %1830 = vmatprep.subr.bf16.mxu0 0
    %1831 = vmatpush1.bf16.msra.mxu0 0
    %1832 = vmatprep.subr.bf16.mxu0 0
    %1833 = vmatpush1.bf16.msra.mxu0 0
    %1834 = vmatprep.subr.bf16.mxu0 0
    %1835 = vmatpush1.bf16.msra.mxu0 0
    %1836 = vmatprep.subr.bf16.mxu0 0
    %1837 = vmatpush1.bf16.msra.mxu0 0
    %1838 = vmatprep.mubr.bf16.mxu0 0
    %1839 = vmatmul.mubr.bf16.gmra.mrb[0].mxu0 %v1764
    %v1840 = vpop.f32.mrb[0].mxu0
    %v1841 = vadd.f32 %v608, %v1840
    %v1842 = vpop.f32.mrb[0].mxu0
    %v1843 = vpop.f32.mrb[0].mxu0
    %v1844 = vpop.f32.mrb[0].mxu0
    %1845 = vdwg.mxu0
    %v1846 = vadd.f32 %v1718, %v1800
    %v1847 = vadd.f32 %v1720, %v1802
    %v1848 = vxor.u32 %v1846, 2147483648
    %v1849 = vxor.u32 %v1847, 2147483648
    %v1850 = vmul.f32 %v1848, 1.442695
    %v1851 = vpow.pop %v1850
    %v1852 = vmul.f32 %v1849, 1.442695
    %v1853 = vpow.pop %v1852
    %v1854 = vadd.f32 %v1851, 1.0
    %v1855 = vadd.f32 %v1853, 1.0
    %v1856 = vrcp.pop %v1854
    %v1857 = vmul.f32 1.0, %v1856
    %v1858 = vrcp.pop %v1855
    %v1859 = vmul.f32 1.0, %v1858
    %v1860 = vmul.f32 %v1857, %v1841
    %v1861 = vadd.f32 %v1759, %v1860
    %v1862 = vtanh.pop %v1861
    %v1863 = vsub.f32 1.0, %v1859
    %v1864 = vmul.f32 %v1863, %v1862
    %v1865 = vmul.f32 %v1859, %v1575
    %v1866 = vadd.f32 %v1864, %v1865
    %1867 = vmatprep.subr.bf16.mxu0 %v693
    %1868 = vmatpush1.bf16.msra.mxu0 %v692
    %1869 = vmatprep.subr.bf16.mxu0 %v696
    %1870 = vmatpush1.bf16.msra.mxu0 %v695
    %1871 = vmatprep.subr.bf16.mxu0 %v699
    %1872 = vmatpush1.bf16.msra.mxu0 %v698
    %1873 = vmatprep.subr.bf16.mxu0 %v702
    %1874 = vmatpush1.bf16.msra.mxu0 %v701
    %1875 = vmatprep.subr.bf16.mxu0 %v705
    %1876 = vmatpush1.bf16.msra.mxu0 %v704
    %1877 = vmatprep.subr.bf16.mxu0 %v708
    %1878 = vmatpush1.bf16.msra.mxu0 %v707
    %1879 = vmatprep.subr.bf16.mxu0 %v711
    %1880 = vmatpush1.bf16.msra.mxu0 %v710
    %1881 = vmatprep.subr.bf16.mxu0 %v714
    %1882 = vmatpush1.bf16.msra.mxu0 %v713
    %1883 = vmatprep.subr.bf16.mxu0 0
    %1884 = vmatpush1.bf16.msra.mxu0 0
    %1885 = vmatprep.subr.bf16.mxu0 0
    %1886 = vmatpush1.bf16.msra.mxu0 0
    %1887 = vmatprep.subr.bf16.mxu0 0
    %1888 = vmatpush1.bf16.msra.mxu0 0
    %1889 = vmatprep.subr.bf16.mxu0 0
    %1890 = vmatpush1.bf16.msra.mxu0 0
    %1891 = vmatprep.subr.bf16.mxu0 0
    %1892 = vmatpush1.bf16.msra.mxu0 0
    %1893 = vmatprep.subr.bf16.mxu0 0
    %1894 = vmatpush1.bf16.msra.mxu0 0
    %1895 = vmatprep.subr.bf16.mxu0 0
    %1896 = vmatpush1.bf16.msra.mxu0 0
    %1897 = vmatprep.subr.bf16.mxu0 0
    %1898 = vmatpush1.bf16.msra.mxu0 0
    %1899 = vmatprep.mubr.bf16.mxu0 0
    %1900 = vmatmul.mubr.bf16.gmra.mrb[0].mxu0 %v1682
    %v1901 = vpop.f32.mrb[0].mxu0
    %v1902 = vadd.f32 %v566, %v1901
    %v1903 = vpop.f32.mrb[0].mxu0
    %v1904 = vadd.f32 %v570, %v1903
    %v1905 = vpop.f32.mrb[0].mxu0
    %v1906 = vpop.f32.mrb[0].mxu0
    %1907 = vdwg.mxu0
    %1908 = vmatprep.subr.bf16.mxu0 0
    %1909 = vmatpush1.bf16.msra.mxu0 %v694
    %1910 = vmatprep.subr.bf16.mxu0 0
    %1911 = vmatpush1.bf16.msra.mxu0 %v697
    %1912 = vmatprep.subr.bf16.mxu0 0
    %1913 = vmatpush1.bf16.msra.mxu0 %v700
    %1914 = vmatprep.subr.bf16.mxu0 0
    %1915 = vmatpush1.bf16.msra.mxu0 %v703
    %1916 = vmatprep.subr.bf16.mxu0 0
    %1917 = vmatpush1.bf16.msra.mxu0 %v706
    %1918 = vmatprep.subr.bf16.mxu0 0
    %1919 = vmatpush1.bf16.msra.mxu0 %v709
    %1920 = vmatprep.subr.bf16.mxu0 0
    %1921 = vmatpush1.bf16.msra.mxu0 %v712
    %1922 = vmatprep.subr.bf16.mxu0 0
    %1923 = vmatpush1.bf16.msra.mxu0 %v715
    %1924 = vmatprep.subr.bf16.mxu0 0
    %1925 = vmatpush1.bf16.msra.mxu0 0
    %1926 = vmatprep.subr.bf16.mxu0 0
    %1927 = vmatpush1.bf16.msra.mxu0 0
    %1928 = vmatprep.subr.bf16.mxu0 0
    %1929 = vmatpush1.bf16.msra.mxu0 0
    %1930 = vmatprep.subr.bf16.mxu0 0
    %1931 = vmatpush1.bf16.msra.mxu0 0
    %1932 = vmatprep.subr.bf16.mxu0 0
    %1933 = vmatpush1.bf16.msra.mxu0 0
    %1934 = vmatprep.subr.bf16.mxu0 0
    %1935 = vmatpush1.bf16.msra.mxu0 0
    %1936 = vmatprep.subr.bf16.mxu0 0
    %1937 = vmatpush1.bf16.msra.mxu0 0
    %1938 = vmatprep.subr.bf16.mxu0 0
    %1939 = vmatpush1.bf16.msra.mxu0 0
    %1940 = vmatprep.mubr.bf16.mxu0 0
    %1941 = vmatmul.mubr.bf16.gmra.mrb[0].mxu0 %v1682
    %v1942 = vpop.f32.mrb[0].mxu0
    %v1943 = vadd.f32 %v574, %v1942
    %v1944 = vpop.f32.mrb[0].mxu0
    %v1945 = vpop.f32.mrb[0].mxu0
    %v1946 = vpop.f32.mrb[0].mxu0
    %1947 = vdwg.mxu0
    %s1948 = scalar_lea.vmem [#allocation2], 72
    %v1949 = vld [vmem:[%s1948] sm:$0xff]
    %v1950 = vld [vmem:[%s1948 + $0x8] sm:$0xff]
    %v1951 = vld [vmem:[%s1948 + $0x10] sm:$0xff]
    %v1952 = vadd.f32 %v1949, %v1902
    %v1953 = vadd.f32 %v1950, %v1904
    %v1954 = vxor.u32 %v1952, 2147483648
    %v1955 = vxor.u32 %v1953, 2147483648
    %v1956 = vmul.f32 %v1954, 1.442695
    %v1957 = vpow.pop %v1956
    %v1958 = vmul.f32 %v1955, 1.442695
    %v1959 = vpow.pop %v1958
    %v1960 = vadd.f32 %v1957, 1.0
    %v1961 = vadd.f32 %v1959, 1.0
    %v1962 = vrcp.pop %v1960
    %v1963 = vmul.f32 1.0, %v1962
    %v1964 = vrcp.pop %v1961
    %v1965 = vmul.f32 1.0, %v1964
    %v1966 = vmul.f32 %v1963, %v1943
    %v1967 = vadd.f32 %v1951, %v1966
    %v1968 = vtanh.pop %v1967
    %v1969 = vsub.f32 1.0, %v1965
    %v1970 = vmul.f32 %v1969, %v1968
    %v1971 = vmul.f32 %v1965, %v1681
    %v1972 = vadd.f32 %v1970, %v1971
    %v1973 = vpack.c.bf16 %v1972, %v1972
    %1974 = vmatprep.subr.bf16.mxu0 %v927
    %1975 = vmatpush1.bf16.msra.mxu0 %v926
    %1976 = vmatprep.subr.bf16.mxu0 %v930
    %1977 = vmatpush1.bf16.msra.mxu0 %v929
    %1978 = vmatprep.subr.bf16.mxu0 %v933
    %1979 = vmatpush1.bf16.msra.mxu0 %v932
    %1980 = vmatprep.subr.bf16.mxu0 %v936
    %1981 = vmatpush1.bf16.msra.mxu0 %v935
    %1982 = vmatprep.subr.bf16.mxu0 %v939
    %1983 = vmatpush1.bf16.msra.mxu0 %v938
    %1984 = vmatprep.subr.bf16.mxu0 %v942
    %1985 = vmatpush1.bf16.msra.mxu0 %v941
    %1986 = vmatprep.subr.bf16.mxu0 %v945
    %1987 = vmatpush1.bf16.msra.mxu0 %v944
    %1988 = vmatprep.subr.bf16.mxu0 %v948
    %1989 = vmatpush1.bf16.msra.mxu0 %v947
    %1990 = vmatprep.subr.bf16.mxu0 0
    %1991 = vmatpush1.bf16.msra.mxu0 0
    %1992 = vmatprep.subr.bf16.mxu0 0
    %1993 = vmatpush1.bf16.msra.mxu0 0
    %1994 = vmatprep.subr.bf16.mxu0 0
    %1995 = vmatpush1.bf16.msra.mxu0 0
    %1996 = vmatprep.subr.bf16.mxu0 0
    %1997 = vmatpush1.bf16.msra.mxu0 0
    %1998 = vmatprep.subr.bf16.mxu0 0
    %1999 = vmatpush1.bf16.msra.mxu0 0
    %2000 = vmatprep.subr.bf16.mxu0 0
    %2001 = vmatpush1.bf16.msra.mxu0 0
    %2002 = vmatprep.subr.bf16.mxu0 0
    %2003 = vmatpush1.bf16.msra.mxu0 0
    %2004 = vmatprep.subr.bf16.mxu0 0
    %2005 = vmatpush1.bf16.msra.mxu0 0
    %2006 = vmatprep.mubr.bf16.mxu0 0
    %2007 = vmatmul.mubr.bf16.gmra.mrb[0].mxu0 %v1973
    %v2008 = vpop.f32.mrb[0].mxu0
    %v2009 = vadd.f32 %v583, %v2008
    %v2010 = vpop.f32.mrb[0].mxu0
    %v2011 = vadd.f32 %v587, %v2010
    %v2012 = vpop.f32.mrb[0].mxu0
    %v2013 = vpop.f32.mrb[0].mxu0
    %2014 = vdwg.mxu0
    %2015 = vmatprep.subr.bf16.mxu0 0
    %2016 = vmatpush1.bf16.msra.mxu0 %v928
    %2017 = vmatprep.subr.bf16.mxu0 0
    %2018 = vmatpush1.bf16.msra.mxu0 %v931
    %2019 = vmatprep.subr.bf16.mxu0 0
    %2020 = vmatpush1.bf16.msra.mxu0 %v934
    %2021 = vmatprep.subr.bf16.mxu0 0
    %2022 = vmatpush1.bf16.msra.mxu0 %v937
    %2023 = vmatprep.subr.bf16.mxu0 0
    %2024 = vmatpush1.bf16.msra.mxu0 %v940
    %2025 = vmatprep.subr.bf16.mxu0 0
    %2026 = vmatpush1.bf16.msra.mxu0 %v943
    %2027 = vmatprep.subr.bf16.mxu0 0
    %2028 = vmatpush1.bf16.msra.mxu0 %v946
    %2029 = vmatprep.subr.bf16.mxu0 0
    %2030 = vmatpush1.bf16.msra.mxu0 %v949
    %2031 = vmatprep.subr.bf16.mxu0 0
    %2032 = vmatpush1.bf16.msra.mxu0 0
    %2033 = vmatprep.subr.bf16.mxu0 0
    %2034 = vmatpush1.bf16.msra.mxu0 0
    %2035 = vmatprep.subr.bf16.mxu0 0
    %2036 = vmatpush1.bf16.msra.mxu0 0
    %2037 = vmatprep.subr.bf16.mxu0 0
    %2038 = vmatpush1.bf16.msra.mxu0 0
    %2039 = vmatprep.subr.bf16.mxu0 0
    %2040 = vmatpush1.bf16.msra.mxu0 0
    %2041 = vmatprep.subr.bf16.mxu0 0
    %2042 = vmatpush1.bf16.msra.mxu0 0
    %2043 = vmatprep.subr.bf16.mxu0 0
    %2044 = vmatpush1.bf16.msra.mxu0 0
    %2045 = vmatprep.subr.bf16.mxu0 0
    %2046 = vmatpush1.bf16.msra.mxu0 0
    %2047 = vmatprep.mubr.bf16.mxu0 0
    %2048 = vmatmul.mubr.bf16.gmra.mrb[0].mxu0 %v1973
    %v2049 = vpop.f32.mrb[0].mxu0
    %v2050 = vadd.f32 %v591, %v2049
    %v2051 = vpop.f32.mrb[0].mxu0
    %v2052 = vpop.f32.mrb[0].mxu0
    %v2053 = vpop.f32.mrb[0].mxu0
    %2054 = vdwg.mxu0
    %v2055 = vpack.c.bf16 %v1866, %v1866
    %2056 = vmatprep.subr.bf16.mxu0 %v1136
    %2057 = vmatpush1.bf16.msra.mxu0 %v1135
    %2058 = vmatprep.subr.bf16.mxu0 %v1139
    %2059 = vmatpush1.bf16.msra.mxu0 %v1138
    %2060 = vmatprep.subr.bf16.mxu0 %v1142
    %2061 = vmatpush1.bf16.msra.mxu0 %v1141
    %2062 = vmatprep.subr.bf16.mxu0 %v1145
    %2063 = vmatpush1.bf16.msra.mxu0 %v1144
    %2064 = vmatprep.subr.bf16.mxu0 %v1148
    %2065 = vmatpush1.bf16.msra.mxu0 %v1147
    %2066 = vmatprep.subr.bf16.mxu0 %v1151
    %2067 = vmatpush1.bf16.msra.mxu0 %v1150
    %2068 = vmatprep.subr.bf16.mxu0 %v1154
    %2069 = vmatpush1.bf16.msra.mxu0 %v1153
    %2070 = vmatprep.subr.bf16.mxu0 %v1157
    %2071 = vmatpush1.bf16.msra.mxu0 %v1156
    %2072 = vmatprep.subr.bf16.mxu0 0
    %2073 = vmatpush1.bf16.msra.mxu0 0
    %2074 = vmatprep.subr.bf16.mxu0 0
    %2075 = vmatpush1.bf16.msra.mxu0 0
    %2076 = vmatprep.subr.bf16.mxu0 0
    %2077 = vmatpush1.bf16.msra.mxu0 0
    %2078 = vmatprep.subr.bf16.mxu0 0
    %2079 = vmatpush1.bf16.msra.mxu0 0
    %2080 = vmatprep.subr.bf16.mxu0 0
    %2081 = vmatpush1.bf16.msra.mxu0 0
    %2082 = vmatprep.subr.bf16.mxu0 0
    %2083 = vmatpush1.bf16.msra.mxu0 0
    %2084 = vmatprep.subr.bf16.mxu0 0
    %2085 = vmatpush1.bf16.msra.mxu0 0
    %2086 = vmatprep.subr.bf16.mxu0 0
    %2087 = vmatpush1.bf16.msra.mxu0 0
    %2088 = vmatprep.mubr.bf16.mxu0 0
    %2089 = vmatmul.mubr.bf16.gmra.mrb[0].mxu0 %v2055
    %v2090 = vpop.f32.mrb[0].mxu0
    %v2091 = vadd.f32 %v600, %v2090
    %v2092 = vpop.f32.mrb[0].mxu0
    %v2093 = vadd.f32 %v604, %v2092
    %v2094 = vpop.f32.mrb[0].mxu0
    %v2095 = vpop.f32.mrb[0].mxu0
    %2096 = vdwg.mxu0
    %2097 = vmatprep.subr.bf16.mxu0 0
    %2098 = vmatpush1.bf16.msra.mxu0 %v1137
    %2099 = vmatprep.subr.bf16.mxu0 0
    %2100 = vmatpush1.bf16.msra.mxu0 %v1140
    %2101 = vmatprep.subr.bf16.mxu0 0
    %2102 = vmatpush1.bf16.msra.mxu0 %v1143
    %2103 = vmatprep.subr.bf16.mxu0 0
    %2104 = vmatpush1.bf16.msra.mxu0 %v1146
    %2105 = vmatprep.subr.bf16.mxu0 0
    %2106 = vmatpush1.bf16.msra.mxu0 %v1149
    %2107 = vmatprep.subr.bf16.mxu0 0
    %2108 = vmatpush1.bf16.msra.mxu0 %v1152
    %2109 = vmatprep.subr.bf16.mxu0 0
    %2110 = vmatpush1.bf16.msra.mxu0 %v1155
    %2111 = vmatprep.subr.bf16.mxu0 0
    %2112 = vmatpush1.bf16.msra.mxu0 %v1158
    %2113 = vmatprep.subr.bf16.mxu0 0
    %2114 = vmatpush1.bf16.msra.mxu0 0
    %2115 = vmatprep.subr.bf16.mxu0 0
    %2116 = vmatpush1.bf16.msra.mxu0 0
    %2117 = vmatprep.subr.bf16.mxu0 0
    %2118 = vmatpush1.bf16.msra.mxu0 0
    %2119 = vmatprep.subr.bf16.mxu0 0
    %2120 = vmatpush1.bf16.msra.mxu0 0
    %2121 = vmatprep.subr.bf16.mxu0 0
    %2122 = vmatpush1.bf16.msra.mxu0 0
    %2123 = vmatprep.subr.bf16.mxu0 0
    %2124 = vmatpush1.bf16.msra.mxu0 0
    %2125 = vmatprep.subr.bf16.mxu0 0
    %2126 = vmatpush1.bf16.msra.mxu0 0
    %2127 = vmatprep.subr.bf16.mxu0 0
    %2128 = vmatpush1.bf16.msra.mxu0 0
    %2129 = vmatprep.mubr.bf16.mxu0 0
    %2130 = vmatmul.mubr.bf16.gmra.mrb[0].mxu0 %v2055
    %v2131 = vpop.f32.mrb[0].mxu0
    %v2132 = vadd.f32 %v608, %v2131
    %v2133 = vpop.f32.mrb[0].mxu0
    %v2134 = vpop.f32.mrb[0].mxu0
    %v2135 = vpop.f32.mrb[0].mxu0
    %2136 = vdwg.mxu0
    %v2137 = vadd.f32 %v2009, %v2091
    %v2138 = vadd.f32 %v2011, %v2093
    %v2139 = vxor.u32 %v2137, 2147483648
    %v2140 = vxor.u32 %v2138, 2147483648
    %v2141 = vmul.f32 %v2139, 1.442695
    %v2142 = vpow.pop %v2141
    %v2143 = vmul.f32 %v2140, 1.442695
    %v2144 = vpow.pop %v2143
    %v2145 = vadd.f32 %v2142, 1.0
    %v2146 = vadd.f32 %v2144, 1.0
    %v2147 = vrcp.pop %v2145
    %v2148 = vmul.f32 1.0, %v2147
    %v2149 = vrcp.pop %v2146
    %v2150 = vmul.f32 1.0, %v2149
    %v2151 = vmul.f32 %v2148, %v2132
    %v2152 = vadd.f32 %v2050, %v2151
    %v2153 = vtanh.pop %v2152
    %v2154 = vsub.f32 1.0, %v2150
    %v2155 = vmul.f32 %v2154, %v2153
    %v2156 = vmul.f32 %v2150, %v1866
    %v2157 = vadd.f32 %v2155, %v2156
    %2158 = vmatprep.subr.bf16.mxu0 %v693
    %2159 = vmatpush1.bf16.msra.mxu0 %v692
    %2160 = vmatprep.subr.bf16.mxu0 %v696
    %2161 = vmatpush1.bf16.msra.mxu0 %v695
    %2162 = vmatprep.subr.bf16.mxu0 %v699
    %2163 = vmatpush1.bf16.msra.mxu0 %v698
    %2164 = vmatprep.subr.bf16.mxu0 %v702
    %2165 = vmatpush1.bf16.msra.mxu0 %v701
    %2166 = vmatprep.subr.bf16.mxu0 %v705
    %2167 = vmatpush1.bf16.msra.mxu0 %v704
    %2168 = vmatprep.subr.bf16.mxu0 %v708
    %2169 = vmatpush1.bf16.msra.mxu0 %v707
    %2170 = vmatprep.subr.bf16.mxu0 %v711
    %2171 = vmatpush1.bf16.msra.mxu0 %v710
    %2172 = vmatprep.subr.bf16.mxu0 %v714
    %2173 = vmatpush1.bf16.msra.mxu0 %v713
    %2174 = vmatprep.subr.bf16.mxu0 0
    %2175 = vmatpush1.bf16.msra.mxu0 0
    %2176 = vmatprep.subr.bf16.mxu0 0
    %2177 = vmatpush1.bf16.msra.mxu0 0
    %2178 = vmatprep.subr.bf16.mxu0 0
    %2179 = vmatpush1.bf16.msra.mxu0 0
    %2180 = vmatprep.subr.bf16.mxu0 0
    %2181 = vmatpush1.bf16.msra.mxu0 0
    %2182 = vmatprep.subr.bf16.mxu0 0
    %2183 = vmatpush1.bf16.msra.mxu0 0
    %2184 = vmatprep.subr.bf16.mxu0 0
    %2185 = vmatpush1.bf16.msra.mxu0 0
    %2186 = vmatprep.subr.bf16.mxu0 0
    %2187 = vmatpush1.bf16.msra.mxu0 0
    %2188 = vmatprep.subr.bf16.mxu0 0
    %2189 = vmatpush1.bf16.msra.mxu0 0
    %2190 = vmatprep.mubr.bf16.mxu0 0
    %2191 = vmatmul.mubr.bf16.gmra.mrb[0].mxu0 %v1973
    %v2192 = vpop.f32.mrb[0].mxu0
    %v2193 = vadd.f32 %v566, %v2192
    %v2194 = vpop.f32.mrb[0].mxu0
    %v2195 = vadd.f32 %v570, %v2194
    %v2196 = vpop.f32.mrb[0].mxu0
    %v2197 = vpop.f32.mrb[0].mxu0
    %2198 = vdwg.mxu0
    %2199 = vmatprep.subr.bf16.mxu0 0
    %2200 = vmatpush1.bf16.msra.mxu0 %v694
    %2201 = vmatprep.subr.bf16.mxu0 0
    %2202 = vmatpush1.bf16.msra.mxu0 %v697
    %2203 = vmatprep.subr.bf16.mxu0 0
    %2204 = vmatpush1.bf16.msra.mxu0 %v700
    %2205 = vmatprep.subr.bf16.mxu0 0
    %2206 = vmatpush1.bf16.msra.mxu0 %v703
    %2207 = vmatprep.subr.bf16.mxu0 0
    %2208 = vmatpush1.bf16.msra.mxu0 %v706
    %2209 = vmatprep.subr.bf16.mxu0 0
    %2210 = vmatpush1.bf16.msra.mxu0 %v709
    %2211 = vmatprep.subr.bf16.mxu0 0
    %2212 = vmatpush1.bf16.msra.mxu0 %v712
    %2213 = vmatprep.subr.bf16.mxu0 0
    %2214 = vmatpush1.bf16.msra.mxu0 %v715
    %2215 = vmatprep.subr.bf16.mxu0 0
    %2216 = vmatpush1.bf16.msra.mxu0 0
    %2217 = vmatprep.subr.bf16.mxu0 0
    %2218 = vmatpush1.bf16.msra.mxu0 0
    %2219 = vmatprep.subr.bf16.mxu0 0
    %2220 = vmatpush1.bf16.msra.mxu0 0
    %2221 = vmatprep.subr.bf16.mxu0 0
    %2222 = vmatpush1.bf16.msra.mxu0 0
    %2223 = vmatprep.subr.bf16.mxu0 0
    %2224 = vmatpush1.bf16.msra.mxu0 0
    %2225 = vmatprep.subr.bf16.mxu0 0
    %2226 = vmatpush1.bf16.msra.mxu0 0
    %2227 = vmatprep.subr.bf16.mxu0 0
    %2228 = vmatpush1.bf16.msra.mxu0 0
    %2229 = vmatprep.subr.bf16.mxu0 0
    %2230 = vmatpush1.bf16.msra.mxu0 0
    %2231 = vmatprep.mubr.bf16.mxu0 0
    %2232 = vmatmul.mubr.bf16.gmra.mrb[0].mxu0 %v1973
    %v2233 = vpop.f32.mrb[0].mxu0
    %v2234 = vadd.f32 %v574, %v2233
    %v2235 = vpop.f32.mrb[0].mxu0
    %v2236 = vpop.f32.mrb[0].mxu0
    %v2237 = vpop.f32.mrb[0].mxu0
    %2238 = vdwg.mxu0
    %s2239 = scalar_lea.vmem [#allocation2], 96
    %v2240 = vld [vmem:[%s2239] sm:$0xff]
    %v2241 = vld [vmem:[%s2239 + $0x8] sm:$0xff]
    %v2242 = vld [vmem:[%s2239 + $0x10] sm:$0xff]
    %v2243 = vadd.f32 %v2240, %v2193
    %v2244 = vadd.f32 %v2241, %v2195
    %v2245 = vxor.u32 %v2243, 2147483648
    %v2246 = vxor.u32 %v2244, 2147483648
    %v2247 = vmul.f32 %v2245, 1.442695
    %v2248 = vpow.pop %v2247
    %v2249 = vmul.f32 %v2246, 1.442695
    %v2250 = vpow.pop %v2249
    %v2251 = vadd.f32 %v2248, 1.0
    %v2252 = vadd.f32 %v2250, 1.0
    %v2253 = vrcp.pop %v2251
    %v2254 = vmul.f32 1.0, %v2253
    %v2255 = vrcp.pop %v2252
    %v2256 = vmul.f32 1.0, %v2255
    %v2257 = vmul.f32 %v2254, %v2234
    %v2258 = vadd.f32 %v2242, %v2257
    %v2259 = vtanh.pop %v2258
    %v2260 = vsub.f32 1.0, %v2256
    %v2261 = vmul.f32 %v2260, %v2259
    %v2262 = vmul.f32 %v2256, %v1972
    %v2263 = vadd.f32 %v2261, %v2262
    %v2264 = vpack.c.bf16 %v2263, %v2263
    %2265 = vmatprep.subr.bf16.mxu0 %v927
    %2266 = vmatpush1.bf16.msra.mxu0 %v926
    %2267 = vmatprep.subr.bf16.mxu0 %v930
    %2268 = vmatpush1.bf16.msra.mxu0 %v929
    %2269 = vmatprep.subr.bf16.mxu0 %v933
    %2270 = vmatpush1.bf16.msra.mxu0 %v932
    %2271 = vmatprep.subr.bf16.mxu0 %v936
    %2272 = vmatpush1.bf16.msra.mxu0 %v935
    %2273 = vmatprep.subr.bf16.mxu0 %v939
    %2274 = vmatpush1.bf16.msra.mxu0 %v938
    %2275 = vmatprep.subr.bf16.mxu0 %v942
    %2276 = vmatpush1.bf16.msra.mxu0 %v941
    %2277 = vmatprep.subr.bf16.mxu0 %v945
    %2278 = vmatpush1.bf16.msra.mxu0 %v944
    %2279 = vmatprep.subr.bf16.mxu0 %v948
    %2280 = vmatpush1.bf16.msra.mxu0 %v947
    %2281 = vmatprep.subr.bf16.mxu0 0
    %2282 = vmatpush1.bf16.msra.mxu0 0
    %2283 = vmatprep.subr.bf16.mxu0 0
    %2284 = vmatpush1.bf16.msra.mxu0 0
    %2285 = vmatprep.subr.bf16.mxu0 0
    %2286 = vmatpush1.bf16.msra.mxu0 0
    %2287 = vmatprep.subr.bf16.mxu0 0
    %2288 = vmatpush1.bf16.msra.mxu0 0
    %2289 = vmatprep.subr.bf16.mxu0 0
    %2290 = vmatpush1.bf16.msra.mxu0 0
    %2291 = vmatprep.subr.bf16.mxu0 0
    %2292 = vmatpush1.bf16.msra.mxu0 0
    %2293 = vmatprep.subr.bf16.mxu0 0
    %2294 = vmatpush1.bf16.msra.mxu0 0
    %2295 = vmatprep.subr.bf16.mxu0 0
    %2296 = vmatpush1.bf16.msra.mxu0 0
    %2297 = vmatprep.mubr.bf16.mxu0 0
    %2298 = vmatmul.mubr.bf16.gmra.mrb[0].mxu0 %v2264
    %v2299 = vpop.f32.mrb[0].mxu0
    %v2300 = vadd.f32 %v583, %v2299
    %v2301 = vpop.f32.mrb[0].mxu0
    %v2302 = vadd.f32 %v587, %v2301
    %v2303 = vpop.f32.mrb[0].mxu0
    %v2304 = vpop.f32.mrb[0].mxu0
    %2305 = vdwg.mxu0
    %2306 = vmatprep.subr.bf16.mxu0 0
    %2307 = vmatpush1.bf16.msra.mxu0 %v928
    %2308 = vmatprep.subr.bf16.mxu0 0
    %2309 = vmatpush1.bf16.msra.mxu0 %v931
    %2310 = vmatprep.subr.bf16.mxu0 0
    %2311 = vmatpush1.bf16.msra.mxu0 %v934
    %2312 = vmatprep.subr.bf16.mxu0 0
    %2313 = vmatpush1.bf16.msra.mxu0 %v937
    %2314 = vmatprep.subr.bf16.mxu0 0
    %2315 = vmatpush1.bf16.msra.mxu0 %v940
    %2316 = vmatprep.subr.bf16.mxu0 0
    %2317 = vmatpush1.bf16.msra.mxu0 %v943
    %2318 = vmatprep.subr.bf16.mxu0 0
    %2319 = vmatpush1.bf16.msra.mxu0 %v946
    %2320 = vmatprep.subr.bf16.mxu0 0
    %2321 = vmatpush1.bf16.msra.mxu0 %v949
    %2322 = vmatprep.subr.bf16.mxu0 0
    %2323 = vmatpush1.bf16.msra.mxu0 0
    %2324 = vmatprep.subr.bf16.mxu0 0
    %2325 = vmatpush1.bf16.msra.mxu0 0
    %2326 = vmatprep.subr.bf16.mxu0 0
    %2327 = vmatpush1.bf16.msra.mxu0 0
    %2328 = vmatprep.subr.bf16.mxu0 0
    %2329 = vmatpush1.bf16.msra.mxu0 0
    %2330 = vmatprep.subr.bf16.mxu0 0
    %2331 = vmatpush1.bf16.msra.mxu0 0
    %2332 = vmatprep.subr.bf16.mxu0 0
    %2333 = vmatpush1.bf16.msra.mxu0 0
    %2334 = vmatprep.subr.bf16.mxu0 0
    %2335 = vmatpush1.bf16.msra.mxu0 0
    %2336 = vmatprep.subr.bf16.mxu0 0
    %2337 = vmatpush1.bf16.msra.mxu0 0
    %2338 = vmatprep.mubr.bf16.mxu0 0
    %2339 = vmatmul.mubr.bf16.gmra.mrb[0].mxu0 %v2264
    %v2340 = vpop.f32.mrb[0].mxu0
    %v2341 = vadd.f32 %v591, %v2340
    %v2342 = vpop.f32.mrb[0].mxu0
    %v2343 = vpop.f32.mrb[0].mxu0
    %v2344 = vpop.f32.mrb[0].mxu0
    %2345 = vdwg.mxu0
    %v2346 = vpack.c.bf16 %v2157, %v2157
    %2347 = vmatprep.subr.bf16.mxu0 %v1136
    %2348 = vmatpush1.bf16.msra.mxu0 %v1135
    %2349 = vmatprep.subr.bf16.mxu0 %v1139
    %2350 = vmatpush1.bf16.msra.mxu0 %v1138
    %2351 = vmatprep.subr.bf16.mxu0 %v1142
    %2352 = vmatpush1.bf16.msra.mxu0 %v1141
    %2353 = vmatprep.subr.bf16.mxu0 %v1145
    %2354 = vmatpush1.bf16.msra.mxu0 %v1144
    %2355 = vmatprep.subr.bf16.mxu0 %v1148
    %2356 = vmatpush1.bf16.msra.mxu0 %v1147
    %2357 = vmatprep.subr.bf16.mxu0 %v1151
    %2358 = vmatpush1.bf16.msra.mxu0 %v1150
    %2359 = vmatprep.subr.bf16.mxu0 %v1154
    %2360 = vmatpush1.bf16.msra.mxu0 %v1153
    %2361 = vmatprep.subr.bf16.mxu0 %v1157
    %2362 = vmatpush1.bf16.msra.mxu0 %v1156
    %2363 = vmatprep.subr.bf16.mxu0 0
    %2364 = vmatpush1.bf16.msra.mxu0 0
    %2365 = vmatprep.subr.bf16.mxu0 0
    %2366 = vmatpush1.bf16.msra.mxu0 0
    %2367 = vmatprep.subr.bf16.mxu0 0
    %2368 = vmatpush1.bf16.msra.mxu0 0
    %2369 = vmatprep.subr.bf16.mxu0 0
    %2370 = vmatpush1.bf16.msra.mxu0 0
    %2371 = vmatprep.subr.bf16.mxu0 0
    %2372 = vmatpush1.bf16.msra.mxu0 0
    %2373 = vmatprep.subr.bf16.mxu0 0
    %2374 = vmatpush1.bf16.msra.mxu0 0
    %2375 = vmatprep.subr.bf16.mxu0 0
    %2376 = vmatpush1.bf16.msra.mxu0 0
    %2377 = vmatprep.subr.bf16.mxu0 0
    %2378 = vmatpush1.bf16.msra.mxu0 0
    %2379 = vmatprep.mubr.bf16.mxu0 0
    %2380 = vmatmul.mubr.bf16.gmra.mrb[0].mxu0 %v2346
    %v2381 = vpop.f32.mrb[0].mxu0
    %v2382 = vadd.f32 %v600, %v2381
    %v2383 = vpop.f32.mrb[0].mxu0
    %v2384 = vadd.f32 %v604, %v2383
    %v2385 = vpop.f32.mrb[0].mxu0
    %v2386 = vpop.f32.mrb[0].mxu0
    %2387 = vdwg.mxu0
    %2388 = vmatprep.subr.bf16.mxu0 0
    %2389 = vmatpush1.bf16.msra.mxu0 %v1137
    %2390 = vmatprep.subr.bf16.mxu0 0
    %2391 = vmatpush1.bf16.msra.mxu0 %v1140
    %2392 = vmatprep.subr.bf16.mxu0 0
    %2393 = vmatpush1.bf16.msra.mxu0 %v1143
    %2394 = vmatprep.subr.bf16.mxu0 0
    %2395 = vmatpush1.bf16.msra.mxu0 %v1146
    %2396 = vmatprep.subr.bf16.mxu0 0
    %2397 = vmatpush1.bf16.msra.mxu0 %v1149
    %2398 = vmatprep.subr.bf16.mxu0 0
    %2399 = vmatpush1.bf16.msra.mxu0 %v1152
    %2400 = vmatprep.subr.bf16.mxu0 0
    %2401 = vmatpush1.bf16.msra.mxu0 %v1155
    %2402 = vmatprep.subr.bf16.mxu0 0
    %2403 = vmatpush1.bf16.msra.mxu0 %v1158
    %2404 = vmatprep.subr.bf16.mxu0 0
    %2405 = vmatpush1.bf16.msra.mxu0 0
    %2406 = vmatprep.subr.bf16.mxu0 0
    %2407 = vmatpush1.bf16.msra.mxu0 0
    %2408 = vmatprep.subr.bf16.mxu0 0
    %2409 = vmatpush1.bf16.msra.mxu0 0
    %2410 = vmatprep.subr.bf16.mxu0 0
    %2411 = vmatpush1.bf16.msra.mxu0 0
    %2412 = vmatprep.subr.bf16.mxu0 0
    %2413 = vmatpush1.bf16.msra.mxu0 0
    %2414 = vmatprep.subr.bf16.mxu0 0
    %2415 = vmatpush1.bf16.msra.mxu0 0
    %2416 = vmatprep.subr.bf16.mxu0 0
    %2417 = vmatpush1.bf16.msra.mxu0 0
    %2418 = vmatprep.subr.bf16.mxu0 0
    %2419 = vmatpush1.bf16.msra.mxu0 0
    %2420 = vmatprep.mubr.bf16.mxu0 0
    %2421 = vmatmul.mubr.bf16.gmra.mrb[0].mxu0 %v2346
    %v2422 = vpop.f32.mrb[0].mxu0
    %v2423 = vadd.f32 %v608, %v2422
    %v2424 = vpop.f32.mrb[0].mxu0
    %v2425 = vpop.f32.mrb[0].mxu0
    %v2426 = vpop.f32.mrb[0].mxu0
    %2427 = vdwg.mxu0
    %v2428 = vadd.f32 %v2300, %v2382
    %v2429 = vadd.f32 %v2302, %v2384
    %v2430 = vxor.u32 %v2428, 2147483648
    %v2431 = vxor.u32 %v2429, 2147483648
    %v2432 = vmul.f32 %v2430, 1.442695
    %v2433 = vpow.pop %v2432
    %v2434 = vmul.f32 %v2431, 1.442695
    %v2435 = vpow.pop %v2434
    %v2436 = vadd.f32 %v2433, 1.0
    %v2437 = vadd.f32 %v2435, 1.0
    %v2438 = vrcp.pop %v2436
    %v2439 = vmul.f32 1.0, %v2438
    %v2440 = vrcp.pop %v2437
    %v2441 = vmul.f32 1.0, %v2440
    %v2442 = vmul.f32 %v2439, %v2423
    %v2443 = vadd.f32 %v2341, %v2442
    %v2444 = vtanh.pop %v2443
    %v2445 = vsub.f32 1.0, %v2441
    %v2446 = vmul.f32 %v2445, %v2444
    %v2447 = vmul.f32 %v2441, %v2157
    %v2448 = vadd.f32 %v2446, %v2447
    %2449 = vmatprep.subr.bf16.mxu0 %v693
    %2450 = vmatpush1.bf16.msra.mxu0 %v692
    %2451 = vmatprep.subr.bf16.mxu0 %v696
    %2452 = vmatpush1.bf16.msra.mxu0 %v695
    %2453 = vmatprep.subr.bf16.mxu0 %v699
    %2454 = vmatpush1.bf16.msra.mxu0 %v698
    %2455 = vmatprep.subr.bf16.mxu0 %v702
    %2456 = vmatpush1.bf16.msra.mxu0 %v701
    %2457 = vmatprep.subr.bf16.mxu0 %v705
    %2458 = vmatpush1.bf16.msra.mxu0 %v704
    %2459 = vmatprep.subr.bf16.mxu0 %v708
    %2460 = vmatpush1.bf16.msra.mxu0 %v707
    %2461 = vmatprep.subr.bf16.mxu0 %v711
    %2462 = vmatpush1.bf16.msra.mxu0 %v710
    %2463 = vmatprep.subr.bf16.mxu0 %v714
    %2464 = vmatpush1.bf16.msra.mxu0 %v713
    %2465 = vmatprep.subr.bf16.mxu0 0
    %2466 = vmatpush1.bf16.msra.mxu0 0
    %2467 = vmatprep.subr.bf16.mxu0 0
    %2468 = vmatpush1.bf16.msra.mxu0 0
    %2469 = vmatprep.subr.bf16.mxu0 0
    %2470 = vmatpush1.bf16.msra.mxu0 0
    %2471 = vmatprep.subr.bf16.mxu0 0
    %2472 = vmatpush1.bf16.msra.mxu0 0
    %2473 = vmatprep.subr.bf16.mxu0 0
    %2474 = vmatpush1.bf16.msra.mxu0 0
    %2475 = vmatprep.subr.bf16.mxu0 0
    %2476 = vmatpush1.bf16.msra.mxu0 0
    %2477 = vmatprep.subr.bf16.mxu0 0
    %2478 = vmatpush1.bf16.msra.mxu0 0
    %2479 = vmatprep.subr.bf16.mxu0 0
    %2480 = vmatpush1.bf16.msra.mxu0 0
    %2481 = vmatprep.mubr.bf16.mxu0 0
    %2482 = vmatmul.mubr.bf16.gmra.mrb[0].mxu0 %v2264
    %v2483 = vpop.f32.mrb[0].mxu0
    %v2484 = vadd.f32 %v566, %v2483
    %v2485 = vpop.f32.mrb[0].mxu0
    %v2486 = vadd.f32 %v570, %v2485
    %v2487 = vpop.f32.mrb[0].mxu0
    %v2488 = vpop.f32.mrb[0].mxu0
    %2489 = vdwg.mxu0
    %2490 = vmatprep.subr.bf16.mxu0 0
    %2491 = vmatpush1.bf16.msra.mxu0 %v694
    %2492 = vmatprep.subr.bf16.mxu0 0
    %2493 = vmatpush1.bf16.msra.mxu0 %v697
    %2494 = vmatprep.subr.bf16.mxu0 0
    %2495 = vmatpush1.bf16.msra.mxu0 %v700
    %2496 = vmatprep.subr.bf16.mxu0 0
    %2497 = vmatpush1.bf16.msra.mxu0 %v703
    %2498 = vmatprep.subr.bf16.mxu0 0
    %2499 = vmatpush1.bf16.msra.mxu0 %v706
    %2500 = vmatprep.subr.bf16.mxu0 0
    %2501 = vmatpush1.bf16.msra.mxu0 %v709
    %2502 = vmatprep.subr.bf16.mxu0 0
    %2503 = vmatpush1.bf16.msra.mxu0 %v712
    %2504 = vmatprep.subr.bf16.mxu0 0
    %2505 = vmatpush1.bf16.msra.mxu0 %v715
    %2506 = vmatprep.subr.bf16.mxu0 0
    %2507 = vmatpush1.bf16.msra.mxu0 0
    %2508 = vmatprep.subr.bf16.mxu0 0
    %2509 = vmatpush1.bf16.msra.mxu0 0
    %2510 = vmatprep.subr.bf16.mxu0 0
    %2511 = vmatpush1.bf16.msra.mxu0 0
    %2512 = vmatprep.subr.bf16.mxu0 0
    %2513 = vmatpush1.bf16.msra.mxu0 0
    %2514 = vmatprep.subr.bf16.mxu0 0
    %2515 = vmatpush1.bf16.msra.mxu0 0
    %2516 = vmatprep.subr.bf16.mxu0 0
    %2517 = vmatpush1.bf16.msra.mxu0 0
    %2518 = vmatprep.subr.bf16.mxu0 0
    %2519 = vmatpush1.bf16.msra.mxu0 0
    %2520 = vmatprep.subr.bf16.mxu0 0
    %2521 = vmatpush1.bf16.msra.mxu0 0
    %2522 = vmatprep.mubr.bf16.mxu0 0
    %2523 = vmatmul.mubr.bf16.gmra.mrb[0].mxu0 %v2264
    %v2524 = vpop.f32.mrb[0].mxu0
    %v2525 = vadd.f32 %v574, %v2524
    %v2526 = vpop.f32.mrb[0].mxu0
    %v2527 = vpop.f32.mrb[0].mxu0
    %v2528 = vpop.f32.mrb[0].mxu0
    %2529 = vdwg.mxu0
    %s2530 = scalar_lea.vmem [#allocation2], 120
    %v2531 = vld [vmem:[%s2530] sm:$0xff]
    %v2532 = vld [vmem:[%s2530 + $0x8] sm:$0xff]
    %v2533 = vld [vmem:[%s2530 + $0x10] sm:$0xff]
    %v2534 = vadd.f32 %v2531, %v2484
    %v2535 = vadd.f32 %v2532, %v2486
    %v2536 = vxor.u32 %v2534, 2147483648
    %v2537 = vxor.u32 %v2535, 2147483648
    %v2538 = vmul.f32 %v2536, 1.442695
    %v2539 = vpow.pop %v2538
    %v2540 = vmul.f32 %v2537, 1.442695
    %v2541 = vpow.pop %v2540
    %v2542 = vadd.f32 %v2539, 1.0
    %v2543 = vadd.f32 %v2541, 1.0
    %v2544 = vrcp.pop %v2542
    %v2545 = vmul.f32 1.0, %v2544
    %v2546 = vrcp.pop %v2543
    %v2547 = vmul.f32 1.0, %v2546
    %v2548 = vmul.f32 %v2545, %v2525
    %v2549 = vadd.f32 %v2533, %v2548
    %v2550 = vtanh.pop %v2549
    %v2551 = vsub.f32 1.0, %v2547
    %v2552 = vmul.f32 %v2551, %v2550
    %v2553 = vmul.f32 %v2547, %v2263
    %v2554 = vadd.f32 %v2552, %v2553
    %v2555 = vpack.c.bf16 %v2554, %v2554
    %2556 = vmatprep.subr.bf16.mxu0 %v927
    %2557 = vmatpush1.bf16.msra.mxu0 %v926
    %2558 = vmatprep.subr.bf16.mxu0 %v930
    %2559 = vmatpush1.bf16.msra.mxu0 %v929
    %2560 = vmatprep.subr.bf16.mxu0 %v933
    %2561 = vmatpush1.bf16.msra.mxu0 %v932
    %2562 = vmatprep.subr.bf16.mxu0 %v936
    %2563 = vmatpush1.bf16.msra.mxu0 %v935
    %2564 = vmatprep.subr.bf16.mxu0 %v939
    %2565 = vmatpush1.bf16.msra.mxu0 %v938
    %2566 = vmatprep.subr.bf16.mxu0 %v942
    %2567 = vmatpush1.bf16.msra.mxu0 %v941
    %2568 = vmatprep.subr.bf16.mxu0 %v945
    %2569 = vmatpush1.bf16.msra.mxu0 %v944
    %2570 = vmatprep.subr.bf16.mxu0 %v948
    %2571 = vmatpush1.bf16.msra.mxu0 %v947
    %2572 = vmatprep.subr.bf16.mxu0 0
    %2573 = vmatpush1.bf16.msra.mxu0 0
    %2574 = vmatprep.subr.bf16.mxu0 0
    %2575 = vmatpush1.bf16.msra.mxu0 0
    %2576 = vmatprep.subr.bf16.mxu0 0
    %2577 = vmatpush1.bf16.msra.mxu0 0
    %2578 = vmatprep.subr.bf16.mxu0 0
    %2579 = vmatpush1.bf16.msra.mxu0 0
    %2580 = vmatprep.subr.bf16.mxu0 0
    %2581 = vmatpush1.bf16.msra.mxu0 0
    %2582 = vmatprep.subr.bf16.mxu0 0
    %2583 = vmatpush1.bf16.msra.mxu0 0
    %2584 = vmatprep.subr.bf16.mxu0 0
    %2585 = vmatpush1.bf16.msra.mxu0 0
    %2586 = vmatprep.subr.bf16.mxu0 0
    %2587 = vmatpush1.bf16.msra.mxu0 0
    %2588 = vmatprep.mubr.bf16.mxu0 0
    %2589 = vmatmul.mubr.bf16.gmra.mrb[0].mxu0 %v2555
    %v2590 = vpop.f32.mrb[0].mxu0
    %v2591 = vadd.f32 %v583, %v2590
    %v2592 = vpop.f32.mrb[0].mxu0
    %v2593 = vadd.f32 %v587, %v2592
    %v2594 = vpop.f32.mrb[0].mxu0
    %v2595 = vpop.f32.mrb[0].mxu0
    %2596 = vdwg.mxu0
    %2597 = vmatprep.subr.bf16.mxu0 0
    %2598 = vmatpush1.bf16.msra.mxu0 %v928
    %2599 = vmatprep.subr.bf16.mxu0 0
    %2600 = vmatpush1.bf16.msra.mxu0 %v931
    %2601 = vmatprep.subr.bf16.mxu0 0
    %2602 = vmatpush1.bf16.msra.mxu0 %v934
    %2603 = vmatprep.subr.bf16.mxu0 0
    %2604 = vmatpush1.bf16.msra.mxu0 %v937
    %2605 = vmatprep.subr.bf16.mxu0 0
    %2606 = vmatpush1.bf16.msra.mxu0 %v940
    %2607 = vmatprep.subr.bf16.mxu0 0
    %2608 = vmatpush1.bf16.msra.mxu0 %v943
    %2609 = vmatprep.subr.bf16.mxu0 0
    %2610 = vmatpush1.bf16.msra.mxu0 %v946
    %2611 = vmatprep.subr.bf16.mxu0 0
    %2612 = vmatpush1.bf16.msra.mxu0 %v949
    %2613 = vmatprep.subr.bf16.mxu0 0
    %2614 = vmatpush1.bf16.msra.mxu0 0
    %2615 = vmatprep.subr.bf16.mxu0 0
    %2616 = vmatpush1.bf16.msra.mxu0 0
    %2617 = vmatprep.subr.bf16.mxu0 0
    %2618 = vmatpush1.bf16.msra.mxu0 0
    %2619 = vmatprep.subr.bf16.mxu0 0
    %2620 = vmatpush1.bf16.msra.mxu0 0
    %2621 = vmatprep.subr.bf16.mxu0 0
    %2622 = vmatpush1.bf16.msra.mxu0 0
    %2623 = vmatprep.subr.bf16.mxu0 0
    %2624 = vmatpush1.bf16.msra.mxu0 0
    %2625 = vmatprep.subr.bf16.mxu0 0
    %2626 = vmatpush1.bf16.msra.mxu0 0
    %2627 = vmatprep.subr.bf16.mxu0 0
    %2628 = vmatpush1.bf16.msra.mxu0 0
    %2629 = vmatprep.mubr.bf16.mxu0 0
    %2630 = vmatmul.mubr.bf16.gmra.mrb[0].mxu0 %v2555
    %v2631 = vpop.f32.mrb[0].mxu0
    %v2632 = vadd.f32 %v591, %v2631
    %v2633 = vpop.f32.mrb[0].mxu0
    %v2634 = vpop.f32.mrb[0].mxu0
    %v2635 = vpop.f32.mrb[0].mxu0
    %2636 = vdwg.mxu0
    %v2637 = vpack.c.bf16 %v2448, %v2448
    %2638 = vmatprep.subr.bf16.mxu0 %v1136
    %2639 = vmatpush1.bf16.msra.mxu0 %v1135
    %2640 = vmatprep.subr.bf16.mxu0 %v1139
    %2641 = vmatpush1.bf16.msra.mxu0 %v1138
    %2642 = vmatprep.subr.bf16.mxu0 %v1142
    %2643 = vmatpush1.bf16.msra.mxu0 %v1141
    %2644 = vmatprep.subr.bf16.mxu0 %v1145
    %2645 = vmatpush1.bf16.msra.mxu0 %v1144
    %2646 = vmatprep.subr.bf16.mxu0 %v1148
    %2647 = vmatpush1.bf16.msra.mxu0 %v1147
    %2648 = vmatprep.subr.bf16.mxu0 %v1151
    %2649 = vmatpush1.bf16.msra.mxu0 %v1150
    %2650 = vmatprep.subr.bf16.mxu0 %v1154
    %2651 = vmatpush1.bf16.msra.mxu0 %v1153
    %2652 = vmatprep.subr.bf16.mxu0 %v1157
    %2653 = vmatpush1.bf16.msra.mxu0 %v1156
    %2654 = vmatprep.subr.bf16.mxu0 0
    %2655 = vmatpush1.bf16.msra.mxu0 0
    %2656 = vmatprep.subr.bf16.mxu0 0
    %2657 = vmatpush1.bf16.msra.mxu0 0
    %2658 = vmatprep.subr.bf16.mxu0 0
    %2659 = vmatpush1.bf16.msra.mxu0 0
    %2660 = vmatprep.subr.bf16.mxu0 0
    %2661 = vmatpush1.bf16.msra.mxu0 0
    %2662 = vmatprep.subr.bf16.mxu0 0
    %2663 = vmatpush1.bf16.msra.mxu0 0
    %2664 = vmatprep.subr.bf16.mxu0 0
    %2665 = vmatpush1.bf16.msra.mxu0 0
    %2666 = vmatprep.subr.bf16.mxu0 0
    %2667 = vmatpush1.bf16.msra.mxu0 0
    %2668 = vmatprep.subr.bf16.mxu0 0
    %2669 = vmatpush1.bf16.msra.mxu0 0
    %2670 = vmatprep.mubr.bf16.mxu0 0
    %2671 = vmatmul.mubr.bf16.gmra.mrb[0].mxu0 %v2637
    %v2672 = vpop.f32.mrb[0].mxu0
    %v2673 = vadd.f32 %v600, %v2672
    %v2674 = vpop.f32.mrb[0].mxu0
    %v2675 = vadd.f32 %v604, %v2674
    %v2676 = vpop.f32.mrb[0].mxu0
    %v2677 = vpop.f32.mrb[0].mxu0
    %2678 = vdwg.mxu0
    %2679 = vmatprep.subr.bf16.mxu0 0
    %2680 = vmatpush1.bf16.msra.mxu0 %v1137
    %2681 = vmatprep.subr.bf16.mxu0 0
    %2682 = vmatpush1.bf16.msra.mxu0 %v1140
    %2683 = vmatprep.subr.bf16.mxu0 0
    %2684 = vmatpush1.bf16.msra.mxu0 %v1143
    %2685 = vmatprep.subr.bf16.mxu0 0
    %2686 = vmatpush1.bf16.msra.mxu0 %v1146
    %2687 = vmatprep.subr.bf16.mxu0 0
    %2688 = vmatpush1.bf16.msra.mxu0 %v1149
    %2689 = vmatprep.subr.bf16.mxu0 0
    %2690 = vmatpush1.bf16.msra.mxu0 %v1152
    %2691 = vmatprep.subr.bf16.mxu0 0
    %2692 = vmatpush1.bf16.msra.mxu0 %v1155
    %2693 = vmatprep.subr.bf16.mxu0 0
    %2694 = vmatpush1.bf16.msra.mxu0 %v1158
    %2695 = vmatprep.subr.bf16.mxu0 0
    %2696 = vmatpush1.bf16.msra.mxu0 0
    %2697 = vmatprep.subr.bf16.mxu0 0
    %2698 = vmatpush1.bf16.msra.mxu0 0
    %2699 = vmatprep.subr.bf16.mxu0 0
    %2700 = vmatpush1.bf16.msra.mxu0 0
    %2701 = vmatprep.subr.bf16.mxu0 0
    %2702 = vmatpush1.bf16.msra.mxu0 0
    %2703 = vmatprep.subr.bf16.mxu0 0
    %2704 = vmatpush1.bf16.msra.mxu0 0
    %2705 = vmatprep.subr.bf16.mxu0 0
    %2706 = vmatpush1.bf16.msra.mxu0 0
    %2707 = vmatprep.subr.bf16.mxu0 0
    %2708 = vmatpush1.bf16.msra.mxu0 0
    %2709 = vmatprep.subr.bf16.mxu0 0
    %2710 = vmatpush1.bf16.msra.mxu0 0
    %2711 = vmatprep.mubr.bf16.mxu0 0
    %2712 = vmatmul.mubr.bf16.gmra.mrb[0].mxu0 %v2637
    %v2713 = vpop.f32.mrb[0].mxu0
    %v2714 = vadd.f32 %v608, %v2713
    %v2715 = vpop.f32.mrb[0].mxu0
    %v2716 = vpop.f32.mrb[0].mxu0
    %v2717 = vpop.f32.mrb[0].mxu0
    %2718 = vdwg.mxu0
    %v2719 = vadd.f32 %v2591, %v2673
    %v2720 = vadd.f32 %v2593, %v2675
    %v2721 = vxor.u32 %v2719, 2147483648
    %v2722 = vxor.u32 %v2720, 2147483648
    %v2723 = vmul.f32 %v2721, 1.442695
    %v2724 = vpow.pop %v2723
    %v2725 = vmul.f32 %v2722, 1.442695
    %v2726 = vpow.pop %v2725
    %v2727 = vadd.f32 %v2724, 1.0
    %v2728 = vadd.f32 %v2726, 1.0
    %v2729 = vrcp.pop %v2727
    %v2730 = vmul.f32 1.0, %v2729
    %v2731 = vrcp.pop %v2728
    %v2732 = vmul.f32 1.0, %v2731
    %v2733 = vmul.f32 %v2730, %v2714
    %v2734 = vadd.f32 %v2632, %v2733
    %v2735 = vtanh.pop %v2734
    %v2736 = vsub.f32 1.0, %v2732
    %v2737 = vmul.f32 %v2736, %v2735
    %v2738 = vmul.f32 %v2732, %v2448
    %v2739 = vadd.f32 %v2737, %v2738
    %2740 = vmatprep.subr.bf16.mxu0 %v693
    %2741 = vmatpush1.bf16.msra.mxu0 %v692
    %2742 = vmatprep.subr.bf16.mxu0 %v696
    %2743 = vmatpush1.bf16.msra.mxu0 %v695
    %2744 = vmatprep.subr.bf16.mxu0 %v699
    %2745 = vmatpush1.bf16.msra.mxu0 %v698
    %2746 = vmatprep.subr.bf16.mxu0 %v702
    %2747 = vmatpush1.bf16.msra.mxu0 %v701
    %2748 = vmatprep.subr.bf16.mxu0 %v705
    %2749 = vmatpush1.bf16.msra.mxu0 %v704
    %2750 = vmatprep.subr.bf16.mxu0 %v708
    %2751 = vmatpush1.bf16.msra.mxu0 %v707
    %2752 = vmatprep.subr.bf16.mxu0 %v711
    %2753 = vmatpush1.bf16.msra.mxu0 %v710
    %2754 = vmatprep.subr.bf16.mxu0 %v714
    %2755 = vmatpush1.bf16.msra.mxu0 %v713
    %2756 = vmatprep.subr.bf16.mxu0 0
    %2757 = vmatpush1.bf16.msra.mxu0 0
    %2758 = vmatprep.subr.bf16.mxu0 0
    %2759 = vmatpush1.bf16.msra.mxu0 0
    %2760 = vmatprep.subr.bf16.mxu0 0
    %2761 = vmatpush1.bf16.msra.mxu0 0
    %2762 = vmatprep.subr.bf16.mxu0 0
    %2763 = vmatpush1.bf16.msra.mxu0 0
    %2764 = vmatprep.subr.bf16.mxu0 0
    %2765 = vmatpush1.bf16.msra.mxu0 0
    %2766 = vmatprep.subr.bf16.mxu0 0
    %2767 = vmatpush1.bf16.msra.mxu0 0
    %2768 = vmatprep.subr.bf16.mxu0 0
    %2769 = vmatpush1.bf16.msra.mxu0 0
    %2770 = vmatprep.subr.bf16.mxu0 0
    %2771 = vmatpush1.bf16.msra.mxu0 0
    %2772 = vmatprep.mubr.bf16.mxu0 0
    %2773 = vmatmul.mubr.bf16.gmra.mrb[0].mxu0 %v2555
    %v2774 = vpop.f32.mrb[0].mxu0
    %v2775 = vadd.f32 %v566, %v2774
    %v2776 = vpop.f32.mrb[0].mxu0
    %v2777 = vadd.f32 %v570, %v2776
    %v2778 = vpop.f32.mrb[0].mxu0
    %v2779 = vpop.f32.mrb[0].mxu0
    %2780 = vdwg.mxu0
    %2781 = vmatprep.subr.bf16.mxu0 0
    %2782 = vmatpush1.bf16.msra.mxu0 %v694
    %2783 = vmatprep.subr.bf16.mxu0 0
    %2784 = vmatpush1.bf16.msra.mxu0 %v697
    %2785 = vmatprep.subr.bf16.mxu0 0
    %2786 = vmatpush1.bf16.msra.mxu0 %v700
    %2787 = vmatprep.subr.bf16.mxu0 0
    %2788 = vmatpush1.bf16.msra.mxu0 %v703
    %2789 = vmatprep.subr.bf16.mxu0 0
    %2790 = vmatpush1.bf16.msra.mxu0 %v706
    %2791 = vmatprep.subr.bf16.mxu0 0
    %2792 = vmatpush1.bf16.msra.mxu0 %v709
    %2793 = vmatprep.subr.bf16.mxu0 0
    %2794 = vmatpush1.bf16.msra.mxu0 %v712
    %2795 = vmatprep.subr.bf16.mxu0 0
    %2796 = vmatpush1.bf16.msra.mxu0 %v715
    %2797 = vmatprep.subr.bf16.mxu0 0
    %2798 = vmatpush1.bf16.msra.mxu0 0
    %2799 = vmatprep.subr.bf16.mxu0 0
    %2800 = vmatpush1.bf16.msra.mxu0 0
    %2801 = vmatprep.subr.bf16.mxu0 0
    %2802 = vmatpush1.bf16.msra.mxu0 0
    %2803 = vmatprep.subr.bf16.mxu0 0
    %2804 = vmatpush1.bf16.msra.mxu0 0
    %2805 = vmatprep.subr.bf16.mxu0 0
    %2806 = vmatpush1.bf16.msra.mxu0 0
    %2807 = vmatprep.subr.bf16.mxu0 0
    %2808 = vmatpush1.bf16.msra.mxu0 0
    %2809 = vmatprep.subr.bf16.mxu0 0
    %2810 = vmatpush1.bf16.msra.mxu0 0
    %2811 = vmatprep.subr.bf16.mxu0 0
    %2812 = vmatpush1.bf16.msra.mxu0 0
    %2813 = vmatprep.mubr.bf16.mxu0 0
    %2814 = vmatmul.mubr.bf16.gmra.mrb[0].mxu0 %v2555
    %v2815 = vpop.f32.mrb[0].mxu0
    %v2816 = vadd.f32 %v574, %v2815
    %v2817 = vpop.f32.mrb[0].mxu0
    %v2818 = vpop.f32.mrb[0].mxu0
    %v2819 = vpop.f32.mrb[0].mxu0
    %2820 = vdwg.mxu0
    %s2821 = scalar_lea.vmem [#allocation2], 144
    %v2822 = vld [vmem:[%s2821] sm:$0xff]
    %v2823 = vld [vmem:[%s2821 + $0x8] sm:$0xff]
    %v2824 = vld [vmem:[%s2821 + $0x10] sm:$0xff]
    %v2825 = vadd.f32 %v2822, %v2775
    %v2826 = vadd.f32 %v2823, %v2777
    %v2827 = vxor.u32 %v2825, 2147483648
    %v2828 = vxor.u32 %v2826, 2147483648
    %v2829 = vmul.f32 %v2827, 1.442695
    %v2830 = vpow.pop %v2829
    %v2831 = vmul.f32 %v2828, 1.442695
    %v2832 = vpow.pop %v2831
    %v2833 = vadd.f32 %v2830, 1.0
    %v2834 = vadd.f32 %v2832, 1.0
    %v2835 = vrcp.pop %v2833
    %v2836 = vmul.f32 1.0, %v2835
    %v2837 = vrcp.pop %v2834
    %v2838 = vmul.f32 1.0, %v2837
    %v2839 = vmul.f32 %v2836, %v2816
    %v2840 = vadd.f32 %v2824, %v2839
    %v2841 = vtanh.pop %v2840
    %v2842 = vsub.f32 1.0, %v2838
    %v2843 = vmul.f32 %v2842, %v2841
    %v2844 = vmul.f32 %v2838, %v2554
    %v2845 = vadd.f32 %v2843, %v2844
    %v2846 = vpack.c.bf16 %v2845, %v2845
    %2847 = vmatprep.subr.bf16.mxu0 %v927
    %2848 = vmatpush1.bf16.msra.mxu0 %v926
    %2849 = vmatprep.subr.bf16.mxu0 %v930
    %2850 = vmatpush1.bf16.msra.mxu0 %v929
    %2851 = vmatprep.subr.bf16.mxu0 %v933
    %2852 = vmatpush1.bf16.msra.mxu0 %v932
    %2853 = vmatprep.subr.bf16.mxu0 %v936
    %2854 = vmatpush1.bf16.msra.mxu0 %v935
    %2855 = vmatprep.subr.bf16.mxu0 %v939
    %2856 = vmatpush1.bf16.msra.mxu0 %v938
    %2857 = vmatprep.subr.bf16.mxu0 %v942
    %2858 = vmatpush1.bf16.msra.mxu0 %v941
    %2859 = vmatprep.subr.bf16.mxu0 %v945
    %2860 = vmatpush1.bf16.msra.mxu0 %v944
    %2861 = vmatprep.subr.bf16.mxu0 %v948
    %2862 = vmatpush1.bf16.msra.mxu0 %v947
    %2863 = vmatprep.subr.bf16.mxu0 0
    %2864 = vmatpush1.bf16.msra.mxu0 0
    %2865 = vmatprep.subr.bf16.mxu0 0
    %2866 = vmatpush1.bf16.msra.mxu0 0
    %2867 = vmatprep.subr.bf16.mxu0 0
    %2868 = vmatpush1.bf16.msra.mxu0 0
    %2869 = vmatprep.subr.bf16.mxu0 0
    %2870 = vmatpush1.bf16.msra.mxu0 0
    %2871 = vmatprep.subr.bf16.mxu0 0
    %2872 = vmatpush1.bf16.msra.mxu0 0
    %2873 = vmatprep.subr.bf16.mxu0 0
    %2874 = vmatpush1.bf16.msra.mxu0 0
    %2875 = vmatprep.subr.bf16.mxu0 0
    %2876 = vmatpush1.bf16.msra.mxu0 0
    %2877 = vmatprep.subr.bf16.mxu0 0
    %2878 = vmatpush1.bf16.msra.mxu0 0
    %2879 = vmatprep.mubr.bf16.mxu0 0
    %2880 = vmatmul.mubr.bf16.gmra.mrb[0].mxu0 %v2846
    %v2881 = vpop.f32.mrb[0].mxu0
    %v2882 = vadd.f32 %v583, %v2881
    %v2883 = vpop.f32.mrb[0].mxu0
    %v2884 = vadd.f32 %v587, %v2883
    %v2885 = vpop.f32.mrb[0].mxu0
    %v2886 = vpop.f32.mrb[0].mxu0
    %2887 = vdwg.mxu0
    %2888 = vmatprep.subr.bf16.mxu0 0
    %2889 = vmatpush1.bf16.msra.mxu0 %v928
    %2890 = vmatprep.subr.bf16.mxu0 0
    %2891 = vmatpush1.bf16.msra.mxu0 %v931
    %2892 = vmatprep.subr.bf16.mxu0 0
    %2893 = vmatpush1.bf16.msra.mxu0 %v934
    %2894 = vmatprep.subr.bf16.mxu0 0
    %2895 = vmatpush1.bf16.msra.mxu0 %v937
    %2896 = vmatprep.subr.bf16.mxu0 0
    %2897 = vmatpush1.bf16.msra.mxu0 %v940
    %2898 = vmatprep.subr.bf16.mxu0 0
    %2899 = vmatpush1.bf16.msra.mxu0 %v943
    %2900 = vmatprep.subr.bf16.mxu0 0
    %2901 = vmatpush1.bf16.msra.mxu0 %v946
    %2902 = vmatprep.subr.bf16.mxu0 0
    %2903 = vmatpush1.bf16.msra.mxu0 %v949
    %2904 = vmatprep.subr.bf16.mxu0 0
    %2905 = vmatpush1.bf16.msra.mxu0 0
    %2906 = vmatprep.subr.bf16.mxu0 0
    %2907 = vmatpush1.bf16.msra.mxu0 0
    %2908 = vmatprep.subr.bf16.mxu0 0
    %2909 = vmatpush1.bf16.msra.mxu0 0
    %2910 = vmatprep.subr.bf16.mxu0 0
    %2911 = vmatpush1.bf16.msra.mxu0 0
    %2912 = vmatprep.subr.bf16.mxu0 0
    %2913 = vmatpush1.bf16.msra.mxu0 0
    %2914 = vmatprep.subr.bf16.mxu0 0
    %2915 = vmatpush1.bf16.msra.mxu0 0
    %2916 = vmatprep.subr.bf16.mxu0 0
    %2917 = vmatpush1.bf16.msra.mxu0 0
    %2918 = vmatprep.subr.bf16.mxu0 0
    %2919 = vmatpush1.bf16.msra.mxu0 0
    %2920 = vmatprep.mubr.bf16.mxu0 0
    %2921 = vmatmul.mubr.bf16.gmra.mrb[0].mxu0 %v2846
    %v2922 = vpop.f32.mrb[0].mxu0
    %v2923 = vadd.f32 %v591, %v2922
    %v2924 = vpop.f32.mrb[0].mxu0
    %v2925 = vpop.f32.mrb[0].mxu0
    %v2926 = vpop.f32.mrb[0].mxu0
    %2927 = vdwg.mxu0
    %v2928 = vpack.c.bf16 %v2739, %v2739
    %2929 = vmatprep.subr.bf16.mxu0 %v1136
    %2930 = vmatpush1.bf16.msra.mxu0 %v1135
    %2931 = vmatprep.subr.bf16.mxu0 %v1139
    %2932 = vmatpush1.bf16.msra.mxu0 %v1138
    %2933 = vmatprep.subr.bf16.mxu0 %v1142
    %2934 = vmatpush1.bf16.msra.mxu0 %v1141
    %2935 = vmatprep.subr.bf16.mxu0 %v1145
    %2936 = vmatpush1.bf16.msra.mxu0 %v1144
    %2937 = vmatprep.subr.bf16.mxu0 %v1148
    %2938 = vmatpush1.bf16.msra.mxu0 %v1147
    %2939 = vmatprep.subr.bf16.mxu0 %v1151
    %2940 = vmatpush1.bf16.msra.mxu0 %v1150
    %2941 = vmatprep.subr.bf16.mxu0 %v1154
    %2942 = vmatpush1.bf16.msra.mxu0 %v1153
    %2943 = vmatprep.subr.bf16.mxu0 %v1157
    %2944 = vmatpush1.bf16.msra.mxu0 %v1156
    %2945 = vmatprep.subr.bf16.mxu0 0
    %2946 = vmatpush1.bf16.msra.mxu0 0
    %2947 = vmatprep.subr.bf16.mxu0 0
    %2948 = vmatpush1.bf16.msra.mxu0 0
    %2949 = vmatprep.subr.bf16.mxu0 0
    %2950 = vmatpush1.bf16.msra.mxu0 0
    %2951 = vmatprep.subr.bf16.mxu0 0
    %2952 = vmatpush1.bf16.msra.mxu0 0
    %2953 = vmatprep.subr.bf16.mxu0 0
    %2954 = vmatpush1.bf16.msra.mxu0 0
    %2955 = vmatprep.subr.bf16.mxu0 0
    %2956 = vmatpush1.bf16.msra.mxu0 0
    %2957 = vmatprep.subr.bf16.mxu0 0
    %2958 = vmatpush1.bf16.msra.mxu0 0
    %2959 = vmatprep.subr.bf16.mxu0 0
    %2960 = vmatpush1.bf16.msra.mxu0 0
    %2961 = vmatprep.mubr.bf16.mxu0 0
    %2962 = vmatmul.mubr.bf16.gmra.mrb[0].mxu0 %v2928
    %v2963 = vpop.f32.mrb[0].mxu0
    %v2964 = vadd.f32 %v600, %v2963
    %v2965 = vpop.f32.mrb[0].mxu0
    %v2966 = vadd.f32 %v604, %v2965
    %v2967 = vpop.f32.mrb[0].mxu0
    %v2968 = vpop.f32.mrb[0].mxu0
    %2969 = vdwg.mxu0
    %2970 = vmatprep.subr.bf16.mxu0 0
    %2971 = vmatpush1.bf16.msra.mxu0 %v1137
    %2972 = vmatprep.subr.bf16.mxu0 0
    %2973 = vmatpush1.bf16.msra.mxu0 %v1140
    %2974 = vmatprep.subr.bf16.mxu0 0
    %2975 = vmatpush1.bf16.msra.mxu0 %v1143
    %2976 = vmatprep.subr.bf16.mxu0 0
    %2977 = vmatpush1.bf16.msra.mxu0 %v1146
    %2978 = vmatprep.subr.bf16.mxu0 0
    %2979 = vmatpush1.bf16.msra.mxu0 %v1149
    %2980 = vmatprep.subr.bf16.mxu0 0
    %2981 = vmatpush1.bf16.msra.mxu0 %v1152
    %2982 = vmatprep.subr.bf16.mxu0 0
    %2983 = vmatpush1.bf16.msra.mxu0 %v1155
    %2984 = vmatprep.subr.bf16.mxu0 0
    %2985 = vmatpush1.bf16.msra.mxu0 %v1158
    %2986 = vmatprep.subr.bf16.mxu0 0
    %2987 = vmatpush1.bf16.msra.mxu0 0
    %2988 = vmatprep.subr.bf16.mxu0 0
    %2989 = vmatpush1.bf16.msra.mxu0 0
    %2990 = vmatprep.subr.bf16.mxu0 0
    %2991 = vmatpush1.bf16.msra.mxu0 0
    %2992 = vmatprep.subr.bf16.mxu0 0
    %2993 = vmatpush1.bf16.msra.mxu0 0
    %2994 = vmatprep.subr.bf16.mxu0 0
    %2995 = vmatpush1.bf16.msra.mxu0 0
    %2996 = vmatprep.subr.bf16.mxu0 0
    %2997 = vmatpush1.bf16.msra.mxu0 0
    %2998 = vmatprep.subr.bf16.mxu0 0
    %2999 = vmatpush1.bf16.msra.mxu0 0
    %3000 = vmatprep.subr.bf16.mxu0 0
    %3001 = vmatpush1.bf16.msra.mxu0 0
    %3002 = vmatprep.mubr.bf16.mxu0 0
    %3003 = vmatmul.mubr.bf16.gmra.mrb[0].mxu0 %v2928
    %v3004 = vpop.f32.mrb[0].mxu0
    %v3005 = vadd.f32 %v608, %v3004
    %v3006 = vpop.f32.mrb[0].mxu0
    %v3007 = vpop.f32.mrb[0].mxu0
    %v3008 = vpop.f32.mrb[0].mxu0
    %3009 = vdwg.mxu0
    %v3010 = vadd.f32 %v2882, %v2964
    %v3011 = vadd.f32 %v2884, %v2966
    %v3012 = vxor.u32 %v3010, 2147483648
    %v3013 = vxor.u32 %v3011, 2147483648
    %v3014 = vmul.f32 %v3012, 1.442695
    %v3015 = vpow.pop %v3014
    %v3016 = vmul.f32 %v3013, 1.442695
    %v3017 = vpow.pop %v3016
    %v3018 = vadd.f32 %v3015, 1.0
    %v3019 = vadd.f32 %v3017, 1.0
    %v3020 = vrcp.pop %v3018
    %v3021 = vmul.f32 1.0, %v3020
    %v3022 = vrcp.pop %v3019
    %v3023 = vmul.f32 1.0, %v3022
    %v3024 = vmul.f32 %v3021, %v3005
    %v3025 = vadd.f32 %v2923, %v3024
    %v3026 = vtanh.pop %v3025
    %v3027 = vsub.f32 1.0, %v3023
    %v3028 = vmul.f32 %v3027, %v3026
    %v3029 = vmul.f32 %v3023, %v2739
    %v3030 = vadd.f32 %v3028, %v3029
    %3031 = vmatprep.subr.bf16.mxu0 %v693
    %3032 = vmatpush1.bf16.msra.mxu0 %v692
    %3033 = vmatprep.subr.bf16.mxu0 %v696
    %3034 = vmatpush1.bf16.msra.mxu0 %v695
    %3035 = vmatprep.subr.bf16.mxu0 %v699
    %3036 = vmatpush1.bf16.msra.mxu0 %v698
    %3037 = vmatprep.subr.bf16.mxu0 %v702
    %3038 = vmatpush1.bf16.msra.mxu0 %v701
    %3039 = vmatprep.subr.bf16.mxu0 %v705
    %3040 = vmatpush1.bf16.msra.mxu0 %v704
    %3041 = vmatprep.subr.bf16.mxu0 %v708
    %3042 = vmatpush1.bf16.msra.mxu0 %v707
    %3043 = vmatprep.subr.bf16.mxu0 %v711
    %3044 = vmatpush1.bf16.msra.mxu0 %v710
    %3045 = vmatprep.subr.bf16.mxu0 %v714
    %3046 = vmatpush1.bf16.msra.mxu0 %v713
    %3047 = vmatprep.subr.bf16.mxu0 0
    %3048 = vmatpush1.bf16.msra.mxu0 0
    %3049 = vmatprep.subr.bf16.mxu0 0
    %3050 = vmatpush1.bf16.msra.mxu0 0
    %3051 = vmatprep.subr.bf16.mxu0 0
    %3052 = vmatpush1.bf16.msra.mxu0 0
    %3053 = vmatprep.subr.bf16.mxu0 0
    %3054 = vmatpush1.bf16.msra.mxu0 0
    %3055 = vmatprep.subr.bf16.mxu0 0
    %3056 = vmatpush1.bf16.msra.mxu0 0
    %3057 = vmatprep.subr.bf16.mxu0 0
    %3058 = vmatpush1.bf16.msra.mxu0 0
    %3059 = vmatprep.subr.bf16.mxu0 0
    %3060 = vmatpush1.bf16.msra.mxu0 0
    %3061 = vmatprep.subr.bf16.mxu0 0
    %3062 = vmatpush1.bf16.msra.mxu0 0
    %3063 = vmatprep.mubr.bf16.mxu0 0
    %3064 = vmatmul.mubr.bf16.gmra.mrb[0].mxu0 %v2846
    %v3065 = vpop.f32.mrb[0].mxu0
    %v3066 = vadd.f32 %v566, %v3065
    %v3067 = vpop.f32.mrb[0].mxu0
    %v3068 = vadd.f32 %v570, %v3067
    %v3069 = vpop.f32.mrb[0].mxu0
    %v3070 = vpop.f32.mrb[0].mxu0
    %3071 = vdwg.mxu0
    %3072 = vmatprep.subr.bf16.mxu0 0
    %3073 = vmatpush1.bf16.msra.mxu0 %v694
    %3074 = vmatprep.subr.bf16.mxu0 0
    %3075 = vmatpush1.bf16.msra.mxu0 %v697
    %3076 = vmatprep.subr.bf16.mxu0 0
    %3077 = vmatpush1.bf16.msra.mxu0 %v700
    %3078 = vmatprep.subr.bf16.mxu0 0
    %3079 = vmatpush1.bf16.msra.mxu0 %v703
    %3080 = vmatprep.subr.bf16.mxu0 0
    %3081 = vmatpush1.bf16.msra.mxu0 %v706
    %3082 = vmatprep.subr.bf16.mxu0 0
    %3083 = vmatpush1.bf16.msra.mxu0 %v709
    %3084 = vmatprep.subr.bf16.mxu0 0
    %3085 = vmatpush1.bf16.msra.mxu0 %v712
    %3086 = vmatprep.subr.bf16.mxu0 0
    %3087 = vmatpush1.bf16.msra.mxu0 %v715
    %3088 = vmatprep.subr.bf16.mxu0 0
    %3089 = vmatpush1.bf16.msra.mxu0 0
    %3090 = vmatprep.subr.bf16.mxu0 0
    %3091 = vmatpush1.bf16.msra.mxu0 0
    %3092 = vmatprep.subr.bf16.mxu0 0
    %3093 = vmatpush1.bf16.msra.mxu0 0
    %3094 = vmatprep.subr.bf16.mxu0 0
    %3095 = vmatpush1.bf16.msra.mxu0 0
    %3096 = vmatprep.subr.bf16.mxu0 0
    %3097 = vmatpush1.bf16.msra.mxu0 0
    %3098 = vmatprep.subr.bf16.mxu0 0
    %3099 = vmatpush1.bf16.msra.mxu0 0
    %3100 = vmatprep.subr.bf16.mxu0 0
    %3101 = vmatpush1.bf16.msra.mxu0 0
    %3102 = vmatprep.subr.bf16.mxu0 0
    %3103 = vmatpush1.bf16.msra.mxu0 0
    %3104 = vmatprep.mubr.bf16.mxu0 0
    %3105 = vmatmul.mubr.bf16.gmra.mrb[0].mxu0 %v2846
    %v3106 = vpop.f32.mrb[0].mxu0
    %v3107 = vadd.f32 %v574, %v3106
    %v3108 = vpop.f32.mrb[0].mxu0
    %v3109 = vpop.f32.mrb[0].mxu0
    %v3110 = vpop.f32.mrb[0].mxu0
    %3111 = vdwg.mxu0
    %s3112 = scalar_lea.vmem [#allocation2], 168
    %v3113 = vld [vmem:[%s3112] sm:$0xff]
    %v3114 = vld [vmem:[%s3112 + $0x8] sm:$0xff]
    %v3115 = vld [vmem:[%s3112 + $0x10] sm:$0xff]
    %v3116 = vadd.f32 %v3113, %v3066
    %v3117 = vadd.f32 %v3114, %v3068
    %v3118 = vxor.u32 %v3116, 2147483648
    %v3119 = vxor.u32 %v3117, 2147483648
    %v3120 = vmul.f32 %v3118, 1.442695
    %v3121 = vpow.pop %v3120
    %v3122 = vmul.f32 %v3119, 1.442695
    %v3123 = vpow.pop %v3122
    %v3124 = vadd.f32 %v3121, 1.0
    %v3125 = vadd.f32 %v3123, 1.0
    %v3126 = vrcp.pop %v3124
    %v3127 = vmul.f32 1.0, %v3126
    %v3128 = vrcp.pop %v3125
    %v3129 = vmul.f32 1.0, %v3128
    %v3130 = vmul.f32 %v3127, %v3107
    %v3131 = vadd.f32 %v3115, %v3130
    %v3132 = vtanh.pop %v3131
    %v3133 = vsub.f32 1.0, %v3129
    %v3134 = vmul.f32 %v3133, %v3132
    %v3135 = vmul.f32 %v3129, %v2845
    %v3136 = vadd.f32 %v3134, %v3135
    %v3137 = vpack.c.bf16 %v3136, %v3136
    %3138 = vmatprep.subr.bf16.mxu0 %v927
    %3139 = vmatpush1.bf16.msra.mxu0 %v926
    %3140 = vmatprep.subr.bf16.mxu0 %v930
    %3141 = vmatpush1.bf16.msra.mxu0 %v929
    %3142 = vmatprep.subr.bf16.mxu0 %v933
    %3143 = vmatpush1.bf16.msra.mxu0 %v932
    %3144 = vmatprep.subr.bf16.mxu0 %v936
    %3145 = vmatpush1.bf16.msra.mxu0 %v935
    %3146 = vmatprep.subr.bf16.mxu0 %v939
    %3147 = vmatpush1.bf16.msra.mxu0 %v938
    %3148 = vmatprep.subr.bf16.mxu0 %v942
    %3149 = vmatpush1.bf16.msra.mxu0 %v941
    %3150 = vmatprep.subr.bf16.mxu0 %v945
    %3151 = vmatpush1.bf16.msra.mxu0 %v944
    %3152 = vmatprep.subr.bf16.mxu0 %v948
    %3153 = vmatpush1.bf16.msra.mxu0 %v947
    %3154 = vmatprep.subr.bf16.mxu0 0
    %3155 = vmatpush1.bf16.msra.mxu0 0
    %3156 = vmatprep.subr.bf16.mxu0 0
    %3157 = vmatpush1.bf16.msra.mxu0 0
    %3158 = vmatprep.subr.bf16.mxu0 0
    %3159 = vmatpush1.bf16.msra.mxu0 0
    %3160 = vmatprep.subr.bf16.mxu0 0
    %3161 = vmatpush1.bf16.msra.mxu0 0
    %3162 = vmatprep.subr.bf16.mxu0 0
    %3163 = vmatpush1.bf16.msra.mxu0 0
    %3164 = vmatprep.subr.bf16.mxu0 0
    %3165 = vmatpush1.bf16.msra.mxu0 0
    %3166 = vmatprep.subr.bf16.mxu0 0
    %3167 = vmatpush1.bf16.msra.mxu0 0
    %3168 = vmatprep.subr.bf16.mxu0 0
    %3169 = vmatpush1.bf16.msra.mxu0 0
    %3170 = vmatprep.mubr.bf16.mxu0 0
    %3171 = vmatmul.mubr.bf16.gmra.mrb[0].mxu0 %v3137
    %v3172 = vpop.f32.mrb[0].mxu0
    %v3173 = vadd.f32 %v583, %v3172
    %v3174 = vpop.f32.mrb[0].mxu0
    %v3175 = vadd.f32 %v587, %v3174
    %v3176 = vpop.f32.mrb[0].mxu0
    %v3177 = vpop.f32.mrb[0].mxu0
    %3178 = vdwg.mxu0
    %3179 = vmatprep.subr.bf16.mxu0 0
    %3180 = vmatpush1.bf16.msra.mxu0 %v928
    %3181 = vmatprep.subr.bf16.mxu0 0
    %3182 = vmatpush1.bf16.msra.mxu0 %v931
    %3183 = vmatprep.subr.bf16.mxu0 0
    %3184 = vmatpush1.bf16.msra.mxu0 %v934
    %3185 = vmatprep.subr.bf16.mxu0 0
    %3186 = vmatpush1.bf16.msra.mxu0 %v937
    %3187 = vmatprep.subr.bf16.mxu0 0
    %3188 = vmatpush1.bf16.msra.mxu0 %v940
    %3189 = vmatprep.subr.bf16.mxu0 0
    %3190 = vmatpush1.bf16.msra.mxu0 %v943
    %3191 = vmatprep.subr.bf16.mxu0 0
    %3192 = vmatpush1.bf16.msra.mxu0 %v946
    %3193 = vmatprep.subr.bf16.mxu0 0
    %3194 = vmatpush1.bf16.msra.mxu0 %v949
    %3195 = vmatprep.subr.bf16.mxu0 0
    %3196 = vmatpush1.bf16.msra.mxu0 0
    %3197 = vmatprep.subr.bf16.mxu0 0
    %3198 = vmatpush1.bf16.msra.mxu0 0
    %3199 = vmatprep.subr.bf16.mxu0 0
    %3200 = vmatpush1.bf16.msra.mxu0 0
    %3201 = vmatprep.subr.bf16.mxu0 0
    %3202 = vmatpush1.bf16.msra.mxu0 0
    %3203 = vmatprep.subr.bf16.mxu0 0
    %3204 = vmatpush1.bf16.msra.mxu0 0
    %3205 = vmatprep.subr.bf16.mxu0 0
    %3206 = vmatpush1.bf16.msra.mxu0 0
    %3207 = vmatprep.subr.bf16.mxu0 0
    %3208 = vmatpush1.bf16.msra.mxu0 0
    %3209 = vmatprep.subr.bf16.mxu0 0
    %3210 = vmatpush1.bf16.msra.mxu0 0
    %3211 = vmatprep.mubr.bf16.mxu0 0
    %3212 = vmatmul.mubr.bf16.gmra.mrb[0].mxu0 %v3137
    %v3213 = vpop.f32.mrb[0].mxu0
    %v3214 = vadd.f32 %v591, %v3213
    %v3215 = vpop.f32.mrb[0].mxu0
    %v3216 = vpop.f32.mrb[0].mxu0
    %v3217 = vpop.f32.mrb[0].mxu0
    %3218 = vdwg.mxu0
    %v3219 = vpack.c.bf16 %v3030, %v3030
    %3220 = vmatprep.subr.bf16.mxu0 %v1136
    %3221 = vmatpush1.bf16.msra.mxu0 %v1135
    %3222 = vmatprep.subr.bf16.mxu0 %v1139
    %3223 = vmatpush1.bf16.msra.mxu0 %v1138
    %3224 = vmatprep.subr.bf16.mxu0 %v1142
    %3225 = vmatpush1.bf16.msra.mxu0 %v1141
    %3226 = vmatprep.subr.bf16.mxu0 %v1145
    %3227 = vmatpush1.bf16.msra.mxu0 %v1144
    %3228 = vmatprep.subr.bf16.mxu0 %v1148
    %3229 = vmatpush1.bf16.msra.mxu0 %v1147
    %3230 = vmatprep.subr.bf16.mxu0 %v1151
    %3231 = vmatpush1.bf16.msra.mxu0 %v1150
    %3232 = vmatprep.subr.bf16.mxu0 %v1154
    %3233 = vmatpush1.bf16.msra.mxu0 %v1153
    %3234 = vmatprep.subr.bf16.mxu0 %v1157
    %3235 = vmatpush1.bf16.msra.mxu0 %v1156
    %3236 = vmatprep.subr.bf16.mxu0 0
    %3237 = vmatpush1.bf16.msra.mxu0 0
    %3238 = vmatprep.subr.bf16.mxu0 0
    %3239 = vmatpush1.bf16.msra.mxu0 0
    %3240 = vmatprep.subr.bf16.mxu0 0
    %3241 = vmatpush1.bf16.msra.mxu0 0
    %3242 = vmatprep.subr.bf16.mxu0 0
    %3243 = vmatpush1.bf16.msra.mxu0 0
    %3244 = vmatprep.subr.bf16.mxu0 0
    %3245 = vmatpush1.bf16.msra.mxu0 0
    %3246 = vmatprep.subr.bf16.mxu0 0
    %3247 = vmatpush1.bf16.msra.mxu0 0
    %3248 = vmatprep.subr.bf16.mxu0 0
    %3249 = vmatpush1.bf16.msra.mxu0 0
    %3250 = vmatprep.subr.bf16.mxu0 0
    %3251 = vmatpush1.bf16.msra.mxu0 0
    %3252 = vmatprep.mubr.bf16.mxu0 0
    %3253 = vmatmul.mubr.bf16.gmra.mrb[0].mxu0 %v3219
    %v3254 = vpop.f32.mrb[0].mxu0
    %v3255 = vadd.f32 %v600, %v3254
    %v3256 = vpop.f32.mrb[0].mxu0
    %v3257 = vadd.f32 %v604, %v3256
    %v3258 = vpop.f32.mrb[0].mxu0
    %v3259 = vpop.f32.mrb[0].mxu0
    %3260 = vdwg.mxu0
    %3261 = vmatprep.subr.bf16.mxu0 0
    %3262 = vmatpush1.bf16.msra.mxu0 %v1137
    %3263 = vmatprep.subr.bf16.mxu0 0
    %3264 = vmatpush1.bf16.msra.mxu0 %v1140
    %3265 = vmatprep.subr.bf16.mxu0 0
    %3266 = vmatpush1.bf16.msra.mxu0 %v1143
    %3267 = vmatprep.subr.bf16.mxu0 0
    %3268 = vmatpush1.bf16.msra.mxu0 %v1146
    %3269 = vmatprep.subr.bf16.mxu0 0
    %3270 = vmatpush1.bf16.msra.mxu0 %v1149
    %3271 = vmatprep.subr.bf16.mxu0 0
    %3272 = vmatpush1.bf16.msra.mxu0 %v1152
    %3273 = vmatprep.subr.bf16.mxu0 0
    %3274 = vmatpush1.bf16.msra.mxu0 %v1155
    %3275 = vmatprep.subr.bf16.mxu0 0
    %3276 = vmatpush1.bf16.msra.mxu0 %v1158
    %3277 = vmatprep.subr.bf16.mxu0 0
    %3278 = vmatpush1.bf16.msra.mxu0 0
    %3279 = vmatprep.subr.bf16.mxu0 0
    %3280 = vmatpush1.bf16.msra.mxu0 0
    %3281 = vmatprep.subr.bf16.mxu0 0
    %3282 = vmatpush1.bf16.msra.mxu0 0
    %3283 = vmatprep.subr.bf16.mxu0 0
    %3284 = vmatpush1.bf16.msra.mxu0 0
    %3285 = vmatprep.subr.bf16.mxu0 0
    %3286 = vmatpush1.bf16.msra.mxu0 0
    %3287 = vmatprep.subr.bf16.mxu0 0
    %3288 = vmatpush1.bf16.msra.mxu0 0
    %3289 = vmatprep.subr.bf16.mxu0 0
    %3290 = vmatpush1.bf16.msra.mxu0 0
    %3291 = vmatprep.subr.bf16.mxu0 0
    %3292 = vmatpush1.bf16.msra.mxu0 0
    %3293 = vmatprep.mubr.bf16.mxu0 0
    %3294 = vmatmul.mubr.bf16.gmra.mrb[0].mxu0 %v3219
    %v3295 = vpop.f32.mrb[0].mxu0
    %v3296 = vadd.f32 %v608, %v3295
    %v3297 = vpop.f32.mrb[0].mxu0
    %v3298 = vpop.f32.mrb[0].mxu0
    %v3299 = vpop.f32.mrb[0].mxu0
    %3300 = vdwg.mxu0
    %v3301 = vadd.f32 %v3173, %v3255
    %v3302 = vadd.f32 %v3175, %v3257
    %v3303 = vxor.u32 %v3301, 2147483648
    %v3304 = vxor.u32 %v3302, 2147483648
    %v3305 = vmul.f32 %v3303, 1.442695
    %v3306 = vpow.pop %v3305
    %v3307 = vmul.f32 %v3304, 1.442695
    %v3308 = vpow.pop %v3307
    %v3309 = vadd.f32 %v3306, 1.0
    %v3310 = vadd.f32 %v3308, 1.0
    %v3311 = vrcp.pop %v3309
    %v3312 = vmul.f32 1.0, %v3311
    %v3313 = vrcp.pop %v3310
    %v3314 = vmul.f32 1.0, %v3313
    %v3315 = vmul.f32 %v3312, %v3296
    %v3316 = vadd.f32 %v3214, %v3315
    %v3317 = vtanh.pop %v3316
    %v3318 = vsub.f32 1.0, %v3314
    %v3319 = vmul.f32 %v3318, %v3317
    %v3320 = vmul.f32 %v3314, %v3030
    %v3321 = vadd.f32 %v3319, %v3320
    %v3322 = vpack.c.bf16 %v3321, %v3321
    %v3323 = vld [vmem:[%s9] sm:$0xf]
    %v3324 = vld [vmem:[%s9 + $0x4] sm:$0xf]
    %v3325 = vld [vmem:[%s9 + $0x8] sm:$0xf]
    %v3326 = vld [vmem:[%s9 + $0xc] sm:$0xf]
    %v3327 = vld [vmem:[%s9 + $0x10] sm:$0xf]
    %v3328 = vld [vmem:[%s9 + $0x14] sm:$0xf]
    %v3329 = vld [vmem:[%s9 + $0x18] sm:$0xf]
    %v3330 = vld [vmem:[%s9 + $0x1c] sm:$0xf]
    %v3331 = vld [vmem:[%s9 + $0x20] sm:$0xf]
    %v3332 = vld [vmem:[%s9 + $0x24] sm:$0xf]
    %v3333 = vld [vmem:[%s9 + $0x28] sm:$0xf]
    %v3334 = vld [vmem:[%s9 + $0x2c] sm:$0xf]
    %v3335 = vld [vmem:[%s9 + $0x30] sm:$0xf]
    %v3336 = vld [vmem:[%s9 + $0x34] sm:$0xf]
    %v3337 = vld [vmem:[%s9 + $0x38] sm:$0xf]
    %v3338 = vld [vmem:[%s9 + $0x3c] sm:$0xf]
    %v3339 = vld [vmem:[%s10] sm:$0x1]
    %v3341 = vlaneseq
    %v3342 = vshrl.u32 %v3341, 7
    %v3343 = vsub.s32 0, %v3342
    %v3344 = vrot.slane %v3339, %v3343
    %v3362 = vunpack.c.l.b16 %v3323
    %v3363 = vunpack.c.l.b16 %v3324
    %v3364 = vunpack.c.l.b16 %v3325
    %v3365 = vunpack.c.l.b16 %v3326
    %v3366 = vunpack.c.l.b16 %v3327
    %v3367 = vunpack.c.l.b16 %v3328
    %v3368 = vunpack.c.l.b16 %v3329
    %v3369 = vunpack.c.l.b16 %v3330
    %v3370 = vunpack.c.l.b16 %v3331
    %v3371 = vunpack.c.l.b16 %v3332
    %v3372 = vunpack.c.l.b16 %v3333
    %v3373 = vunpack.c.l.b16 %v3334
    %v3374 = vunpack.c.l.b16 %v3335
    %v3375 = vunpack.c.l.b16 %v3336
    %v3376 = vunpack.c.l.b16 %v3337
    %v3377 = vunpack.c.l.b16 %v3338
    %v3378 = vpack.c.b16 %v3363, %v3362
    %v3379 = vpack.c.b16 %v3365, %v3364
    %v3380 = vpack.c.b16 %v3367, %v3366
    %v3381 = vpack.c.b16 %v3369, %v3368
    %v3382 = vpack.c.b16 %v3371, %v3370
    %v3383 = vpack.c.b16 %v3373, %v3372
    %v3384 = vpack.c.b16 %v3375, %v3374
    %v3385 = vpack.c.b16 %v3377, %v3376
    %3394 = vmatprep.subr.bf16.mxu0 0
    %3395 = vmatpush1.bf16.msra.mxu0 %v3378
    %3396 = vmatprep.subr.bf16.mxu0 0
    %3397 = vmatpush1.bf16.msra.mxu0 %v3379
    %3398 = vmatprep.subr.bf16.mxu0 0
    %3399 = vmatpush1.bf16.msra.mxu0 %v3380
    %3400 = vmatprep.subr.bf16.mxu0 0
    %3401 = vmatpush1.bf16.msra.mxu0 %v3381
    %3402 = vmatprep.subr.bf16.mxu0 0
    %3403 = vmatpush1.bf16.msra.mxu0 %v3382
    %3404 = vmatprep.subr.bf16.mxu0 0
    %3405 = vmatpush1.bf16.msra.mxu0 %v3383
    %3406 = vmatprep.subr.bf16.mxu0 0
    %3407 = vmatpush1.bf16.msra.mxu0 %v3384
    %3408 = vmatprep.subr.bf16.mxu0 0
    %3409 = vmatpush1.bf16.msra.mxu0 %v3385
    %3410 = vmatprep.subr.bf16.mxu0 0
    %3411 = vmatpush1.bf16.msra.mxu0 0
    %3412 = vmatprep.subr.bf16.mxu0 0
    %3413 = vmatpush1.bf16.msra.mxu0 0
    %3414 = vmatprep.subr.bf16.mxu0 0
    %3415 = vmatpush1.bf16.msra.mxu0 0
    %3416 = vmatprep.subr.bf16.mxu0 0
    %3417 = vmatpush1.bf16.msra.mxu0 0
    %3418 = vmatprep.subr.bf16.mxu0 0
    %3419 = vmatpush1.bf16.msra.mxu0 0
    %3420 = vmatprep.subr.bf16.mxu0 0
    %3421 = vmatpush1.bf16.msra.mxu0 0
    %3422 = vmatprep.subr.bf16.mxu0 0
    %3423 = vmatpush1.bf16.msra.mxu0 0
    %3424 = vmatprep.subr.bf16.mxu0 0
    %3425 = vmatpush1.bf16.msra.mxu0 0
    %3426 = vmatprep.mubr.bf16.mxu0 0
    %3427 = vmatmul.mubr.bf16.gmra.mrb[0].mxu0 %v3322
    %v3428 = vpop.f32.mrb[0].mxu0
    %v3429 = vadd.f32 %v3344, %v3428
    %v3430 = vpop.f32.mrb[0].mxu0
    %v3431 = vpop.f32.mrb[0].mxu0
    %v3432 = vpop.f32.mrb[0].mxu0
    %3433 = vdwg.mxu0
    %3434 = vst [vmem:[%s11] sm:$0xff] %v3429
    // Predicated region
    $region62: #{rnn_gru_forward.1} parent=1 // pred_check
      _
    $region63: #{rnn_gru_forward.1} parent=1 // pred_check_branch
      %3436 = sbr.rel (0) target = $region65
    $region64: #{rnn_gru_forward.1} parent=1 // pred_region
      _
    $region65: #{rnn_gru_forward.1} parent=1 // pred_fallthru
      _
    // Predicated region
    $region66: #{rnn_gru_forward.1} parent=1 // pred_check
      _
    $region67: #{rnn_gru_forward.1} parent=1 // pred_check_branch
      %3438 = sbr.rel (0) target = $region69
    $region68: #{rnn_gru_forward.1} parent=1 // pred_region
      _
    $region69: #{rnn_gru_forward.1} parent=1 // pred_fallthru
      _
    %3439 = vsyncpa [#allocation4], 1
    %3440 = vsyncpa [#allocation6], 1
    %3441 = vsyncpa [#allocation9], 1

</llo_original>
